<compile_context>
chip_gen: v7x
topology: tpu7x:2x2x1
jax: 0.10.0
libtpu: 0.0.40
codegen_flags: <defaults>
</compile_context>

<pallas_src>
import functools

import jax
import jax.numpy as jnp
import numpy as np
from jax.experimental import pallas as pl
from jax.experimental.pallas import tpu as pltpu


def cross_attention_kernel(
    x_ref, info_ref,
    wq_ref, wk_ref, wv_ref, bq_ref, bk_ref, bv_ref,
    wo_ref, bo_ref,
    w1_ref, b1_ref, w2_ref, b2_ref,
    g1_ref, beta1_ref, g2_ref, beta2_ref,
    o_ref,
    *, nhead, eps):
    """One batch tile (B_TILE elements) per grid step:
       MHA(x, info, info) -> residual+LN -> ReLU-FF -> residual+LN."""
    B, L, D = x_ref.shape
    S = info_ref.shape[1]
    hd = D // nhead
    scale = 1.0 / np.sqrt(float(hd))

    # ---- batched in-projections: one 2-D MXU matmul over all B_TILE*L rows ----
    x2 = x_ref[...].astype(jnp.float32).reshape(B * L, D)
    info2 = info_ref[...].astype(jnp.float32).reshape(B * S, D)

    q = jnp.dot(x2, wq_ref[...], preferred_element_type=jnp.float32) + bq_ref[...]
    k = jnp.dot(info2, wk_ref[...], preferred_element_type=jnp.float32) + bk_ref[...]
    v = jnp.dot(info2, wv_ref[...], preferred_element_type=jnp.float32) + bv_ref[...]

    q3 = q.reshape(B, L, D)
    k3 = k.reshape(B, S, D)
    v3 = v.reshape(B, S, D)

    # ---- attention: small static head loop, batched over the batch tile.
    # Scores via batched einsum (dot_general, trans-b semantics -> no .T);
    # each head's context is multiplied with the matching row-block of W_o and
    # accumulated, so no per-head concatenate is materialized.
    attn_acc = None
    for h in range(nhead):
        lo, hi = h * hd, (h + 1) * hd
        qh = q3[:, :, lo:hi]                                 # (B, L, hd)
        kh = k3[:, :, lo:hi]                                 # (B, S, hd)
        vh = v3[:, :, lo:hi]                                 # (B, S, hd)
        s = jnp.einsum('bld,bsd->bls', qh, kh,
                       preferred_element_type=jnp.float32) * scale
        s = s - jnp.max(s, axis=-1, keepdims=True)
        p = jnp.exp(s)
        # Exact reciprocal keeps the tight correctness tolerance; approx=True
        # would move the divide to the (idle) EUP once the kernel is VPU-bound.
        p = p * pl.reciprocal(jnp.sum(p, axis=-1, keepdims=True), approx=False)
        ctx = jnp.einsum('bls,bsd->bld', p, vh,
                         preferred_element_type=jnp.float32)  # (B, L, hd)
        contrib = jnp.dot(ctx.reshape(B * L, hd), wo_ref[lo:hi, :],
                          preferred_element_type=jnp.float32)  # (B*L, D)
        attn_acc = contrib if attn_acc is None else attn_acc + contrib
    attn_out = attn_acc + bo_ref[...]

    # ---- residual + LayerNorm 1 (post-norm, norm_first=False) ----
    y = x2 + attn_out
    mu = jnp.mean(y, axis=-1, keepdims=True)
    var = jnp.mean((y - mu) ** 2, axis=-1, keepdims=True)
    y = (y - mu) * jax.lax.rsqrt(var + eps) * g1_ref[...] + beta1_ref[...]

    # ---- feed-forward: ReLU(Linear1) -> Linear2, batched over all rows ----
    h1 = jnp.dot(y, w1_ref[...], preferred_element_type=jnp.float32) + b1_ref[...]
    h1 = jnp.maximum(h1, 0.0)
    ff = jnp.dot(h1, w2_ref[...], preferred_element_type=jnp.float32) + b2_ref[...]

    # ---- residual + LayerNorm 2 ----
    z = y + ff
    mu2 = jnp.mean(z, axis=-1, keepdims=True)
    var2 = jnp.mean((z - mu2) ** 2, axis=-1, keepdims=True)
    z = (z - mu2) * jax.lax.rsqrt(var2 + eps) * g2_ref[...] + beta2_ref[...]

    o_ref[...] = z.reshape(B, L, -1).astype(o_ref.dtype)


def _pick_batch_tile(N, L, target_rows=256):
    """Largest divisor of N with B_TILE*L <= target_rows (MXU-friendly M),
    keeping >= 2 grid steps when possible (v7x has 2 TensorCores)."""
    divs = [d for d in range(1, N + 1) if N % d == 0]
    cand = [d for d in divs if d * L <= target_rows] or [1]
    b = max(cand)
    if N // b < 2:
        two_step = [d for d in cand if N // d >= 2]
        if two_step:
            b = max(two_step)
    return b


def cross_attention_layer(decoding_tokens, info_tokens, params, *, nhead,
                          eps=1e-5):
    """decoding_tokens: (L, N, d_model), info_tokens: (S, N, d_model)
       (PyTorch batch_first=False convention). Returns (L, N, d_out)."""
    # Batch-major layout for the kernel. The two small activation transposes keep
    # every in-kernel op in relayout-free (leading-batch / 2-D) form.
    x = jnp.transpose(decoding_tokens, (1, 0, 2))    # (N, L, D)
    info = jnp.transpose(info_tokens, (1, 0, 2))     # (N, S, D)
    N, L, D = x.shape
    S = info.shape[1]
    F = params['w1'].shape[1]
    d_out = params['w2'].shape[1]

    bt = _pick_batch_tile(N, L)
    grid = (N // bt,)

    def full(shape):
        return pl.BlockSpec(shape, lambda b, _n=len(shape): (0,) * _n)

    in_specs = [
        pl.BlockSpec((bt, L, D), lambda b: (b, 0, 0)),     # x batch tile
        pl.BlockSpec((bt, S, D), lambda b: (b, 0, 0)),     # info batch tile
        full((D, D)), full((D, D)), full((D, D)),          # wq, wk, wv
        full((1, D)), full((1, D)), full((1, D)),          # bq, bk, bv
        full((D, D)), full((1, D)),                        # wo, bo
        full((D, F)), full((1, F)),                        # w1, b1
        full((F, d_out)), full((1, d_out)),                # w2, b2
        full((1, D)), full((1, D)),                        # ln1 gamma/beta
        full((1, d_out)), full((1, d_out)),                # ln2 gamma/beta
    ]

    out = pl.pallas_call(
        functools.partial(cross_attention_kernel, nhead=nhead, eps=eps),
        out_shape=jax.ShapeDtypeStruct((N, L, d_out), x.dtype),
        grid=grid,
        in_specs=in_specs,
        out_specs=pl.BlockSpec((bt, L, d_out), lambda b: (b, 0, 0)),
        compiler_params=pltpu.CompilerParams(dimension_semantics=("parallel",)),
    )(x, info,
      params['wq'], params['wk'], params['wv'],
      params['bq'], params['bk'], params['bv'],
      params['wo'], params['bo'],
      params['w1'], params['b1'], params['w2'], params['b2'],
      params['g1'], params['beta1'], params['g2'], params['beta2'])
    return jnp.transpose(out, (1, 0, 2))                  # back to (L, N, d_out)


def reference_forward(decoding_tokens, info_tokens, params, *, nhead, eps=1e-5):
    """Pure-JAX reference mirroring the PyTorch forward (norm_first=False)."""
    x = jnp.transpose(decoding_tokens, (1, 0, 2)).astype(jnp.float32)
    info = jnp.transpose(info_tokens, (1, 0, 2)).astype(jnp.float32)
    N, L, D = x.shape
    hd = D // nhead
    q = x @ params['wq'] + params['bq']
    k = info @ params['wk'] + params['bk']
    v = info @ params['wv'] + params['bv']
    q = q.reshape(N, L, nhead, hd).transpose(0, 2, 1, 3)
    k = k.reshape(N, -1, nhead, hd).transpose(0, 2, 1, 3)
    v = v.reshape(N, -1, nhead, hd).transpose(0, 2, 1, 3)
    s = jnp.einsum('nhld,nhsd->nhls', q, k) / jnp.sqrt(jnp.float32(hd))
    p = jax.nn.softmax(s, axis=-1)
    attn = jnp.einsum('nhls,nhsd->nhld', p, v).transpose(0, 2, 1, 3).reshape(N, L, D)
    attn = attn @ params['wo'] + params['bo']

    def ln(t, g, b):
        mu = jnp.mean(t, -1, keepdims=True)
        var = jnp.mean((t - mu) ** 2, -1, keepdims=True)
        return (t - mu) * jax.lax.rsqrt(var + eps) * g + b

    y = ln(x + attn, params['g1'], params['beta1'])
    ff = jnp.maximum(y @ params['w1'] + params['b1'], 0.0) @ params['w2'] + params['b2']
    z = ln(y + ff, params['g2'], params['beta2'])
    return jnp.transpose(z, (1, 0, 2))


def init_params(key, d_model, d_out, nhead, dim_feedforward):
    ks = jax.random.split(key, 8)
    s = 0.05
    p = {
        'wq': s * jax.random.normal(ks[0], (d_model, d_model), jnp.float32),
        'wk': s * jax.random.normal(ks[1], (d_model, d_model), jnp.float32),
        'wv': s * jax.random.normal(ks[2], (d_model, d_model), jnp.float32),
        'bq': s * jax.random.normal(ks[3], (1, d_model), jnp.float32),
        'bk': jnp.zeros((1, d_model), jnp.float32),
        'bv': jnp.zeros((1, d_model), jnp.float32),
        'wo': s * jax.random.normal(ks[4], (d_model, d_model), jnp.float32),
        'bo': jnp.zeros((1, d_model), jnp.float32),
        'w1': s * jax.random.normal(ks[5], (d_model, dim_feedforward), jnp.float32),
        'b1': s * jax.random.normal(ks[6], (1, dim_feedforward), jnp.float32),
        'w2': s * jax.random.normal(ks[7], (dim_feedforward, d_out), jnp.float32),
        'b2': jnp.zeros((1, d_out), jnp.float32),
        'g1': jnp.ones((1, d_model), jnp.float32),
        'beta1': jnp.zeros((1, d_model), jnp.float32),
        'g2': jnp.ones((1, d_out), jnp.float32),
        'beta2': jnp.zeros((1, d_out), jnp.float32),
    }
    return p


if __name__ == "__main__":
    # Small shapes consistent with the module; residual adds require d_out == d_model.
    d_model = 128
    d_out = 128
    nhead = 4            # head dim 32 -> 32-lane head slices, multiple of 8
    dim_feedforward = 256
    L, S, N = 16, 24, 4  # target seq, source seq, batch (batch_first=False layout)

    key = jax.random.PRNGKey(0)
    kx, ki, kp = jax.random.split(key, 3)
    decoding_tokens = jax.random.normal(kx, (L, N, d_model), jnp.float32)
    info_tokens = jax.random.normal(ki, (S, N, d_model), jnp.float32)
    params = init_params(kp, d_model, d_out, nhead, dim_feedforward)

    out = cross_attention_layer(decoding_tokens, info_tokens, params,
                                nhead=nhead, eps=1e-5)
    out = jax.block_until_ready(out)

    ref = reference_forward(decoding_tokens, info_tokens, params,
                            nhead=nhead, eps=1e-5)
    np.testing.assert_allclose(np.asarray(out), np.asarray(ref),
                               rtol=2e-4, atol=2e-4)
    print("KERNEL_OK")
</pallas_src>

<mosaic_0001>
module attributes {stable_mosaic.version = 11 : i64} {
  func.func @cross_attention_kernel(%arg0: i32, %arg1: memref<2x16x128xf32, #tpu.memory_space<vmem>>, %arg2: memref<2x24x128xf32, #tpu.memory_space<vmem>>, %arg3: memref<128x128xf32, #tpu.memory_space<vmem>>, %arg4: memref<128x128xf32, #tpu.memory_space<vmem>>, %arg5: memref<128x128xf32, #tpu.memory_space<vmem>>, %arg6: memref<1x128xf32, #tpu.memory_space<vmem>>, %arg7: memref<1x128xf32, #tpu.memory_space<vmem>>, %arg8: memref<1x128xf32, #tpu.memory_space<vmem>>, %arg9: memref<128x128xf32, #tpu.memory_space<vmem>>, %arg10: memref<1x128xf32, #tpu.memory_space<vmem>>, %arg11: memref<128x256xf32, #tpu.memory_space<vmem>>, %arg12: memref<1x256xf32, #tpu.memory_space<vmem>>, %arg13: memref<256x128xf32, #tpu.memory_space<vmem>>, %arg14: memref<1x128xf32, #tpu.memory_space<vmem>>, %arg15: memref<1x128xf32, #tpu.memory_space<vmem>>, %arg16: memref<1x128xf32, #tpu.memory_space<vmem>>, %arg17: memref<1x128xf32, #tpu.memory_space<vmem>>, %arg18: memref<1x128xf32, #tpu.memory_space<vmem>>, %arg19: memref<2x16x128xf32, #tpu.memory_space<vmem>>) attributes {dimension_semantics = [#tpu.dimension_semantics<parallel>], iteration_bounds = array<i64: 2>, scalar_prefetch = 0 : i64, scratch_operands = 0 : i64, tpu.core_type = #tpu.core_type<tc>, window_params = [{transform_indices = @transform_0, window_bounds = array<i64: 2, 16, 128>}, {transform_indices = @transform_1, window_bounds = array<i64: 2, 24, 128>}, {pipeline_mode = #tpu.pipeline_mode<synchronous>, transform_indices = @transform_2, window_bounds = array<i64: 128, 128>}, {pipeline_mode = #tpu.pipeline_mode<synchronous>, transform_indices = @transform_3, window_bounds = array<i64: 128, 128>}, {pipeline_mode = #tpu.pipeline_mode<synchronous>, transform_indices = @transform_4, window_bounds = array<i64: 128, 128>}, {pipeline_mode = #tpu.pipeline_mode<synchronous>, transform_indices = @transform_5, window_bounds = array<i64: 1, 128>}, {pipeline_mode = #tpu.pipeline_mode<synchronous>, transform_indices = @transform_6, window_bounds = array<i64: 1, 128>}, {pipeline_mode = #tpu.pipeline_mode<synchronous>, transform_indices = @transform_7, window_bounds = array<i64: 1, 128>}, {pipeline_mode = #tpu.pipeline_mode<synchronous>, transform_indices = @transform_8, window_bounds = array<i64: 128, 128>}, {pipeline_mode = #tpu.pipeline_mode<synchronous>, transform_indices = @transform_9, window_bounds = array<i64: 1, 128>}, {pipeline_mode = #tpu.pipeline_mode<synchronous>, transform_indices = @transform_10, window_bounds = array<i64: 128, 256>}, {pipeline_mode = #tpu.pipeline_mode<synchronous>, transform_indices = @transform_11, window_bounds = array<i64: 1, 256>}, {pipeline_mode = #tpu.pipeline_mode<synchronous>, transform_indices = @transform_12, window_bounds = array<i64: 256, 128>}, {pipeline_mode = #tpu.pipeline_mode<synchronous>, transform_indices = @transform_13, window_bounds = array<i64: 1, 128>}, {pipeline_mode = #tpu.pipeline_mode<synchronous>, transform_indices = @transform_14, window_bounds = array<i64: 1, 128>}, {pipeline_mode = #tpu.pipeline_mode<synchronous>, transform_indices = @transform_15, window_bounds = array<i64: 1, 128>}, {pipeline_mode = #tpu.pipeline_mode<synchronous>, transform_indices = @transform_16, window_bounds = array<i64: 1, 128>}, {pipeline_mode = #tpu.pipeline_mode<synchronous>, transform_indices = @transform_17, window_bounds = array<i64: 1, 128>}, {transform_indices = @transform_18, window_bounds = array<i64: 2, 16, 128>}]} {
    %c0 = arith.constant 0 : index
    %c0_0 = arith.constant 0 : index
    %c0_1 = arith.constant 0 : index
    %0 = vector.load %arg1[%c0, %c0_0, %c0_1] : memref<2x16x128xf32, #tpu.memory_space<vmem>>, vector<2x16x128xf32>
    %1 = vector.shape_cast %0 : vector<2x16x128xf32> to vector<32x128xf32>
    %c0_2 = arith.constant 0 : index
    %c0_3 = arith.constant 0 : index
    %c0_4 = arith.constant 0 : index
    %2 = vector.load %arg2[%c0_2, %c0_3, %c0_4] : memref<2x24x128xf32, #tpu.memory_space<vmem>>, vector<2x24x128xf32>
    %3 = vector.shape_cast %2 : vector<2x24x128xf32> to vector<48x128xf32>
    %c0_5 = arith.constant 0 : index
    %c0_6 = arith.constant 0 : index
    %4 = vector.load %arg3[%c0_5, %c0_6] : memref<128x128xf32, #tpu.memory_space<vmem>>, vector<128x128xf32>
    %cst = arith.constant dense<0.000000e+00> : vector<32x128xf32>
    %5 = tpu.matmul %1, %4, %cst {dimension_numbers = #tpu.dot_dimension_numbers<[1], [0], [0], [1], [0, 0, 1, 1], [], []>} : vector<32x128xf32>, vector<128x128xf32>, vector<32x128xf32> -> vector<32x128xf32>
    %c0_7 = arith.constant 0 : index
    %c0_8 = arith.constant 0 : index
    %6 = vector.load %arg6[%c0_7, %c0_8] : memref<1x128xf32, #tpu.memory_space<vmem>>, vector<1x128xf32>
    %7 = vector.broadcast %6 : vector<1x128xf32> to vector<32x128xf32>
    %8 = arith.addf %5, %7 : vector<32x128xf32>
    %c0_9 = arith.constant 0 : index
    %c0_10 = arith.constant 0 : index
    %9 = vector.load %arg4[%c0_9, %c0_10] : memref<128x128xf32, #tpu.memory_space<vmem>>, vector<128x128xf32>
    %cst_11 = arith.constant dense<0.000000e+00> : vector<48x128xf32>
    %10 = tpu.matmul %3, %9, %cst_11 {dimension_numbers = #tpu.dot_dimension_numbers<[1], [0], [0], [1], [0, 0, 1, 1], [], []>} : vector<48x128xf32>, vector<128x128xf32>, vector<48x128xf32> -> vector<48x128xf32>
    %c0_12 = arith.constant 0 : index
    %c0_13 = arith.constant 0 : index
    %11 = vector.load %arg7[%c0_12, %c0_13] : memref<1x128xf32, #tpu.memory_space<vmem>>, vector<1x128xf32>
    %12 = vector.broadcast %11 : vector<1x128xf32> to vector<48x128xf32>
    %13 = arith.addf %10, %12 : vector<48x128xf32>
    %c0_14 = arith.constant 0 : index
    %c0_15 = arith.constant 0 : index
    %14 = vector.load %arg5[%c0_14, %c0_15] : memref<128x128xf32, #tpu.memory_space<vmem>>, vector<128x128xf32>
    %cst_16 = arith.constant dense<0.000000e+00> : vector<48x128xf32>
    %15 = tpu.matmul %3, %14, %cst_16 {dimension_numbers = #tpu.dot_dimension_numbers<[1], [0], [0], [1], [0, 0, 1, 1], [], []>} : vector<48x128xf32>, vector<128x128xf32>, vector<48x128xf32> -> vector<48x128xf32>
    %c0_17 = arith.constant 0 : index
    %c0_18 = arith.constant 0 : index
    %16 = vector.load %arg8[%c0_17, %c0_18] : memref<1x128xf32, #tpu.memory_space<vmem>>, vector<1x128xf32>
    %17 = vector.broadcast %16 : vector<1x128xf32> to vector<48x128xf32>
    %18 = arith.addf %15, %17 : vector<48x128xf32>
    %19 = vector.shape_cast %8 : vector<32x128xf32> to vector<2x16x128xf32>
    %20 = vector.shape_cast %13 : vector<48x128xf32> to vector<2x24x128xf32>
    %21 = vector.shape_cast %18 : vector<48x128xf32> to vector<2x24x128xf32>
    %22 = vector.extract_strided_slice %19 {offsets = [0, 0, 0], sizes = [2, 16, 32], strides = [1, 1, 1]} : vector<2x16x128xf32> to vector<2x16x32xf32>
    %23 = vector.extract_strided_slice %20 {offsets = [0, 0, 0], sizes = [2, 24, 32], strides = [1, 1, 1]} : vector<2x24x128xf32> to vector<2x24x32xf32>
    %24 = vector.extract_strided_slice %21 {offsets = [0, 0, 0], sizes = [2, 24, 32], strides = [1, 1, 1]} : vector<2x24x128xf32> to vector<2x24x32xf32>
    "tpu.trace_start"() <{level = 10 : i32, message = "bld,bsd->bls"}> : () -> ()
    %cst_19 = arith.constant dense<0.000000e+00> : vector<2x16x24xf32>
    %25 = tpu.matmul %22, %23, %cst_19 {dimension_numbers = #tpu.dot_dimension_numbers<[2], [2], [1], [1], [0, 0, 0, 1, 1, 1], [0], [0]>} : vector<2x16x32xf32>, vector<2x24x32xf32>, vector<2x16x24xf32> -> vector<2x16x24xf32>
    "tpu.trace_stop"() : () -> ()
    %cst_20 = arith.constant 0.176776692 : f32
    %26 = vector.broadcast %cst_20 : f32 to vector<2x16x24xf32>
    %27 = arith.mulf %25, %26 : vector<2x16x24xf32>
    %cst_21 = arith.constant dense<0xFF800000> : vector<2x16xf32>
    %28 = vector.multi_reduction <maximumf>, %27, %cst_21 [2] : vector<2x16x24xf32> to vector<2x16xf32>
    %29 = vector.shape_cast %28 : vector<2x16xf32> to vector<2x16x1xf32>
    %30 = vector.broadcast %29 : vector<2x16x1xf32> to vector<2x16x24xf32>
    %31 = arith.subf %27, %30 : vector<2x16x24xf32>
    %32 = math.exp %31 : vector<2x16x24xf32>
    %cst_22 = arith.constant dense<0.000000e+00> : vector<2x16xf32>
    %33 = vector.multi_reduction <add>, %32, %cst_22 [2] : vector<2x16x24xf32> to vector<2x16xf32>
    %34 = vector.shape_cast %33 : vector<2x16xf32> to vector<2x16x1xf32>
    %35 = tpu.reciprocal %34 : vector<2x16x1xf32> -> vector<2x16x1xf32>
    %36 = vector.broadcast %35 : vector<2x16x1xf32> to vector<2x16x24xf32>
    %37 = arith.mulf %32, %36 : vector<2x16x24xf32>
    "tpu.trace_start"() <{level = 10 : i32, message = "bls,bsd->bld"}> : () -> ()
    %cst_23 = arith.constant dense<0.000000e+00> : vector<2x16x32xf32>
    %38 = tpu.matmul %37, %24, %cst_23 {dimension_numbers = #tpu.dot_dimension_numbers<[2], [1], [1], [2], [0, 0, 0, 1, 1, 2], [0], [0]>} : vector<2x16x24xf32>, vector<2x24x32xf32>, vector<2x16x32xf32> -> vector<2x16x32xf32>
    "tpu.trace_stop"() : () -> ()
    %39 = vector.shape_cast %38 : vector<2x16x32xf32> to vector<32x32xf32>
    %c0_24 = arith.constant 0 : index
    %c0_25 = arith.constant 0 : index
    %40 = vector.load %arg9[%c0_24, %c0_25] : memref<128x128xf32, #tpu.memory_space<vmem>>, vector<32x128xf32>
    %cst_26 = arith.constant dense<0.000000e+00> : vector<32x128xf32>
    %41 = tpu.matmul %39, %40, %cst_26 {dimension_numbers = #tpu.dot_dimension_numbers<[1], [0], [0], [1], [0, 0, 1, 1], [], []>} : vector<32x32xf32>, vector<32x128xf32>, vector<32x128xf32> -> vector<32x128xf32>
    %42 = vector.extract_strided_slice %19 {offsets = [0, 0, 32], sizes = [2, 16, 32], strides = [1, 1, 1]} : vector<2x16x128xf32> to vector<2x16x32xf32>
    %43 = vector.extract_strided_slice %20 {offsets = [0, 0, 32], sizes = [2, 24, 32], strides = [1, 1, 1]} : vector<2x24x128xf32> to vector<2x24x32xf32>
    %44 = vector.extract_strided_slice %21 {offsets = [0, 0, 32], sizes = [2, 24, 32], strides = [1, 1, 1]} : vector<2x24x128xf32> to vector<2x24x32xf32>
    "tpu.trace_start"() <{level = 10 : i32, message = "bld,bsd->bls"}> : () -> ()
    %cst_27 = arith.constant dense<0.000000e+00> : vector<2x16x24xf32>
    %45 = tpu.matmul %42, %43, %cst_27 {dimension_numbers = #tpu.dot_dimension_numbers<[2], [2], [1], [1], [0, 0, 0, 1, 1, 1], [0], [0]>} : vector<2x16x32xf32>, vector<2x24x32xf32>, vector<2x16x24xf32> -> vector<2x16x24xf32>
    "tpu.trace_stop"() : () -> ()
    %cst_28 = arith.constant 0.176776692 : f32
    %46 = vector.broadcast %cst_28 : f32 to vector<2x16x24xf32>
    %47 = arith.mulf %45, %46 : vector<2x16x24xf32>
    %cst_29 = arith.constant dense<0xFF800000> : vector<2x16xf32>
    %48 = vector.multi_reduction <maximumf>, %47, %cst_29 [2] : vector<2x16x24xf32> to vector<2x16xf32>
    %49 = vector.shape_cast %48 : vector<2x16xf32> to vector<2x16x1xf32>
    %50 = vector.broadcast %49 : vector<2x16x1xf32> to vector<2x16x24xf32>
    %51 = arith.subf %47, %50 : vector<2x16x24xf32>
    %52 = math.exp %51 : vector<2x16x24xf32>
    %cst_30 = arith.constant dense<0.000000e+00> : vector<2x16xf32>
    %53 = vector.multi_reduction <add>, %52, %cst_30 [2] : vector<2x16x24xf32> to vector<2x16xf32>
    %54 = vector.shape_cast %53 : vector<2x16xf32> to vector<2x16x1xf32>
    %55 = tpu.reciprocal %54 : vector<2x16x1xf32> -> vector<2x16x1xf32>
    %56 = vector.broadcast %55 : vector<2x16x1xf32> to vector<2x16x24xf32>
    %57 = arith.mulf %52, %56 : vector<2x16x24xf32>
    "tpu.trace_start"() <{level = 10 : i32, message = "bls,bsd->bld"}> : () -> ()
    %cst_31 = arith.constant dense<0.000000e+00> : vector<2x16x32xf32>
    %58 = tpu.matmul %57, %44, %cst_31 {dimension_numbers = #tpu.dot_dimension_numbers<[2], [1], [1], [2], [0, 0, 0, 1, 1, 2], [0], [0]>} : vector<2x16x24xf32>, vector<2x24x32xf32>, vector<2x16x32xf32> -> vector<2x16x32xf32>
    "tpu.trace_stop"() : () -> ()
    %59 = vector.shape_cast %58 : vector<2x16x32xf32> to vector<32x32xf32>
    %c32 = arith.constant 32 : index
    %c0_32 = arith.constant 0 : index
    %60 = vector.load %arg9[%c32, %c0_32] : memref<128x128xf32, #tpu.memory_space<vmem>>, vector<32x128xf32>
    %cst_33 = arith.constant dense<0.000000e+00> : vector<32x128xf32>
    %61 = tpu.matmul %59, %60, %cst_33 {dimension_numbers = #tpu.dot_dimension_numbers<[1], [0], [0], [1], [0, 0, 1, 1], [], []>} : vector<32x32xf32>, vector<32x128xf32>, vector<32x128xf32> -> vector<32x128xf32>
    %62 = arith.addf %41, %61 : vector<32x128xf32>
    %63 = vector.extract_strided_slice %19 {offsets = [0, 0, 64], sizes = [2, 16, 32], strides = [1, 1, 1]} : vector<2x16x128xf32> to vector<2x16x32xf32>
    %64 = vector.extract_strided_slice %20 {offsets = [0, 0, 64], sizes = [2, 24, 32], strides = [1, 1, 1]} : vector<2x24x128xf32> to vector<2x24x32xf32>
    %65 = vector.extract_strided_slice %21 {offsets = [0, 0, 64], sizes = [2, 24, 32], strides = [1, 1, 1]} : vector<2x24x128xf32> to vector<2x24x32xf32>
    "tpu.trace_start"() <{level = 10 : i32, message = "bld,bsd->bls"}> : () -> ()
    %cst_34 = arith.constant dense<0.000000e+00> : vector<2x16x24xf32>
    %66 = tpu.matmul %63, %64, %cst_34 {dimension_numbers = #tpu.dot_dimension_numbers<[2], [2], [1], [1], [0, 0, 0, 1, 1, 1], [0], [0]>} : vector<2x16x32xf32>, vector<2x24x32xf32>, vector<2x16x24xf32> -> vector<2x16x24xf32>
    "tpu.trace_stop"() : () -> ()
    %cst_35 = arith.constant 0.176776692 : f32
    %67 = vector.broadcast %cst_35 : f32 to vector<2x16x24xf32>
    %68 = arith.mulf %66, %67 : vector<2x16x24xf32>
    %cst_36 = arith.constant dense<0xFF800000> : vector<2x16xf32>
    %69 = vector.multi_reduction <maximumf>, %68, %cst_36 [2] : vector<2x16x24xf32> to vector<2x16xf32>
    %70 = vector.shape_cast %69 : vector<2x16xf32> to vector<2x16x1xf32>
    %71 = vector.broadcast %70 : vector<2x16x1xf32> to vector<2x16x24xf32>
    %72 = arith.subf %68, %71 : vector<2x16x24xf32>
    %73 = math.exp %72 : vector<2x16x24xf32>
    %cst_37 = arith.constant dense<0.000000e+00> : vector<2x16xf32>
    %74 = vector.multi_reduction <add>, %73, %cst_37 [2] : vector<2x16x24xf32> to vector<2x16xf32>
    %75 = vector.shape_cast %74 : vector<2x16xf32> to vector<2x16x1xf32>
    %76 = tpu.reciprocal %75 : vector<2x16x1xf32> -> vector<2x16x1xf32>
    %77 = vector.broadcast %76 : vector<2x16x1xf32> to vector<2x16x24xf32>
    %78 = arith.mulf %73, %77 : vector<2x16x24xf32>
    "tpu.trace_start"() <{level = 10 : i32, message = "bls,bsd->bld"}> : () -> ()
    %cst_38 = arith.constant dense<0.000000e+00> : vector<2x16x32xf32>
    %79 = tpu.matmul %78, %65, %cst_38 {dimension_numbers = #tpu.dot_dimension_numbers<[2], [1], [1], [2], [0, 0, 0, 1, 1, 2], [0], [0]>} : vector<2x16x24xf32>, vector<2x24x32xf32>, vector<2x16x32xf32> -> vector<2x16x32xf32>
    "tpu.trace_stop"() : () -> ()
    %80 = vector.shape_cast %79 : vector<2x16x32xf32> to vector<32x32xf32>
    %c64 = arith.constant 64 : index
    %c0_39 = arith.constant 0 : index
    %81 = vector.load %arg9[%c64, %c0_39] : memref<128x128xf32, #tpu.memory_space<vmem>>, vector<32x128xf32>
    %cst_40 = arith.constant dense<0.000000e+00> : vector<32x128xf32>
    %82 = tpu.matmul %80, %81, %cst_40 {dimension_numbers = #tpu.dot_dimension_numbers<[1], [0], [0], [1], [0, 0, 1, 1], [], []>} : vector<32x32xf32>, vector<32x128xf32>, vector<32x128xf32> -> vector<32x128xf32>
    %83 = arith.addf %62, %82 : vector<32x128xf32>
    %84 = vector.extract_strided_slice %19 {offsets = [0, 0, 96], sizes = [2, 16, 32], strides = [1, 1, 1]} : vector<2x16x128xf32> to vector<2x16x32xf32>
    %85 = vector.extract_strided_slice %20 {offsets = [0, 0, 96], sizes = [2, 24, 32], strides = [1, 1, 1]} : vector<2x24x128xf32> to vector<2x24x32xf32>
    %86 = vector.extract_strided_slice %21 {offsets = [0, 0, 96], sizes = [2, 24, 32], strides = [1, 1, 1]} : vector<2x24x128xf32> to vector<2x24x32xf32>
    "tpu.trace_start"() <{level = 10 : i32, message = "bld,bsd->bls"}> : () -> ()
    %cst_41 = arith.constant dense<0.000000e+00> : vector<2x16x24xf32>
    %87 = tpu.matmul %84, %85, %cst_41 {dimension_numbers = #tpu.dot_dimension_numbers<[2], [2], [1], [1], [0, 0, 0, 1, 1, 1], [0], [0]>} : vector<2x16x32xf32>, vector<2x24x32xf32>, vector<2x16x24xf32> -> vector<2x16x24xf32>
    "tpu.trace_stop"() : () -> ()
    %cst_42 = arith.constant 0.176776692 : f32
    %88 = vector.broadcast %cst_42 : f32 to vector<2x16x24xf32>
    %89 = arith.mulf %87, %88 : vector<2x16x24xf32>
    %cst_43 = arith.constant dense<0xFF800000> : vector<2x16xf32>
    %90 = vector.multi_reduction <maximumf>, %89, %cst_43 [2] : vector<2x16x24xf32> to vector<2x16xf32>
    %91 = vector.shape_cast %90 : vector<2x16xf32> to vector<2x16x1xf32>
    %92 = vector.broadcast %91 : vector<2x16x1xf32> to vector<2x16x24xf32>
    %93 = arith.subf %89, %92 : vector<2x16x24xf32>
    %94 = math.exp %93 : vector<2x16x24xf32>
    %cst_44 = arith.constant dense<0.000000e+00> : vector<2x16xf32>
    %95 = vector.multi_reduction <add>, %94, %cst_44 [2] : vector<2x16x24xf32> to vector<2x16xf32>
    %96 = vector.shape_cast %95 : vector<2x16xf32> to vector<2x16x1xf32>
    %97 = tpu.reciprocal %96 : vector<2x16x1xf32> -> vector<2x16x1xf32>
    %98 = vector.broadcast %97 : vector<2x16x1xf32> to vector<2x16x24xf32>
    %99 = arith.mulf %94, %98 : vector<2x16x24xf32>
    "tpu.trace_start"() <{level = 10 : i32, message = "bls,bsd->bld"}> : () -> ()
    %cst_45 = arith.constant dense<0.000000e+00> : vector<2x16x32xf32>
    %100 = tpu.matmul %99, %86, %cst_45 {dimension_numbers = #tpu.dot_dimension_numbers<[2], [1], [1], [2], [0, 0, 0, 1, 1, 2], [0], [0]>} : vector<2x16x24xf32>, vector<2x24x32xf32>, vector<2x16x32xf32> -> vector<2x16x32xf32>
    "tpu.trace_stop"() : () -> ()
    %101 = vector.shape_cast %100 : vector<2x16x32xf32> to vector<32x32xf32>
    %c96 = arith.constant 96 : index
    %c0_46 = arith.constant 0 : index
    %102 = vector.load %arg9[%c96, %c0_46] : memref<128x128xf32, #tpu.memory_space<vmem>>, vector<32x128xf32>
    %cst_47 = arith.constant dense<0.000000e+00> : vector<32x128xf32>
    %103 = tpu.matmul %101, %102, %cst_47 {dimension_numbers = #tpu.dot_dimension_numbers<[1], [0], [0], [1], [0, 0, 1, 1], [], []>} : vector<32x32xf32>, vector<32x128xf32>, vector<32x128xf32> -> vector<32x128xf32>
    %104 = arith.addf %83, %103 : vector<32x128xf32>
    %c0_48 = arith.constant 0 : index
    %c0_49 = arith.constant 0 : index
    %105 = vector.load %arg10[%c0_48, %c0_49] : memref<1x128xf32, #tpu.memory_space<vmem>>, vector<1x128xf32>
    %106 = vector.broadcast %105 : vector<1x128xf32> to vector<32x128xf32>
    %107 = arith.addf %104, %106 : vector<32x128xf32>
    %108 = arith.addf %1, %107 : vector<32x128xf32>
    %cst_50 = arith.constant dense<0.000000e+00> : vector<32xf32>
    %109 = vector.multi_reduction <add>, %108, %cst_50 [1] : vector<32x128xf32> to vector<32xf32>
    %110 = vector.shape_cast %109 : vector<32xf32> to vector<32x1xf32>
    %cst_51 = arith.constant 1.280000e+02 : f32
    %111 = vector.broadcast %cst_51 : f32 to vector<32x1xf32>
    %112 = arith.divf %110, %111 : vector<32x1xf32>
    %113 = vector.broadcast %112 : vector<32x1xf32> to vector<32x128xf32>
    %114 = arith.subf %108, %113 : vector<32x128xf32>
    %115 = arith.mulf %114, %114 : vector<32x128xf32>
    %cst_52 = arith.constant dense<0.000000e+00> : vector<32xf32>
    %116 = vector.multi_reduction <add>, %115, %cst_52 [1] : vector<32x128xf32> to vector<32xf32>
    %117 = vector.shape_cast %116 : vector<32xf32> to vector<32x1xf32>
    %cst_53 = arith.constant 1.280000e+02 : f32
    %118 = vector.broadcast %cst_53 : f32 to vector<32x1xf32>
    %119 = arith.divf %117, %118 : vector<32x1xf32>
    %120 = vector.broadcast %112 : vector<32x1xf32> to vector<32x128xf32>
    %121 = arith.subf %108, %120 : vector<32x128xf32>
    %cst_54 = arith.constant 9.99999974E-6 : f32
    %122 = vector.broadcast %cst_54 : f32 to vector<32x1xf32>
    %123 = arith.addf %119, %122 : vector<32x1xf32>
    %124 = math.rsqrt %123 : vector<32x1xf32>
    %125 = vector.broadcast %124 : vector<32x1xf32> to vector<32x128xf32>
    %126 = arith.mulf %121, %125 : vector<32x128xf32>
    %c0_55 = arith.constant 0 : index
    %c0_56 = arith.constant 0 : index
    %127 = vector.load %arg15[%c0_55, %c0_56] : memref<1x128xf32, #tpu.memory_space<vmem>>, vector<1x128xf32>
    %128 = vector.broadcast %127 : vector<1x128xf32> to vector<32x128xf32>
    %129 = arith.mulf %126, %128 : vector<32x128xf32>
    %c0_57 = arith.constant 0 : index
    %c0_58 = arith.constant 0 : index
    %130 = vector.load %arg16[%c0_57, %c0_58] : memref<1x128xf32, #tpu.memory_space<vmem>>, vector<1x128xf32>
    %131 = vector.broadcast %130 : vector<1x128xf32> to vector<32x128xf32>
    %132 = arith.addf %129, %131 : vector<32x128xf32>
    %c0_59 = arith.constant 0 : index
    %c0_60 = arith.constant 0 : index
    %133 = vector.load %arg11[%c0_59, %c0_60] : memref<128x256xf32, #tpu.memory_space<vmem>>, vector<128x256xf32>
    %cst_61 = arith.constant dense<0.000000e+00> : vector<32x256xf32>
    %134 = tpu.matmul %132, %133, %cst_61 {dimension_numbers = #tpu.dot_dimension_numbers<[1], [0], [0], [1], [0, 0, 1, 1], [], []>} : vector<32x128xf32>, vector<128x256xf32>, vector<32x256xf32> -> vector<32x256xf32>
    %c0_62 = arith.constant 0 : index
    %c0_63 = arith.constant 0 : index
    %135 = vector.load %arg12[%c0_62, %c0_63] : memref<1x256xf32, #tpu.memory_space<vmem>>, vector<1x256xf32>
    %136 = vector.broadcast %135 : vector<1x256xf32> to vector<32x256xf32>
    %137 = arith.addf %134, %136 : vector<32x256xf32>
    %cst_64 = arith.constant 0.000000e+00 : f32
    %138 = vector.broadcast %cst_64 : f32 to vector<32x256xf32>
    %139 = arith.maximumf %137, %138 : vector<32x256xf32>
    %c0_65 = arith.constant 0 : index
    %c0_66 = arith.constant 0 : index
    %140 = vector.load %arg13[%c0_65, %c0_66] : memref<256x128xf32, #tpu.memory_space<vmem>>, vector<256x128xf32>
    %cst_67 = arith.constant dense<0.000000e+00> : vector<32x128xf32>
    %141 = tpu.matmul %139, %140, %cst_67 {dimension_numbers = #tpu.dot_dimension_numbers<[1], [0], [0], [1], [0, 0, 1, 1], [], []>} : vector<32x256xf32>, vector<256x128xf32>, vector<32x128xf32> -> vector<32x128xf32>
    %c0_68 = arith.constant 0 : index
    %c0_69 = arith.constant 0 : index
    %142 = vector.load %arg14[%c0_68, %c0_69] : memref<1x128xf32, #tpu.memory_space<vmem>>, vector<1x128xf32>
    %143 = vector.broadcast %142 : vector<1x128xf32> to vector<32x128xf32>
    %144 = arith.addf %141, %143 : vector<32x128xf32>
    %145 = arith.addf %132, %144 : vector<32x128xf32>
    %cst_70 = arith.constant dense<0.000000e+00> : vector<32xf32>
    %146 = vector.multi_reduction <add>, %145, %cst_70 [1] : vector<32x128xf32> to vector<32xf32>
    %147 = vector.shape_cast %146 : vector<32xf32> to vector<32x1xf32>
    %cst_71 = arith.constant 1.280000e+02 : f32
    %148 = vector.broadcast %cst_71 : f32 to vector<32x1xf32>
    %149 = arith.divf %147, %148 : vector<32x1xf32>
    %150 = vector.broadcast %149 : vector<32x1xf32> to vector<32x128xf32>
    %151 = arith.subf %145, %150 : vector<32x128xf32>
    %152 = arith.mulf %151, %151 : vector<32x128xf32>
    %cst_72 = arith.constant dense<0.000000e+00> : vector<32xf32>
    %153 = vector.multi_reduction <add>, %152, %cst_72 [1] : vector<32x128xf32> to vector<32xf32>
    %154 = vector.shape_cast %153 : vector<32xf32> to vector<32x1xf32>
    %cst_73 = arith.constant 1.280000e+02 : f32
    %155 = vector.broadcast %cst_73 : f32 to vector<32x1xf32>
    %156 = arith.divf %154, %155 : vector<32x1xf32>
    %157 = vector.broadcast %149 : vector<32x1xf32> to vector<32x128xf32>
    %158 = arith.subf %145, %157 : vector<32x128xf32>
    %cst_74 = arith.constant 9.99999974E-6 : f32
    %159 = vector.broadcast %cst_74 : f32 to vector<32x1xf32>
    %160 = arith.addf %156, %159 : vector<32x1xf32>
    %161 = math.rsqrt %160 : vector<32x1xf32>
    %162 = vector.broadcast %161 : vector<32x1xf32> to vector<32x128xf32>
    %163 = arith.mulf %158, %162 : vector<32x128xf32>
    %c0_75 = arith.constant 0 : index
    %c0_76 = arith.constant 0 : index
    %164 = vector.load %arg17[%c0_75, %c0_76] : memref<1x128xf32, #tpu.memory_space<vmem>>, vector<1x128xf32>
    %165 = vector.broadcast %164 : vector<1x128xf32> to vector<32x128xf32>
    %166 = arith.mulf %163, %165 : vector<32x128xf32>
    %c0_77 = arith.constant 0 : index
    %c0_78 = arith.constant 0 : index
    %167 = vector.load %arg18[%c0_77, %c0_78] : memref<1x128xf32, #tpu.memory_space<vmem>>, vector<1x128xf32>
    %168 = vector.broadcast %167 : vector<1x128xf32> to vector<32x128xf32>
    %169 = arith.addf %166, %168 : vector<32x128xf32>
    %170 = vector.shape_cast %169 : vector<32x128xf32> to vector<2x16x128xf32>
    %c0_79 = arith.constant 0 : index
    %c0_80 = arith.constant 0 : index
    %c0_81 = arith.constant 0 : index
    %171 = vector.load %arg19[%c0_79, %c0_80, %c0_81] : memref<2x16x128xf32, #tpu.memory_space<vmem>>, vector<2x16x128xf32>
    tpu.vector_store %arg19[%c0_79, %c0_80, %c0_81], %170 {strides = array<i32>} : memref<2x16x128xf32, #tpu.memory_space<vmem>>, vector<2x16x128xf32>,
    return
  }
  func.func @transform_0(%arg0: i32) -> (i32, i32, i32) {
    %c0_i32 = arith.constant 0 : i32
    %c0_i32_0 = arith.constant 0 : i32
    %c0_i32_1 = arith.constant 0 : i32
    return %arg0, %c0_i32, %c0_i32_0 : i32, i32, i32
  }
  func.func @transform_1(%arg0: i32) -> (i32, i32, i32) {
    %c0_i32 = arith.constant 0 : i32
    %c0_i32_0 = arith.constant 0 : i32
    %c0_i32_1 = arith.constant 0 : i32
    return %arg0, %c0_i32, %c0_i32_0 : i32, i32, i32
  }
  func.func @transform_2(%arg0: i32) -> (i32, i32) {
    %c0_i32 = arith.constant 0 : i32
    %c0_i32_0 = arith.constant 0 : i32
    %c0_i32_1 = arith.constant 0 : i32
    return %c0_i32, %c0_i32_0 : i32, i32
  }
  func.func @transform_3(%arg0: i32) -> (i32, i32) {
    %c0_i32 = arith.constant 0 : i32
    %c0_i32_0 = arith.constant 0 : i32
    %c0_i32_1 = arith.constant 0 : i32
    return %c0_i32, %c0_i32_0 : i32, i32
  }
  func.func @transform_4(%arg0: i32) -> (i32, i32) {
    %c0_i32 = arith.constant 0 : i32
    %c0_i32_0 = arith.constant 0 : i32
    %c0_i32_1 = arith.constant 0 : i32
    return %c0_i32, %c0_i32_0 : i32, i32
  }
  func.func @transform_5(%arg0: i32) -> (i32, i32) {
    %c0_i32 = arith.constant 0 : i32
    %c0_i32_0 = arith.constant 0 : i32
    %c0_i32_1 = arith.constant 0 : i32
    return %c0_i32, %c0_i32_0 : i32, i32
  }
  func.func @transform_6(%arg0: i32) -> (i32, i32) {
    %c0_i32 = arith.constant 0 : i32
    %c0_i32_0 = arith.constant 0 : i32
    %c0_i32_1 = arith.constant 0 : i32
    return %c0_i32, %c0_i32_0 : i32, i32
  }
  func.func @transform_7(%arg0: i32) -> (i32, i32) {
    %c0_i32 = arith.constant 0 : i32
    %c0_i32_0 = arith.constant 0 : i32
    %c0_i32_1 = arith.constant 0 : i32
    return %c0_i32, %c0_i32_0 : i32, i32
  }
  func.func @transform_8(%arg0: i32) -> (i32, i32) {
    %c0_i32 = arith.constant 0 : i32
    %c0_i32_0 = arith.constant 0 : i32
    %c0_i32_1 = arith.constant 0 : i32
    return %c0_i32, %c0_i32_0 : i32, i32
  }
  func.func @transform_9(%arg0: i32) -> (i32, i32) {
    %c0_i32 = arith.constant 0 : i32
    %c0_i32_0 = arith.constant 0 : i32
    %c0_i32_1 = arith.constant 0 : i32
    return %c0_i32, %c0_i32_0 : i32, i32
  }
  func.func @transform_10(%arg0: i32) -> (i32, i32) {
    %c0_i32 = arith.constant 0 : i32
    %c0_i32_0 = arith.constant 0 : i32
    %c0_i32_1 = arith.constant 0 : i32
    return %c0_i32, %c0_i32_0 : i32, i32
  }
  func.func @transform_11(%arg0: i32) -> (i32, i32) {
    %c0_i32 = arith.constant 0 : i32
    %c0_i32_0 = arith.constant 0 : i32
    %c0_i32_1 = arith.constant 0 : i32
    return %c0_i32, %c0_i32_0 : i32, i32
  }
  func.func @transform_12(%arg0: i32) -> (i32, i32) {
    %c0_i32 = arith.constant 0 : i32
    %c0_i32_0 = arith.constant 0 : i32
    %c0_i32_1 = arith.constant 0 : i32
    return %c0_i32, %c0_i32_0 : i32, i32
  }
  func.func @transform_13(%arg0: i32) -> (i32, i32) {
    %c0_i32 = arith.constant 0 : i32
    %c0_i32_0 = arith.constant 0 : i32
    %c0_i32_1 = arith.constant 0 : i32
    return %c0_i32, %c0_i32_0 : i32, i32
  }
  func.func @transform_14(%arg0: i32) -> (i32, i32) {
    %c0_i32 = arith.constant 0 : i32
    %c0_i32_0 = arith.constant 0 : i32
    %c0_i32_1 = arith.constant 0 : i32
    return %c0_i32, %c0_i32_0 : i32, i32
  }
  func.func @transform_15(%arg0: i32) -> (i32, i32) {
    %c0_i32 = arith.constant 0 : i32
    %c0_i32_0 = arith.constant 0 : i32
    %c0_i32_1 = arith.constant 0 : i32
    return %c0_i32, %c0_i32_0 : i32, i32
  }
  func.func @transform_16(%arg0: i32) -> (i32, i32) {
    %c0_i32 = arith.constant 0 : i32
    %c0_i32_0 = arith.constant 0 : i32
    %c0_i32_1 = arith.constant 0 : i32
    return %c0_i32, %c0_i32_0 : i32, i32
  }
  func.func @transform_17(%arg0: i32) -> (i32, i32) {
    %c0_i32 = arith.constant 0 : i32
    %c0_i32_0 = arith.constant 0 : i32
    %c0_i32_1 = arith.constant 0 : i32
    return %c0_i32, %c0_i32_0 : i32, i32
  }
  func.func @transform_18(%arg0: i32) -> (i32, i32, i32) {
    %c0_i32 = arith.constant 0 : i32
    %c0_i32_0 = arith.constant 0 : i32
    %c0_i32_1 = arith.constant 0 : i32
    return %arg0, %c0_i32, %c0_i32_0 : i32, i32, i32
  }
}

</mosaic_0001>

<llo_original>
// kernel: tpu_custom_call.1
$region0: #{tpu_custom_call.1}
  #allocation0 [shape = 'u32[]', space=smem, size = 0x4, offset = 0x4, fixed_abs, tag = 'smem constant byte address 0x4 - core index']
  #allocation1 [shape = 'u32[144,128]{1,0:T(1,128)}', space=vmem, size = 0x12000, scoped, tag = 'internal scratch']
  %s0 = inlined_call_operand.hbm [shape: f32[4,16,128], index: 0, kind: input, shape index: {}]
  %s1 = inlined_call_operand.hbm [shape: f32[4,24,128], index: 1, kind: input, shape index: {}]
  %s2 = inlined_call_operand.hbm [shape: f32[128,128], index: 2, kind: input, shape index: {}]
  %s3 = inlined_call_operand.hbm [shape: f32[128,128], index: 3, kind: input, shape index: {}]
  %s4 = inlined_call_operand.hbm [shape: f32[128,128], index: 4, kind: input, shape index: {}]
  %s5 = inlined_call_operand.vmem [shape: f32[1,128], index: 5, kind: input, shape index: {}]
  %s6 = inlined_call_operand.vmem [shape: f32[1,128], index: 6, kind: input, shape index: {}]
  %s7 = inlined_call_operand.vmem [shape: f32[1,128], index: 7, kind: input, shape index: {}]
  %s8 = inlined_call_operand.hbm [shape: f32[128,128], index: 8, kind: input, shape index: {}]
  %s9 = inlined_call_operand.vmem [shape: f32[1,128], index: 9, kind: input, shape index: {}]
  %s10 = inlined_call_operand.hbm [shape: f32[128,256], index: 10, kind: input, shape index: {}]
  %s11 = inlined_call_operand.vmem [shape: f32[1,256], index: 11, kind: input, shape index: {}]
  %s12 = inlined_call_operand.hbm [shape: f32[256,128], index: 12, kind: input, shape index: {}]
  %s13 = inlined_call_operand.vmem [shape: f32[1,128], index: 13, kind: input, shape index: {}]
  %s14 = inlined_call_operand.vmem [shape: f32[1,128], index: 14, kind: input, shape index: {}]
  %s15 = inlined_call_operand.vmem [shape: f32[1,128], index: 15, kind: input, shape index: {}]
  %s16 = inlined_call_operand.vmem [shape: f32[1,128], index: 16, kind: input, shape index: {}]
  %s17 = inlined_call_operand.vmem [shape: f32[1,128], index: 17, kind: input, shape index: {}]
  %s18 = inlined_call_operand.hbm [shape: f32[4,16,128], index: 18, kind: output, shape index: {}]
  %s19 = sld [smem:[#allocation0]]
  $region137: #{tpu_custom_call.1} parent=0
    _
  %s21 = ssub.s32 1, %s19
  %s22 = scalar_select 0, %s21, %s19
  $region1: #{tpu_custom_call.1} parent=0
    #allocation2 [shape = 'u8[32768]{0}', space=vmem, size = 0x8000, scoped, tag = 'input window, operand 0']
    #allocation3 [shape = 's32[2]{0}', space=sflag, size = 0x8, scoped, tag = 'scoped memory for tpu_custom_call.1']
    #allocation4 [shape = 's32[2]{0}', space=sflag, size = 0x8, scoped, tag = 'scoped memory for tpu_custom_call.1']
    #allocation5 [shape = 'u8[49152]{0}', space=vmem, size = 0xc000, scoped, tag = 'input window, operand 1']
    #allocation6 [shape = 's32[2]{0}', space=sflag, size = 0x8, scoped, tag = 'scoped memory for tpu_custom_call.1']
    #allocation7 [shape = 'u8[65536]{0}', space=vmem, size = 0x10000, scoped, tag = 'input window, operand 2, single buffered']
    #allocation8 [shape = 'u8[65536]{0}', space=vmem, size = 0x10000, scoped, tag = 'input window, operand 3, single buffered']
    #allocation9 [shape = 's32[1]{0}', space=sflag, size = 0x4, scoped, tag = 'scoped memory for tpu_custom_call.1']
    #allocation10 [shape = 'u8[65536]{0}', space=vmem, size = 0x10000, scoped, tag = 'input window, operand 4, single buffered']
    #allocation11 [shape = 'u8[65536]{0}', space=vmem, size = 0x10000, scoped, tag = 'input window, operand 8, single buffered']
    #allocation12 [shape = 's32[1]{0}', space=sflag, size = 0x4, scoped, tag = 'scoped memory for tpu_custom_call.1']
    #allocation13 [shape = 'u8[131072]{0}', space=vmem, size = 0x20000, scoped, tag = 'input window, operand 10, single buffered']
    #allocation14 [shape = 'u8[131072]{0}', space=vmem, size = 0x20000, scoped, tag = 'input window, operand 12, single buffered']
    #allocation15 [shape = 's32[1]{0}', space=sflag, size = 0x4, scoped, tag = 'scoped memory for tpu_custom_call.1']
    #allocation16 [shape = 'u8[32768]{0}', space=vmem, size = 0x8000, scoped, tag = 'output window, operand 0']
    %23 = vsyncpa [#allocation3], 0
    %s24 = scalar_lea.sflag [#allocation3], 1
    %25 = vsyncpa %s24, 0
    %26 = vsyncpa [#allocation6], 0
    %s27 = scalar_lea.sflag [#allocation6], 1
    %28 = vsyncpa %s27, 0
    %29 = vsyncpa [#allocation9], 0
    %30 = vsyncpa [#allocation12], 0
    %31 = vsyncpa [#allocation15], 0
    %32 = vsyncpa [#allocation4], 0
    %s33 = scalar_lea.sflag [#allocation4], 1
    %34 = vsyncpa %s33, 0
    loop: start=0, step=1, limit=4
    $region2: #{tpu_custom_call.1} parent=1 // loop_pre_header
      _
    $region3: #{tpu_custom_call.1} parent=1 // loop_header
      %s36 = sphi 0, %s40
      %p37 = scmp.ge.s32.totalorder %s36, 4
      %s46 = sphi 0, %s48
      %s49 = sphi 0, %s46
      %s50 = sphi 0, %s49
      %s66 = sphi 0, %s50
      %s72 = sphi 0, %s74
      %s75 = sphi 0, %s72
      %s76 = sphi 0, %s75
      %s92 = sphi 0, %s76
      %s96 = sphi 0, %s96
      %s98 = sphi 0, %s96
      %s99 = sphi 0, %s98
      %s113 = sphi 0, %s99
      %s117 = sphi 0, %s117
      %s119 = sphi 0, %s117
      %s120 = sphi 0, %s119
      %s134 = sphi 0, %s120
      %s138 = sphi 0, %s138
      %s140 = sphi 0, %s138
      %s141 = sphi 0, %s140
      %s155 = sphi 0, %s141
      %s159 = sphi 0, %s159
      %s161 = sphi 0, %s159
      %s162 = sphi 0, %s161
      %s176 = sphi 0, %s162
      %s180 = sphi 0, %s180
      %s182 = sphi 0, %s180
      %s183 = sphi 0, %s182
      %s197 = sphi 0, %s183
      %s201 = sphi 0, %s201
      %s203 = sphi 0, %s201
      %s204 = sphi 0, %s203
      %s218 = sphi 0, %s204
      %s222 = sphi 0, %s222
      %s224 = sphi 0, %s222
      %s225 = sphi 0, %s224
      %s239 = sphi 0, %s225
      %s243 = sphi 0, %s243
      %s245 = sphi 0, %s243
      %s246 = sphi 0, %s245
      %s260 = sphi 0, %s246
      %s264 = sphi 0, %s264
      %s266 = sphi 0, %s264
      %s267 = sphi 0, %s266
      %s281 = sphi 0, %s267
      %s285 = sphi 0, %s285
      %s287 = sphi 0, %s285
      %s288 = sphi 0, %s287
      %s302 = sphi 0, %s288
      %s306 = sphi 0, %s306
      %s308 = sphi 0, %s306
      %s309 = sphi 0, %s308
      %s323 = sphi 0, %s309
      %s327 = sphi 0, %s327
      %s329 = sphi 0, %s327
      %s330 = sphi 0, %s329
      %s344 = sphi 0, %s330
      %s348 = sphi 0, %s348
      %s350 = sphi 0, %s348
      %s351 = sphi 0, %s350
      %s365 = sphi 0, %s351
      %s369 = sphi 0, %s369
      %s371 = sphi 0, %s369
      %s372 = sphi 0, %s371
      %s386 = sphi 0, %s372
      %s390 = sphi 0, %s390
      %s392 = sphi 0, %s390
      %s393 = sphi 0, %s392
      %s407 = sphi 0, %s393
      %s411 = sphi 0, %s411
      %s413 = sphi 0, %s411
      %s414 = sphi 0, %s413
      %s428 = sphi 0, %s414
      %s434 = sphi 0, %s436
      %s437 = sphi 0, %s434
      %s438 = sphi 0, %s437
      %s454 = sphi 0, %s438
    $region4: #{tpu_custom_call.1} parent=1 // loop_header_branch
      %39 = sbr.rel (%p37) target = $region8
    $region5: #{tpu_custom_call.1} parent=1 // loop_body
      %s41 = ssub.s32 %s36, 1
      %s42 = ssub.s32 %s36, 2
      %s43 = sadd.s32 %s36, 1
      %s44 = ssub.s32 %s36, %s43
      %p45 = scmp.eq.s32.totalorder %s44, 0
      %s47 = sadd.s32 %s46, 1
      %s48 = scalar_select %p45, %s46, %s47
      %p51 = pneg %p45
      %p52 = scmp.eq.s32.totalorder %s36, 1
      %p53 = por %p51, %p52
      %p54 = scmp.ne.s32.totalorder %s46, %s49
      %p55 = scmp.eq.s32.totalorder %s36, 0
      %p56 = por %p54, %p55
      %p57 = scmp.ne.s32.totalorder %s46, %s49
      %p58 = scmp.eq.s32.totalorder %s41, 1
      %p59 = por %p57, %p58
      %p60 = scmp.ne.s32.totalorder %s49, %s50
      %p61 = scmp.eq.s32.totalorder %s41, 0
      %p62 = por %p60, %p61
      %p63 = scmp.ne.s32.totalorder %s49, %s50
      %p64 = scmp.eq.s32.totalorder %s42, 1
      %p65 = por %p63, %p64
      %p67 = scmp.ne.s32.totalorder %s50, %s66
      %p68 = scmp.eq.s32.totalorder %s42, 0
      %p69 = por %p67, %p68
      %s70 = ssub.s32 %s36, %s43
      %p71 = scmp.eq.s32.totalorder %s70, 0
      %s73 = sadd.s32 %s72, 1
      %s74 = scalar_select %p71, %s72, %s73
      %p77 = pneg %p71
      %p78 = scmp.eq.s32.totalorder %s36, 1
      %p79 = por %p77, %p78
      %p80 = scmp.ne.s32.totalorder %s72, %s75
      %p81 = scmp.eq.s32.totalorder %s36, 0
      %p82 = por %p80, %p81
      %p83 = scmp.ne.s32.totalorder %s72, %s75
      %p84 = scmp.eq.s32.totalorder %s41, 1
      %p85 = por %p83, %p84
      %p86 = scmp.ne.s32.totalorder %s75, %s76
      %p87 = scmp.eq.s32.totalorder %s41, 0
      %p88 = por %p86, %p87
      %p89 = scmp.ne.s32.totalorder %s75, %s76
      %p90 = scmp.eq.s32.totalorder %s42, 1
      %p91 = por %p89, %p90
      %p93 = scmp.ne.s32.totalorder %s76, %s92
      %p94 = scmp.eq.s32.totalorder %s42, 0
      %p95 = por %p93, %p94
      %s97 = sadd.s32 %s96, 1
      %p100 = scmp.eq.s32.totalorder %s36, 1
      %p101 = scmp.ne.s32.totalorder %s96, %s98
      %p102 = scmp.eq.s32.totalorder %s36, 0
      %p103 = por %p101, %p102
      %p104 = scmp.ne.s32.totalorder %s96, %s98
      %p105 = scmp.eq.s32.totalorder %s41, 1
      %p106 = por %p104, %p105
      %p107 = scmp.ne.s32.totalorder %s98, %s99
      %p108 = scmp.eq.s32.totalorder %s41, 0
      %p109 = por %p107, %p108
      %p110 = scmp.ne.s32.totalorder %s98, %s99
      %p111 = scmp.eq.s32.totalorder %s42, 1
      %p112 = por %p110, %p111
      %p114 = scmp.ne.s32.totalorder %s99, %s113
      %p115 = scmp.eq.s32.totalorder %s42, 0
      %p116 = por %p114, %p115
      %s118 = sadd.s32 %s117, 1
      %p121 = scmp.eq.s32.totalorder %s36, 1
      %p122 = scmp.ne.s32.totalorder %s117, %s119
      %p123 = scmp.eq.s32.totalorder %s36, 0
      %p124 = por %p122, %p123
      %p125 = scmp.ne.s32.totalorder %s117, %s119
      %p126 = scmp.eq.s32.totalorder %s41, 1
      %p127 = por %p125, %p126
      %p128 = scmp.ne.s32.totalorder %s119, %s120
      %p129 = scmp.eq.s32.totalorder %s41, 0
      %p130 = por %p128, %p129
      %p131 = scmp.ne.s32.totalorder %s119, %s120
      %p132 = scmp.eq.s32.totalorder %s42, 1
      %p133 = por %p131, %p132
      %p135 = scmp.ne.s32.totalorder %s120, %s134
      %p136 = scmp.eq.s32.totalorder %s42, 0
      %p137 = por %p135, %p136
      %s139 = sadd.s32 %s138, 1
      %p142 = scmp.eq.s32.totalorder %s36, 1
      %p143 = scmp.ne.s32.totalorder %s138, %s140
      %p144 = scmp.eq.s32.totalorder %s36, 0
      %p145 = por %p143, %p144
      %p146 = scmp.ne.s32.totalorder %s138, %s140
      %p147 = scmp.eq.s32.totalorder %s41, 1
      %p148 = por %p146, %p147
      %p149 = scmp.ne.s32.totalorder %s140, %s141
      %p150 = scmp.eq.s32.totalorder %s41, 0
      %p151 = por %p149, %p150
      %p152 = scmp.ne.s32.totalorder %s140, %s141
      %p153 = scmp.eq.s32.totalorder %s42, 1
      %p154 = por %p152, %p153
      %p156 = scmp.ne.s32.totalorder %s141, %s155
      %p157 = scmp.eq.s32.totalorder %s42, 0
      %p158 = por %p156, %p157
      %s160 = sadd.s32 %s159, 1
      %p163 = scmp.eq.s32.totalorder %s36, 1
      %p164 = scmp.ne.s32.totalorder %s159, %s161
      %p165 = scmp.eq.s32.totalorder %s36, 0
      %p166 = por %p164, %p165
      %p167 = scmp.ne.s32.totalorder %s159, %s161
      %p168 = scmp.eq.s32.totalorder %s41, 1
      %p169 = por %p167, %p168
      %p170 = scmp.ne.s32.totalorder %s161, %s162
      %p171 = scmp.eq.s32.totalorder %s41, 0
      %p172 = por %p170, %p171
      %p173 = scmp.ne.s32.totalorder %s161, %s162
      %p174 = scmp.eq.s32.totalorder %s42, 1
      %p175 = por %p173, %p174
      %p177 = scmp.ne.s32.totalorder %s162, %s176
      %p178 = scmp.eq.s32.totalorder %s42, 0
      %p179 = por %p177, %p178
      %s181 = sadd.s32 %s180, 1
      %p184 = scmp.eq.s32.totalorder %s36, 1
      %p185 = scmp.ne.s32.totalorder %s180, %s182
      %p186 = scmp.eq.s32.totalorder %s36, 0
      %p187 = por %p185, %p186
      %p188 = scmp.ne.s32.totalorder %s180, %s182
      %p189 = scmp.eq.s32.totalorder %s41, 1
      %p190 = por %p188, %p189
      %p191 = scmp.ne.s32.totalorder %s182, %s183
      %p192 = scmp.eq.s32.totalorder %s41, 0
      %p193 = por %p191, %p192
      %p194 = scmp.ne.s32.totalorder %s182, %s183
      %p195 = scmp.eq.s32.totalorder %s42, 1
      %p196 = por %p194, %p195
      %p198 = scmp.ne.s32.totalorder %s183, %s197
      %p199 = scmp.eq.s32.totalorder %s42, 0
      %p200 = por %p198, %p199
      %s202 = sadd.s32 %s201, 1
      %p205 = scmp.eq.s32.totalorder %s36, 1
      %p206 = scmp.ne.s32.totalorder %s201, %s203
      %p207 = scmp.eq.s32.totalorder %s36, 0
      %p208 = por %p206, %p207
      %p209 = scmp.ne.s32.totalorder %s201, %s203
      %p210 = scmp.eq.s32.totalorder %s41, 1
      %p211 = por %p209, %p210
      %p212 = scmp.ne.s32.totalorder %s203, %s204
      %p213 = scmp.eq.s32.totalorder %s41, 0
      %p214 = por %p212, %p213
      %p215 = scmp.ne.s32.totalorder %s203, %s204
      %p216 = scmp.eq.s32.totalorder %s42, 1
      %p217 = por %p215, %p216
      %p219 = scmp.ne.s32.totalorder %s204, %s218
      %p220 = scmp.eq.s32.totalorder %s42, 0
      %p221 = por %p219, %p220
      %s223 = sadd.s32 %s222, 1
      %p226 = scmp.eq.s32.totalorder %s36, 1
      %p227 = scmp.ne.s32.totalorder %s222, %s224
      %p228 = scmp.eq.s32.totalorder %s36, 0
      %p229 = por %p227, %p228
      %p230 = scmp.ne.s32.totalorder %s222, %s224
      %p231 = scmp.eq.s32.totalorder %s41, 1
      %p232 = por %p230, %p231
      %p233 = scmp.ne.s32.totalorder %s224, %s225
      %p234 = scmp.eq.s32.totalorder %s41, 0
      %p235 = por %p233, %p234
      %p236 = scmp.ne.s32.totalorder %s224, %s225
      %p237 = scmp.eq.s32.totalorder %s42, 1
      %p238 = por %p236, %p237
      %p240 = scmp.ne.s32.totalorder %s225, %s239
      %p241 = scmp.eq.s32.totalorder %s42, 0
      %p242 = por %p240, %p241
      %s244 = sadd.s32 %s243, 1
      %p247 = scmp.eq.s32.totalorder %s36, 1
      %p248 = scmp.ne.s32.totalorder %s243, %s245
      %p249 = scmp.eq.s32.totalorder %s36, 0
      %p250 = por %p248, %p249
      %p251 = scmp.ne.s32.totalorder %s243, %s245
      %p252 = scmp.eq.s32.totalorder %s41, 1
      %p253 = por %p251, %p252
      %p254 = scmp.ne.s32.totalorder %s245, %s246
      %p255 = scmp.eq.s32.totalorder %s41, 0
      %p256 = por %p254, %p255
      %p257 = scmp.ne.s32.totalorder %s245, %s246
      %p258 = scmp.eq.s32.totalorder %s42, 1
      %p259 = por %p257, %p258
      %p261 = scmp.ne.s32.totalorder %s246, %s260
      %p262 = scmp.eq.s32.totalorder %s42, 0
      %p263 = por %p261, %p262
      %s265 = sadd.s32 %s264, 1
      %p268 = scmp.eq.s32.totalorder %s36, 1
      %p269 = scmp.ne.s32.totalorder %s264, %s266
      %p270 = scmp.eq.s32.totalorder %s36, 0
      %p271 = por %p269, %p270
      %p272 = scmp.ne.s32.totalorder %s264, %s266
      %p273 = scmp.eq.s32.totalorder %s41, 1
      %p274 = por %p272, %p273
      %p275 = scmp.ne.s32.totalorder %s266, %s267
      %p276 = scmp.eq.s32.totalorder %s41, 0
      %p277 = por %p275, %p276
      %p278 = scmp.ne.s32.totalorder %s266, %s267
      %p279 = scmp.eq.s32.totalorder %s42, 1
      %p280 = por %p278, %p279
      %p282 = scmp.ne.s32.totalorder %s267, %s281
      %p283 = scmp.eq.s32.totalorder %s42, 0
      %p284 = por %p282, %p283
      %s286 = sadd.s32 %s285, 1
      %p289 = scmp.eq.s32.totalorder %s36, 1
      %p290 = scmp.ne.s32.totalorder %s285, %s287
      %p291 = scmp.eq.s32.totalorder %s36, 0
      %p292 = por %p290, %p291
      %p293 = scmp.ne.s32.totalorder %s285, %s287
      %p294 = scmp.eq.s32.totalorder %s41, 1
      %p295 = por %p293, %p294
      %p296 = scmp.ne.s32.totalorder %s287, %s288
      %p297 = scmp.eq.s32.totalorder %s41, 0
      %p298 = por %p296, %p297
      %p299 = scmp.ne.s32.totalorder %s287, %s288
      %p300 = scmp.eq.s32.totalorder %s42, 1
      %p301 = por %p299, %p300
      %p303 = scmp.ne.s32.totalorder %s288, %s302
      %p304 = scmp.eq.s32.totalorder %s42, 0
      %p305 = por %p303, %p304
      %s307 = sadd.s32 %s306, 1
      %p310 = scmp.eq.s32.totalorder %s36, 1
      %p311 = scmp.ne.s32.totalorder %s306, %s308
      %p312 = scmp.eq.s32.totalorder %s36, 0
      %p313 = por %p311, %p312
      %p314 = scmp.ne.s32.totalorder %s306, %s308
      %p315 = scmp.eq.s32.totalorder %s41, 1
      %p316 = por %p314, %p315
      %p317 = scmp.ne.s32.totalorder %s308, %s309
      %p318 = scmp.eq.s32.totalorder %s41, 0
      %p319 = por %p317, %p318
      %p320 = scmp.ne.s32.totalorder %s308, %s309
      %p321 = scmp.eq.s32.totalorder %s42, 1
      %p322 = por %p320, %p321
      %p324 = scmp.ne.s32.totalorder %s309, %s323
      %p325 = scmp.eq.s32.totalorder %s42, 0
      %p326 = por %p324, %p325
      %s328 = sadd.s32 %s327, 1
      %p331 = scmp.eq.s32.totalorder %s36, 1
      %p332 = scmp.ne.s32.totalorder %s327, %s329
      %p333 = scmp.eq.s32.totalorder %s36, 0
      %p334 = por %p332, %p333
      %p335 = scmp.ne.s32.totalorder %s327, %s329
      %p336 = scmp.eq.s32.totalorder %s41, 1
      %p337 = por %p335, %p336
      %p338 = scmp.ne.s32.totalorder %s329, %s330
      %p339 = scmp.eq.s32.totalorder %s41, 0
      %p340 = por %p338, %p339
      %p341 = scmp.ne.s32.totalorder %s329, %s330
      %p342 = scmp.eq.s32.totalorder %s42, 1
      %p343 = por %p341, %p342
      %p345 = scmp.ne.s32.totalorder %s330, %s344
      %p346 = scmp.eq.s32.totalorder %s42, 0
      %p347 = por %p345, %p346
      %s349 = sadd.s32 %s348, 1
      %p352 = scmp.eq.s32.totalorder %s36, 1
      %p353 = scmp.ne.s32.totalorder %s348, %s350
      %p354 = scmp.eq.s32.totalorder %s36, 0
      %p355 = por %p353, %p354
      %p356 = scmp.ne.s32.totalorder %s348, %s350
      %p357 = scmp.eq.s32.totalorder %s41, 1
      %p358 = por %p356, %p357
      %p359 = scmp.ne.s32.totalorder %s350, %s351
      %p360 = scmp.eq.s32.totalorder %s41, 0
      %p361 = por %p359, %p360
      %p362 = scmp.ne.s32.totalorder %s350, %s351
      %p363 = scmp.eq.s32.totalorder %s42, 1
      %p364 = por %p362, %p363
      %p366 = scmp.ne.s32.totalorder %s351, %s365
      %p367 = scmp.eq.s32.totalorder %s42, 0
      %p368 = por %p366, %p367
      %s370 = sadd.s32 %s369, 1
      %p373 = scmp.eq.s32.totalorder %s36, 1
      %p374 = scmp.ne.s32.totalorder %s369, %s371
      %p375 = scmp.eq.s32.totalorder %s36, 0
      %p376 = por %p374, %p375
      %p377 = scmp.ne.s32.totalorder %s369, %s371
      %p378 = scmp.eq.s32.totalorder %s41, 1
      %p379 = por %p377, %p378
      %p380 = scmp.ne.s32.totalorder %s371, %s372
      %p381 = scmp.eq.s32.totalorder %s41, 0
      %p382 = por %p380, %p381
      %p383 = scmp.ne.s32.totalorder %s371, %s372
      %p384 = scmp.eq.s32.totalorder %s42, 1
      %p385 = por %p383, %p384
      %p387 = scmp.ne.s32.totalorder %s372, %s386
      %p388 = scmp.eq.s32.totalorder %s42, 0
      %p389 = por %p387, %p388
      %s391 = sadd.s32 %s390, 1
      %p394 = scmp.eq.s32.totalorder %s36, 1
      %p395 = scmp.ne.s32.totalorder %s390, %s392
      %p396 = scmp.eq.s32.totalorder %s36, 0
      %p397 = por %p395, %p396
      %p398 = scmp.ne.s32.totalorder %s390, %s392
      %p399 = scmp.eq.s32.totalorder %s41, 1
      %p400 = por %p398, %p399
      %p401 = scmp.ne.s32.totalorder %s392, %s393
      %p402 = scmp.eq.s32.totalorder %s41, 0
      %p403 = por %p401, %p402
      %p404 = scmp.ne.s32.totalorder %s392, %s393
      %p405 = scmp.eq.s32.totalorder %s42, 1
      %p406 = por %p404, %p405
      %p408 = scmp.ne.s32.totalorder %s393, %s407
      %p409 = scmp.eq.s32.totalorder %s42, 0
      %p410 = por %p408, %p409
      %s412 = sadd.s32 %s411, 1
      %p415 = scmp.eq.s32.totalorder %s36, 1
      %p416 = scmp.ne.s32.totalorder %s411, %s413
      %p417 = scmp.eq.s32.totalorder %s36, 0
      %p418 = por %p416, %p417
      %p419 = scmp.ne.s32.totalorder %s411, %s413
      %p420 = scmp.eq.s32.totalorder %s41, 1
      %p421 = por %p419, %p420
      %p422 = scmp.ne.s32.totalorder %s413, %s414
      %p423 = scmp.eq.s32.totalorder %s41, 0
      %p424 = por %p422, %p423
      %p425 = scmp.ne.s32.totalorder %s413, %s414
      %p426 = scmp.eq.s32.totalorder %s42, 1
      %p427 = por %p425, %p426
      %p429 = scmp.ne.s32.totalorder %s414, %s428
      %p430 = scmp.eq.s32.totalorder %s42, 0
      %p431 = por %p429, %p430
      %s432 = ssub.s32 %s36, %s43
      %p433 = scmp.eq.s32.totalorder %s432, 0
      %s435 = sadd.s32 %s434, 1
      %s436 = scalar_select %p433, %s434, %s435
      %p439 = pneg %p433
      %p440 = scmp.eq.s32.totalorder %s36, 1
      %p441 = por %p439, %p440
      %p442 = scmp.ne.s32.totalorder %s434, %s437
      %p443 = scmp.eq.s32.totalorder %s36, 0
      %p444 = por %p442, %p443
      %p445 = scmp.ne.s32.totalorder %s434, %s437
      %p446 = scmp.eq.s32.totalorder %s41, 1
      %p447 = por %p445, %p446
      %p448 = scmp.ne.s32.totalorder %s437, %s438
      %p449 = scmp.eq.s32.totalorder %s41, 0
      %p450 = por %p448, %p449
      %p451 = scmp.ne.s32.totalorder %s437, %s438
      %p452 = scmp.eq.s32.totalorder %s42, 1
      %p453 = por %p451, %p452
      %p455 = scmp.ne.s32.totalorder %s438, %s454
      %p456 = scmp.eq.s32.totalorder %s42, 0
      %p457 = por %p455, %p456
      %p458 = scmp.le.s32.totalorder 1, %s36
      %p459 = scmp.lt.s32.totalorder %s36, 3
      %p460 = pnand %p458, %p459
      %p461 = pneg %p460
      // Predicated region
      $region9: #{tpu_custom_call.1} parent=5 // pred_check
        _
      $region10: #{tpu_custom_call.1} parent=5 // pred_check_branch
        %463 = sbr.rel (%p460) target = $region12
      $region11: #{tpu_custom_call.1} parent=5 // pred_region
        %s464 = ssub.s32 %s36, 1
        // Predicated region
        $region13: #{tpu_custom_call.1} parent=11 // pred_check
          %p465 = pneg %p109
        $region14: #{tpu_custom_call.1} parent=11 // pred_check_branch
          %467 = sbr.rel (%p465) target = $region16
        $region15: #{tpu_custom_call.1} parent=11 // pred_region
          %s469 = ssub.s32 2048, 2048
          %470 = vsyncadd [#allocation6], %s469
          %s471 = sshll.u32 [#allocation7], 4
          %s472 = int_to_ptr.vmem [resolvable:$true] %s471
          %477 = dma.hbm_to_vmem [thread:$0]  %s2, 2048, %s472, [#allocation6], 128, 128, 8
        $region16: #{tpu_custom_call.1} parent=11 // pred_fallthru
          _
        // Predicated region
        $region17: #{tpu_custom_call.1} parent=11 // pred_check
          %p478 = pneg %p130
        $region18: #{tpu_custom_call.1} parent=11 // pred_check_branch
          %480 = sbr.rel (%p478) target = $region20
        $region19: #{tpu_custom_call.1} parent=11 // pred_region
          %s482 = ssub.s32 2048, 2048
          %483 = vsyncadd [#allocation9], %s482
          %s484 = sshll.u32 [#allocation8], 4
          %s485 = int_to_ptr.vmem [resolvable:$true] %s484
          %490 = dma.hbm_to_vmem [thread:$0]  %s3, 2048, %s485, [#allocation9], 128, 128, 8
        $region20: #{tpu_custom_call.1} parent=11 // pred_fallthru
          _
        // Predicated region
        $region21: #{tpu_custom_call.1} parent=11 // pred_check
          %p491 = pneg %p151
        $region22: #{tpu_custom_call.1} parent=11 // pred_check_branch
          %493 = sbr.rel (%p491) target = $region24
        $region23: #{tpu_custom_call.1} parent=11 // pred_region
          %s495 = ssub.s32 2048, 2048
          %496 = vsyncadd [#allocation9], %s495
          %s497 = sshll.u32 [#allocation10], 4
          %s498 = int_to_ptr.vmem [resolvable:$true] %s497
          %503 = dma.hbm_to_vmem [thread:$0]  %s4, 2048, %s498, [#allocation9], 128, 128, 8
        $region24: #{tpu_custom_call.1} parent=11 // pred_fallthru
          _
        // Predicated region
        $region25: #{tpu_custom_call.1} parent=11 // pred_check
          %p504 = pneg %p172
        $region26: #{tpu_custom_call.1} parent=11 // pred_check_branch
          %506 = sbr.rel (%p504) target = $region28
        $region27: #{tpu_custom_call.1} parent=11 // pred_region
          _
        $region28: #{tpu_custom_call.1} parent=11 // pred_fallthru
          _
        // Predicated region
        $region29: #{tpu_custom_call.1} parent=11 // pred_check
          %p507 = pneg %p193
        $region30: #{tpu_custom_call.1} parent=11 // pred_check_branch
          %509 = sbr.rel (%p507) target = $region32
        $region31: #{tpu_custom_call.1} parent=11 // pred_region
          _
        $region32: #{tpu_custom_call.1} parent=11 // pred_fallthru
          _
        // Predicated region
        $region33: #{tpu_custom_call.1} parent=11 // pred_check
          %p510 = pneg %p214
        $region34: #{tpu_custom_call.1} parent=11 // pred_check_branch
          %512 = sbr.rel (%p510) target = $region36
        $region35: #{tpu_custom_call.1} parent=11 // pred_region
          _
        $region36: #{tpu_custom_call.1} parent=11 // pred_fallthru
          _
        // Predicated region
        $region37: #{tpu_custom_call.1} parent=11 // pred_check
          %p513 = pneg %p235
        $region38: #{tpu_custom_call.1} parent=11 // pred_check_branch
          %515 = sbr.rel (%p513) target = $region40
        $region39: #{tpu_custom_call.1} parent=11 // pred_region
          %s517 = ssub.s32 2048, 2048
          %518 = vsyncadd [#allocation12], %s517
          %s519 = sshll.u32 [#allocation11], 4
          %s520 = int_to_ptr.vmem [resolvable:$true] %s519
          %525 = dma.hbm_to_vmem [thread:$0]  %s8, 2048, %s520, [#allocation12], 128, 128, 8
        $region40: #{tpu_custom_call.1} parent=11 // pred_fallthru
          _
        // Predicated region
        $region41: #{tpu_custom_call.1} parent=11 // pred_check
          %p526 = pneg %p256
        $region42: #{tpu_custom_call.1} parent=11 // pred_check_branch
          %528 = sbr.rel (%p526) target = $region44
        $region43: #{tpu_custom_call.1} parent=11 // pred_region
          _
        $region44: #{tpu_custom_call.1} parent=11 // pred_fallthru
          _
        // Predicated region
        $region45: #{tpu_custom_call.1} parent=11 // pred_check
          %p529 = pneg %p277
        $region46: #{tpu_custom_call.1} parent=11 // pred_check_branch
          %531 = sbr.rel (%p529) target = $region48
        $region47: #{tpu_custom_call.1} parent=11 // pred_region
          %s533 = ssub.s32 4096, 4096
          %534 = vsyncadd [#allocation12], %s533
          %s535 = sshll.u32 [#allocation13], 4
          %s536 = int_to_ptr.vmem [resolvable:$true] %s535
          %541 = dma.hbm_to_vmem [thread:$0]  %s10, 4096, %s536, [#allocation12], 256, 256, 16
        $region48: #{tpu_custom_call.1} parent=11 // pred_fallthru
          _
        // Predicated region
        $region49: #{tpu_custom_call.1} parent=11 // pred_check
          %p542 = pneg %p298
        $region50: #{tpu_custom_call.1} parent=11 // pred_check_branch
          %544 = sbr.rel (%p542) target = $region52
        $region51: #{tpu_custom_call.1} parent=11 // pred_region
          _
        $region52: #{tpu_custom_call.1} parent=11 // pred_fallthru
          _
        // Predicated region
        $region53: #{tpu_custom_call.1} parent=11 // pred_check
          %p545 = pneg %p319
        $region54: #{tpu_custom_call.1} parent=11 // pred_check_branch
          %547 = sbr.rel (%p545) target = $region56
        $region55: #{tpu_custom_call.1} parent=11 // pred_region
          %s549 = ssub.s32 4096, 4096
          %550 = vsyncadd [#allocation15], %s549
          %s551 = sshll.u32 [#allocation14], 4
          %s552 = int_to_ptr.vmem [resolvable:$true] %s551
          %557 = dma.hbm_to_vmem [thread:$0]  %s12, 4096, %s552, [#allocation15], 128, 128, 8
        $region56: #{tpu_custom_call.1} parent=11 // pred_fallthru
          _
        // Predicated region
        $region57: #{tpu_custom_call.1} parent=11 // pred_check
          %p558 = pneg %p340
        $region58: #{tpu_custom_call.1} parent=11 // pred_check_branch
          %560 = sbr.rel (%p558) target = $region60
        $region59: #{tpu_custom_call.1} parent=11 // pred_region
          _
        $region60: #{tpu_custom_call.1} parent=11 // pred_fallthru
          _
        // Predicated region
        $region61: #{tpu_custom_call.1} parent=11 // pred_check
          %p561 = pneg %p361
        $region62: #{tpu_custom_call.1} parent=11 // pred_check_branch
          %563 = sbr.rel (%p561) target = $region64
        $region63: #{tpu_custom_call.1} parent=11 // pred_region
          _
        $region64: #{tpu_custom_call.1} parent=11 // pred_fallthru
          _
        // Predicated region
        $region65: #{tpu_custom_call.1} parent=11 // pred_check
          %p564 = pneg %p382
        $region66: #{tpu_custom_call.1} parent=11 // pred_check_branch
          %566 = sbr.rel (%p564) target = $region68
        $region67: #{tpu_custom_call.1} parent=11 // pred_region
          _
        $region68: #{tpu_custom_call.1} parent=11 // pred_fallthru
          _
        // Predicated region
        $region69: #{tpu_custom_call.1} parent=11 // pred_check
          %p567 = pneg %p403
        $region70: #{tpu_custom_call.1} parent=11 // pred_check_branch
          %569 = sbr.rel (%p567) target = $region72
        $region71: #{tpu_custom_call.1} parent=11 // pred_region
          _
        $region72: #{tpu_custom_call.1} parent=11 // pred_fallthru
          _
        // Predicated region
        $region73: #{tpu_custom_call.1} parent=11 // pred_check
          %p570 = pneg %p424
        $region74: #{tpu_custom_call.1} parent=11 // pred_check_branch
          %572 = sbr.rel (%p570) target = $region76
        $region75: #{tpu_custom_call.1} parent=11 // pred_region
          _
        $region76: #{tpu_custom_call.1} parent=11 // pred_fallthru
          _
      $region12: #{tpu_custom_call.1} parent=5 // pred_fallthru
        _
      %p573 = scmp.lt.s32.totalorder %s36, 2
      // Predicated region
      $region77: #{tpu_custom_call.1} parent=5 // pred_check
        %p574 = pneg %p573
      $region78: #{tpu_custom_call.1} parent=5 // pred_check_branch
        %576 = sbr.rel (%p574) target = $region80
      $region79: #{tpu_custom_call.1} parent=5 // pred_region
        // Predicated region
        $region81: #{tpu_custom_call.1} parent=79 // pred_check
          %p577 = pneg %p56
        $region82: #{tpu_custom_call.1} parent=79 // pred_check_branch
          %579 = sbr.rel (%p577) target = $region84
        $region83: #{tpu_custom_call.1} parent=79 // pred_region
          %s580 = sand.u32 %s46, 1
          %s581 = scalar_lea.sflag [#allocation3], %s580
          %s582 = sand.u32 %s46, 1
          %s583 = smul.addr %s582, 32
          %s584 = scalar_lea.vmem [#allocation2], %s583
          %s585 = smul.u32 2, %s36
          %s587 = ssub.s32 512, 512
          %588 = vsyncadd %s581, %s587
          %s589 = smul.addr %s585, 2
          %s590 = smul.addr %s589, 128
          %s591 = scalar_lea.hbm %s0, %s590
          %s592 = sshll.u32 %s584, 4
          %s593 = int_to_ptr.vmem [resolvable:$true] %s592
          %598 = dma.hbm_to_vmem [thread:$0]  %s591, 512, %s593, %s581, 128, 128, 8
        $region84: #{tpu_custom_call.1} parent=79 // pred_fallthru
          _
        // Predicated region
        $region85: #{tpu_custom_call.1} parent=79 // pred_check
          %p599 = pneg %p82
        $region86: #{tpu_custom_call.1} parent=79 // pred_check_branch
          %601 = sbr.rel (%p599) target = $region88
        $region87: #{tpu_custom_call.1} parent=79 // pred_region
          %s602 = sand.u32 %s36, 1
          %s603 = scalar_lea.sflag [#allocation6], %s602
          %s604 = sand.u32 %s72, 1
          %s605 = smul.addr %s604, 48
          %s606 = scalar_lea.vmem [#allocation5], %s605
          %s607 = smul.u32 2, %s36
          %s609 = ssub.s32 768, 768
          %610 = vsyncadd %s603, %s609
          %s611 = smul.addr %s607, 3
          %s612 = smul.addr %s611, 128
          %s613 = scalar_lea.hbm %s1, %s612
          %s614 = sshll.u32 %s606, 4
          %s615 = int_to_ptr.vmem [resolvable:$true] %s614
          %620 = dma.hbm_to_vmem [thread:$0]  %s613, 768, %s615, %s603, 128, 128, 8
        $region88: #{tpu_custom_call.1} parent=79 // pred_fallthru
          _
      $region80: #{tpu_custom_call.1} parent=5 // pred_fallthru
        _
      %p621 = scmp.le.s32.totalorder 1, %s36
      %p622 = scmp.lt.s32.totalorder %s36, 3
      %p623 = pnand %p621, %p622
      %p624 = pneg %p623
      // Predicated region
      $region89: #{tpu_custom_call.1} parent=5 // pred_check
        _
      $region90: #{tpu_custom_call.1} parent=5 // pred_check_branch
        %626 = sbr.rel (%p623) target = $region92
      $region91: #{tpu_custom_call.1} parent=5 // pred_region
        %s627 = ssub.s32 %s36, 1
        %s628 = sand.u32 %s49, 1
        %s629 = scalar_lea.sflag [#allocation3], %s628
        %s630 = sand.u32 %s49, 1
        %s631 = smul.addr %s630, 32
        %s632 = scalar_lea.vmem [#allocation2], %s631
        // Predicated region
        $region93: #{tpu_custom_call.1} parent=91 // pred_check
          %p633 = pneg %p62
        $region94: #{tpu_custom_call.1} parent=91 // pred_check_branch
          %635 = sbr.rel (%p633) target = $region96
        $region95: #{tpu_custom_call.1} parent=91 // pred_region
          %636 = dma.done %s629, 512
        $region96: #{tpu_custom_call.1} parent=91 // pred_fallthru
          _
        %s637 = sand.u32 %s41, 1
        %s638 = scalar_lea.sflag [#allocation6], %s637
        %s639 = sand.u32 %s75, 1
        %s640 = smul.addr %s639, 48
        %s641 = scalar_lea.vmem [#allocation5], %s640
        // Predicated region
        $region97: #{tpu_custom_call.1} parent=91 // pred_check
          %p642 = pneg %p88
        $region98: #{tpu_custom_call.1} parent=91 // pred_check_branch
          %644 = sbr.rel (%p642) target = $region100
        $region99: #{tpu_custom_call.1} parent=91 // pred_region
          %645 = dma.done %s638, 768
        $region100: #{tpu_custom_call.1} parent=91 // pred_fallthru
          _
        // Predicated region
        $region101: #{tpu_custom_call.1} parent=91 // pred_check
          %p646 = pneg %p109
        $region102: #{tpu_custom_call.1} parent=91 // pred_check_branch
          %648 = sbr.rel (%p646) target = $region104
        $region103: #{tpu_custom_call.1} parent=91 // pred_region
          %649 = dma.done [#allocation6], 2048
        $region104: #{tpu_custom_call.1} parent=91 // pred_fallthru
          _
        // Predicated region
        $region105: #{tpu_custom_call.1} parent=91 // pred_check
          %p650 = pneg %p130
        $region106: #{tpu_custom_call.1} parent=91 // pred_check_branch
          %652 = sbr.rel (%p650) target = $region108
        $region107: #{tpu_custom_call.1} parent=91 // pred_region
          %653 = dma.done [#allocation9], 2048
        $region108: #{tpu_custom_call.1} parent=91 // pred_fallthru
          _
        // Predicated region
        $region109: #{tpu_custom_call.1} parent=91 // pred_check
          %p654 = pneg %p151
        $region110: #{tpu_custom_call.1} parent=91 // pred_check_branch
          %656 = sbr.rel (%p654) target = $region112
        $region111: #{tpu_custom_call.1} parent=91 // pred_region
          %657 = dma.done [#allocation9], 2048
        $region112: #{tpu_custom_call.1} parent=91 // pred_fallthru
          _
        // Predicated region
        $region113: #{tpu_custom_call.1} parent=91 // pred_check
          %p658 = pneg %p235
        $region114: #{tpu_custom_call.1} parent=91 // pred_check_branch
          %660 = sbr.rel (%p658) target = $region116
        $region115: #{tpu_custom_call.1} parent=91 // pred_region
          %661 = dma.done [#allocation12], 2048
        $region116: #{tpu_custom_call.1} parent=91 // pred_fallthru
          _
        // Predicated region
        $region117: #{tpu_custom_call.1} parent=91 // pred_check
          %p662 = pneg %p277
        $region118: #{tpu_custom_call.1} parent=91 // pred_check_branch
          %664 = sbr.rel (%p662) target = $region120
        $region119: #{tpu_custom_call.1} parent=91 // pred_region
          %665 = dma.done [#allocation12], 4096
        $region120: #{tpu_custom_call.1} parent=91 // pred_fallthru
          _
        // Predicated region
        $region121: #{tpu_custom_call.1} parent=91 // pred_check
          %p666 = pneg %p319
        $region122: #{tpu_custom_call.1} parent=91 // pred_check_branch
          %668 = sbr.rel (%p666) target = $region124
        $region123: #{tpu_custom_call.1} parent=91 // pred_region
          %669 = dma.done [#allocation15], 4096
        $region124: #{tpu_custom_call.1} parent=91 // pred_fallthru
          _
        %s670 = sand.u32 %s49, 1
        %s671 = scalar_lea.sflag [#allocation3], %s670
        %s672 = sand.u32 %s49, 1
        %s673 = smul.addr %s672, 32
        %s674 = scalar_lea.vmem [#allocation2], %s673
        %p675 = pneg %p62
        %p676 = pneg %p59
        %s677 = sand.u32 %s41, 1
        %s678 = scalar_lea.sflag [#allocation6], %s677
        %s679 = sand.u32 %s75, 1
        %s680 = smul.addr %s679, 48
        %s681 = scalar_lea.vmem [#allocation5], %s680
        %p682 = pneg %p88
        %p683 = pneg %p85
        %p684 = pneg %p109
        %p685 = pneg %p106
        %p686 = pneg %p130
        %p687 = pneg %p127
        %p688 = pneg %p151
        %p689 = pneg %p148
        %p690 = pneg %p172
        %p691 = pneg %p169
        %p692 = pneg %p193
        %p693 = pneg %p190
        %p694 = pneg %p214
        %p695 = pneg %p211
        %p696 = pneg %p235
        %p697 = pneg %p232
        %p698 = pneg %p256
        %p699 = pneg %p253
        %p700 = pneg %p277
        %p701 = pneg %p274
        %p702 = pneg %p298
        %p703 = pneg %p295
        %p704 = pneg %p319
        %p705 = pneg %p316
        %p706 = pneg %p340
        %p707 = pneg %p337
        %p708 = pneg %p361
        %p709 = pneg %p358
        %p710 = pneg %p382
        %p711 = pneg %p379
        %p712 = pneg %p403
        %p713 = pneg %p400
        %p714 = pneg %p424
        %p715 = pneg %p421
        %p716 = pneg %p450
        %p717 = pneg %p447
        %s718 = sand.u32 %s437, 1
        %s719 = scalar_lea.sflag [#allocation4], %s718
        %s720 = sand.u32 %s437, 1
        %s721 = smul.addr %s720, 32
        %s722 = scalar_lea.vmem [#allocation16], %s721
        %s723 = smul.u32 2, %s41
        %s724 = smul.u32 2, %s41
        %s725 = smul.u32 2, %s41
        %v726 = vld [vmem:[%s632] sm:$0xff]
        %v727 = vld [vmem:[%s632 + $0x8] sm:$0xff]
        %v728 = vld [vmem:[%s632 + $0x10] sm:$0xff]
        %v729 = vld [vmem:[%s632 + $0x18] sm:$0xff]
        %v730 = vld [vmem:[%s641] sm:$0xff]
        %v731 = vld [vmem:[%s641 + $0x8] sm:$0xff]
        %v732 = vld [vmem:[%s641 + $0x10] sm:$0xff]
        %v733 = vld [vmem:[%s641 + $0x18] sm:$0xff]
        %v734 = vld [vmem:[%s641 + $0x20] sm:$0xff]
        %v735 = vld [vmem:[%s641 + $0x28] sm:$0xff]
        %v736 = vld [vmem:[#allocation7] sm:$0xff]
        %v737 = vld [vmem:[#allocation7 + $0x8] sm:$0xff]
        %v738 = vld [vmem:[#allocation7 + $0x10] sm:$0xff]
        %v739 = vld [vmem:[#allocation7 + $0x18] sm:$0xff]
        %v740 = vld [vmem:[#allocation7 + $0x20] sm:$0xff]
        %v741 = vld [vmem:[#allocation7 + $0x28] sm:$0xff]
        %v742 = vld [vmem:[#allocation7 + $0x30] sm:$0xff]
        %v743 = vld [vmem:[#allocation7 + $0x38] sm:$0xff]
        %v744 = vld [vmem:[#allocation7 + $0x40] sm:$0xff]
        %v745 = vld [vmem:[#allocation7 + $0x48] sm:$0xff]
        %v746 = vld [vmem:[#allocation7 + $0x50] sm:$0xff]
        %v747 = vld [vmem:[#allocation7 + $0x58] sm:$0xff]
        %v748 = vld [vmem:[#allocation7 + $0x60] sm:$0xff]
        %v749 = vld [vmem:[#allocation7 + $0x68] sm:$0xff]
        %v750 = vld [vmem:[#allocation7 + $0x70] sm:$0xff]
        %v751 = vld [vmem:[#allocation7 + $0x78] sm:$0xff]
        %v752 = vld [vmem:[%s5] sm:$0x1]
        %v754 = vlaneseq
        %v755 = vshrl.u32 %v754, 7
        %v756 = vsub.s32 0, %v755
        %v757 = vrot.slane %v752, %v756
        %759 = vmatprep.subr.mxu0 0.0
        %760 = vmatpush1.msra.mxu0 %v736
        %761 = vmatprep.subr.mxu0 0.0
        %762 = vmatpush1.msra.mxu0 %v737
        %763 = vmatprep.subr.mxu0 0.0
        %764 = vmatpush1.msra.mxu0 %v738
        %765 = vmatprep.subr.mxu0 0.0
        %766 = vmatpush1.msra.mxu0 %v739
        %767 = vmatprep.subr.mxu0 0.0
        %768 = vmatpush1.msra.mxu0 %v740
        %769 = vmatprep.subr.mxu0 0.0
        %770 = vmatpush1.msra.mxu0 %v741
        %771 = vmatprep.subr.mxu0 0.0
        %772 = vmatpush1.msra.mxu0 %v742
        %773 = vmatprep.subr.mxu0 0.0
        %774 = vmatpush1.msra.mxu0 %v743
        %775 = vmatprep.subr.mxu0 0.0
        %776 = vmatpush1.msra.mxu0 %v744
        %777 = vmatprep.subr.mxu0 0.0
        %778 = vmatpush1.msra.mxu0 %v745
        %779 = vmatprep.subr.mxu0 0.0
        %780 = vmatpush1.msra.mxu0 %v746
        %781 = vmatprep.subr.mxu0 0.0
        %782 = vmatpush1.msra.mxu0 %v747
        %783 = vmatprep.subr.mxu0 0.0
        %784 = vmatpush1.msra.mxu0 %v748
        %785 = vmatprep.subr.mxu0 0.0
        %786 = vmatpush1.msra.mxu0 %v749
        %787 = vmatprep.subr.mxu0 0.0
        %788 = vmatpush1.msra.mxu0 %v750
        %789 = vmatprep.subr.mxu0 0.0
        %790 = vmatpush1.msra.mxu0 %v751
        %791 = vmatprep.subr.mxu0 0.0
        %792 = vmatpush1.msra.mxu0 0.0
        %793 = vmatprep.subr.mxu0 0.0
        %794 = vmatpush1.msra.mxu0 0.0
        %795 = vmatprep.subr.mxu0 0.0
        %796 = vmatpush1.msra.mxu0 0.0
        %797 = vmatprep.subr.mxu0 0.0
        %798 = vmatpush1.msra.mxu0 0.0
        %799 = vmatprep.subr.mxu0 0.0
        %800 = vmatpush1.msra.mxu0 0.0
        %801 = vmatprep.subr.mxu0 0.0
        %802 = vmatpush1.msra.mxu0 0.0
        %803 = vmatprep.subr.mxu0 0.0
        %804 = vmatpush1.msra.mxu0 0.0
        %805 = vmatprep.subr.mxu0 0.0
        %806 = vmatpush1.msra.mxu0 0.0
        %807 = vmatprep.subr.mxu0 0.0
        %808 = vmatpush1.msra.mxu0 0.0
        %809 = vmatprep.subr.mxu0 0.0
        %810 = vmatpush1.msra.mxu0 0.0
        %811 = vmatprep.subr.mxu0 0.0
        %812 = vmatpush1.msra.mxu0 0.0
        %813 = vmatprep.subr.mxu0 0.0
        %814 = vmatpush1.msra.mxu0 0.0
        %815 = vmatprep.subr.mxu0 0.0
        %816 = vmatpush1.msra.mxu0 0.0
        %817 = vmatprep.subr.mxu0 0.0
        %818 = vmatpush1.msra.mxu0 0.0
        %819 = vmatprep.subr.mxu0 0.0
        %820 = vmatpush1.msra.mxu0 0.0
        %821 = vmatprep.subr.mxu0 0.0
        %822 = vmatpush1.msra.mxu0 0.0
        %823 = vmatprep.mubr.f32.mxu0 0.0
        %824 = vmatmul.mubr.f32.gmra.mrb[0].mxu0 %v726
        %v825 = vpop.f32.mrb[0].mxu0
        %v826 = vadd.f32 %v757, %v825
        %v827 = vpop.f32.mrb[0].mxu0
        %828 = vmatprep.mubr.f32.mxu0 0.0
        %829 = vmatmul.mubr.f32.gmra.mrb[0].mxu0 %v727
        %v830 = vpop.f32.mrb[0].mxu0
        %v831 = vadd.f32 %v757, %v830
        %v832 = vpop.f32.mrb[0].mxu0
        %833 = vmatprep.mubr.f32.mxu0 0.0
        %834 = vmatmul.mubr.f32.gmra.mrb[0].mxu0 %v728
        %v835 = vpop.f32.mrb[0].mxu0
        %v836 = vadd.f32 %v757, %v835
        %v837 = vpop.f32.mrb[0].mxu0
        %838 = vmatprep.mubr.f32.mxu0 0.0
        %839 = vmatmul.mubr.f32.gmra.mrb[0].mxu0 %v729
        %v840 = vpop.f32.mrb[0].mxu0
        %v841 = vadd.f32 %v757, %v840
        %v842 = vpop.f32.mrb[0].mxu0
        %843 = vdwg.mxu0
        %v844 = vld [vmem:[#allocation8] sm:$0xff]
        %v845 = vld [vmem:[#allocation8 + $0x8] sm:$0xff]
        %v846 = vld [vmem:[#allocation8 + $0x10] sm:$0xff]
        %v847 = vld [vmem:[#allocation8 + $0x18] sm:$0xff]
        %v848 = vld [vmem:[#allocation8 + $0x20] sm:$0xff]
        %v849 = vld [vmem:[#allocation8 + $0x28] sm:$0xff]
        %v850 = vld [vmem:[#allocation8 + $0x30] sm:$0xff]
        %v851 = vld [vmem:[#allocation8 + $0x38] sm:$0xff]
        %v852 = vld [vmem:[#allocation8 + $0x40] sm:$0xff]
        %v853 = vld [vmem:[#allocation8 + $0x48] sm:$0xff]
        %v854 = vld [vmem:[#allocation8 + $0x50] sm:$0xff]
        %v855 = vld [vmem:[#allocation8 + $0x58] sm:$0xff]
        %v856 = vld [vmem:[#allocation8 + $0x60] sm:$0xff]
        %v857 = vld [vmem:[#allocation8 + $0x68] sm:$0xff]
        %v858 = vld [vmem:[#allocation8 + $0x70] sm:$0xff]
        %v859 = vld [vmem:[#allocation8 + $0x78] sm:$0xff]
        %v860 = vld [vmem:[%s6] sm:$0x1]
        %v862 = vlaneseq
        %v863 = vshrl.u32 %v862, 7
        %v864 = vsub.s32 0, %v863
        %v865 = vrot.slane %v860, %v864
        %867 = vmatprep.subr.mxu0 0.0
        %868 = vmatpush1.msra.mxu0 %v844
        %869 = vmatprep.subr.mxu0 0.0
        %870 = vmatpush1.msra.mxu0 %v845
        %871 = vmatprep.subr.mxu0 0.0
        %872 = vmatpush1.msra.mxu0 %v846
        %873 = vmatprep.subr.mxu0 0.0
        %874 = vmatpush1.msra.mxu0 %v847
        %875 = vmatprep.subr.mxu0 0.0
        %876 = vmatpush1.msra.mxu0 %v848
        %877 = vmatprep.subr.mxu0 0.0
        %878 = vmatpush1.msra.mxu0 %v849
        %879 = vmatprep.subr.mxu0 0.0
        %880 = vmatpush1.msra.mxu0 %v850
        %881 = vmatprep.subr.mxu0 0.0
        %882 = vmatpush1.msra.mxu0 %v851
        %883 = vmatprep.subr.mxu0 0.0
        %884 = vmatpush1.msra.mxu0 %v852
        %885 = vmatprep.subr.mxu0 0.0
        %886 = vmatpush1.msra.mxu0 %v853
        %887 = vmatprep.subr.mxu0 0.0
        %888 = vmatpush1.msra.mxu0 %v854
        %889 = vmatprep.subr.mxu0 0.0
        %890 = vmatpush1.msra.mxu0 %v855
        %891 = vmatprep.subr.mxu0 0.0
        %892 = vmatpush1.msra.mxu0 %v856
        %893 = vmatprep.subr.mxu0 0.0
        %894 = vmatpush1.msra.mxu0 %v857
        %895 = vmatprep.subr.mxu0 0.0
        %896 = vmatpush1.msra.mxu0 %v858
        %897 = vmatprep.subr.mxu0 0.0
        %898 = vmatpush1.msra.mxu0 %v859
        %899 = vmatprep.subr.mxu0 0.0
        %900 = vmatpush1.msra.mxu0 0.0
        %901 = vmatprep.subr.mxu0 0.0
        %902 = vmatpush1.msra.mxu0 0.0
        %903 = vmatprep.subr.mxu0 0.0
        %904 = vmatpush1.msra.mxu0 0.0
        %905 = vmatprep.subr.mxu0 0.0
        %906 = vmatpush1.msra.mxu0 0.0
        %907 = vmatprep.subr.mxu0 0.0
        %908 = vmatpush1.msra.mxu0 0.0
        %909 = vmatprep.subr.mxu0 0.0
        %910 = vmatpush1.msra.mxu0 0.0
        %911 = vmatprep.subr.mxu0 0.0
        %912 = vmatpush1.msra.mxu0 0.0
        %913 = vmatprep.subr.mxu0 0.0
        %914 = vmatpush1.msra.mxu0 0.0
        %915 = vmatprep.subr.mxu0 0.0
        %916 = vmatpush1.msra.mxu0 0.0
        %917 = vmatprep.subr.mxu0 0.0
        %918 = vmatpush1.msra.mxu0 0.0
        %919 = vmatprep.subr.mxu0 0.0
        %920 = vmatpush1.msra.mxu0 0.0
        %921 = vmatprep.subr.mxu0 0.0
        %922 = vmatpush1.msra.mxu0 0.0
        %923 = vmatprep.subr.mxu0 0.0
        %924 = vmatpush1.msra.mxu0 0.0
        %925 = vmatprep.subr.mxu0 0.0
        %926 = vmatpush1.msra.mxu0 0.0
        %927 = vmatprep.subr.mxu0 0.0
        %928 = vmatpush1.msra.mxu0 0.0
        %929 = vmatprep.subr.mxu0 0.0
        %930 = vmatpush1.msra.mxu0 0.0
        %931 = vmatprep.mubr.f32.mxu0 0.0
        %932 = vmatmul.mubr.f32.gmra.mrb[0].mxu0 %v730
        %v933 = vpop.f32.mrb[0].mxu0
        %v934 = vadd.f32 %v865, %v933
        %v935 = vpop.f32.mrb[0].mxu0
        %936 = vmatprep.mubr.f32.mxu0 0.0
        %937 = vmatmul.mubr.f32.gmra.mrb[0].mxu0 %v731
        %v938 = vpop.f32.mrb[0].mxu0
        %v939 = vadd.f32 %v865, %v938
        %v940 = vpop.f32.mrb[0].mxu0
        %941 = vmatprep.mubr.f32.mxu0 0.0
        %942 = vmatmul.mubr.f32.gmra.mrb[0].mxu0 %v732
        %v943 = vpop.f32.mrb[0].mxu0
        %v944 = vadd.f32 %v865, %v943
        %v945 = vpop.f32.mrb[0].mxu0
        %946 = vmatprep.mubr.f32.mxu0 0.0
        %947 = vmatmul.mubr.f32.gmra.mrb[0].mxu0 %v733
        %v948 = vpop.f32.mrb[0].mxu0
        %v949 = vadd.f32 %v865, %v948
        %v950 = vpop.f32.mrb[0].mxu0
        %951 = vmatprep.mubr.f32.mxu0 0.0
        %952 = vmatmul.mubr.f32.gmra.mrb[0].mxu0 %v734
        %v953 = vpop.f32.mrb[0].mxu0
        %v954 = vadd.f32 %v865, %v953
        %v955 = vpop.f32.mrb[0].mxu0
        %956 = vmatprep.mubr.f32.mxu0 0.0
        %957 = vmatmul.mubr.f32.gmra.mrb[0].mxu0 %v735
        %v958 = vpop.f32.mrb[0].mxu0
        %v959 = vadd.f32 %v865, %v958
        %v960 = vpop.f32.mrb[0].mxu0
        %961 = vdwg.mxu0
        %v962 = vld [vmem:[#allocation10] sm:$0xff]
        %v963 = vld [vmem:[#allocation10 + $0x8] sm:$0xff]
        %v964 = vld [vmem:[#allocation10 + $0x10] sm:$0xff]
        %v965 = vld [vmem:[#allocation10 + $0x18] sm:$0xff]
        %v966 = vld [vmem:[#allocation10 + $0x20] sm:$0xff]
        %v967 = vld [vmem:[#allocation10 + $0x28] sm:$0xff]
        %v968 = vld [vmem:[#allocation10 + $0x30] sm:$0xff]
        %v969 = vld [vmem:[#allocation10 + $0x38] sm:$0xff]
        %v970 = vld [vmem:[#allocation10 + $0x40] sm:$0xff]
        %v971 = vld [vmem:[#allocation10 + $0x48] sm:$0xff]
        %v972 = vld [vmem:[#allocation10 + $0x50] sm:$0xff]
        %v973 = vld [vmem:[#allocation10 + $0x58] sm:$0xff]
        %v974 = vld [vmem:[#allocation10 + $0x60] sm:$0xff]
        %v975 = vld [vmem:[#allocation10 + $0x68] sm:$0xff]
        %v976 = vld [vmem:[#allocation10 + $0x70] sm:$0xff]
        %v977 = vld [vmem:[#allocation10 + $0x78] sm:$0xff]
        %v978 = vld [vmem:[%s7] sm:$0x1]
        %v980 = vlaneseq
        %v981 = vshrl.u32 %v980, 7
        %v982 = vsub.s32 0, %v981
        %v983 = vrot.slane %v978, %v982
        %985 = vmatprep.subr.mxu0 0.0
        %986 = vmatpush1.msra.mxu0 %v962
        %987 = vmatprep.subr.mxu0 0.0
        %988 = vmatpush1.msra.mxu0 %v963
        %989 = vmatprep.subr.mxu0 0.0
        %990 = vmatpush1.msra.mxu0 %v964
        %991 = vmatprep.subr.mxu0 0.0
        %992 = vmatpush1.msra.mxu0 %v965
        %993 = vmatprep.subr.mxu0 0.0
        %994 = vmatpush1.msra.mxu0 %v966
        %995 = vmatprep.subr.mxu0 0.0
        %996 = vmatpush1.msra.mxu0 %v967
        %997 = vmatprep.subr.mxu0 0.0
        %998 = vmatpush1.msra.mxu0 %v968
        %999 = vmatprep.subr.mxu0 0.0
        %1000 = vmatpush1.msra.mxu0 %v969
        %1001 = vmatprep.subr.mxu0 0.0
        %1002 = vmatpush1.msra.mxu0 %v970
        %1003 = vmatprep.subr.mxu0 0.0
        %1004 = vmatpush1.msra.mxu0 %v971
        %1005 = vmatprep.subr.mxu0 0.0
        %1006 = vmatpush1.msra.mxu0 %v972
        %1007 = vmatprep.subr.mxu0 0.0
        %1008 = vmatpush1.msra.mxu0 %v973
        %1009 = vmatprep.subr.mxu0 0.0
        %1010 = vmatpush1.msra.mxu0 %v974
        %1011 = vmatprep.subr.mxu0 0.0
        %1012 = vmatpush1.msra.mxu0 %v975
        %1013 = vmatprep.subr.mxu0 0.0
        %1014 = vmatpush1.msra.mxu0 %v976
        %1015 = vmatprep.subr.mxu0 0.0
        %1016 = vmatpush1.msra.mxu0 %v977
        %1017 = vmatprep.subr.mxu0 0.0
        %1018 = vmatpush1.msra.mxu0 0.0
        %1019 = vmatprep.subr.mxu0 0.0
        %1020 = vmatpush1.msra.mxu0 0.0
        %1021 = vmatprep.subr.mxu0 0.0
        %1022 = vmatpush1.msra.mxu0 0.0
        %1023 = vmatprep.subr.mxu0 0.0
        %1024 = vmatpush1.msra.mxu0 0.0
        %1025 = vmatprep.subr.mxu0 0.0
        %1026 = vmatpush1.msra.mxu0 0.0
        %1027 = vmatprep.subr.mxu0 0.0
        %1028 = vmatpush1.msra.mxu0 0.0
        %1029 = vmatprep.subr.mxu0 0.0
        %1030 = vmatpush1.msra.mxu0 0.0
        %1031 = vmatprep.subr.mxu0 0.0
        %1032 = vmatpush1.msra.mxu0 0.0
        %1033 = vmatprep.subr.mxu0 0.0
        %1034 = vmatpush1.msra.mxu0 0.0
        %1035 = vmatprep.subr.mxu0 0.0
        %1036 = vmatpush1.msra.mxu0 0.0
        %1037 = vmatprep.subr.mxu0 0.0
        %1038 = vmatpush1.msra.mxu0 0.0
        %1039 = vmatprep.subr.mxu0 0.0
        %1040 = vmatpush1.msra.mxu0 0.0
        %1041 = vmatprep.subr.mxu0 0.0
        %1042 = vmatpush1.msra.mxu0 0.0
        %1043 = vmatprep.subr.mxu0 0.0
        %1044 = vmatpush1.msra.mxu0 0.0
        %1045 = vmatprep.subr.mxu0 0.0
        %1046 = vmatpush1.msra.mxu0 0.0
        %1047 = vmatprep.subr.mxu0 0.0
        %1048 = vmatpush1.msra.mxu0 0.0
        %1049 = vmatprep.mubr.f32.mxu0 0.0
        %1050 = vmatmul.mubr.f32.gmra.mrb[0].mxu0 %v730
        %v1051 = vpop.f32.mrb[0].mxu0
        %v1052 = vadd.f32 %v983, %v1051
        %v1053 = vpop.f32.mrb[0].mxu0
        %1054 = vmatprep.mubr.f32.mxu0 0.0
        %1055 = vmatmul.mubr.f32.gmra.mrb[0].mxu0 %v731
        %v1056 = vpop.f32.mrb[0].mxu0
        %v1057 = vadd.f32 %v983, %v1056
        %v1058 = vpop.f32.mrb[0].mxu0
        %1059 = vmatprep.mubr.f32.mxu0 0.0
        %1060 = vmatmul.mubr.f32.gmra.mrb[0].mxu0 %v732
        %v1061 = vpop.f32.mrb[0].mxu0
        %v1062 = vadd.f32 %v983, %v1061
        %v1063 = vpop.f32.mrb[0].mxu0
        %1064 = vmatprep.mubr.f32.mxu0 0.0
        %1065 = vmatmul.mubr.f32.gmra.mrb[0].mxu0 %v733
        %v1066 = vpop.f32.mrb[0].mxu0
        %v1067 = vadd.f32 %v983, %v1066
        %v1068 = vpop.f32.mrb[0].mxu0
        %1069 = vmatprep.mubr.f32.mxu0 0.0
        %1070 = vmatmul.mubr.f32.gmra.mrb[0].mxu0 %v734
        %v1071 = vpop.f32.mrb[0].mxu0
        %v1072 = vadd.f32 %v983, %v1071
        %v1073 = vpop.f32.mrb[0].mxu0
        %1074 = vmatprep.mubr.f32.mxu0 0.0
        %1075 = vmatmul.mubr.f32.gmra.mrb[0].mxu0 %v735
        %v1076 = vpop.f32.mrb[0].mxu0
        %v1077 = vadd.f32 %v983, %v1076
        %v1078 = vpop.f32.mrb[0].mxu0
        %1079 = vdwg.mxu0
        %vm1080 = vcmask 261120
        %v1082 = vsel %vm1080, %v826, 0
        %v1085 = vsel %vm1080, %v831, 0
        %v1088 = vsel %vm1080, %v934, 0
        %v1091 = vsel %vm1080, %v939, 0
        %v1094 = vsel %vm1080, %v944, 0
        %1096 = vmatprep.subr.mxu0 0.0
        %1097 = vmatpush1.xpose.msra.mxu0 %v1088
        %1098 = vmatprep.subr.mxu0 0.0
        %1099 = vmatpush1.xpose.msra.mxu0 %v1091
        %1100 = vmatprep.subr.mxu0 0.0
        %1101 = vmatpush1.xpose.msra.mxu0 %v1094
        %1102 = vmatprep.subr.mxu0 0.0
        %1103 = vmatpush1.xpose.msra.mxu0 0.0
        %1104 = vmatprep.subr.mxu0 0.0
        %1105 = vmatpush1.xpose.msra.mxu0 0.0
        %1106 = vmatprep.subr.mxu0 0.0
        %1107 = vmatpush1.xpose.msra.mxu0 0.0
        %1108 = vmatprep.subr.mxu0 0.0
        %1109 = vmatpush1.xpose.msra.mxu0 0.0
        %1110 = vmatprep.subr.mxu0 0.0
        %1111 = vmatpush1.xpose.msra.mxu0 0.0
        %1112 = vmatprep.subr.mxu0 0.0
        %1113 = vmatpush1.xpose.msra.mxu0 0.0
        %1114 = vmatprep.subr.mxu0 0.0
        %1115 = vmatpush1.xpose.msra.mxu0 0.0
        %1116 = vmatprep.subr.mxu0 0.0
        %1117 = vmatpush1.xpose.msra.mxu0 0.0
        %1118 = vmatprep.subr.mxu0 0.0
        %1119 = vmatpush1.xpose.msra.mxu0 0.0
        %1120 = vmatprep.subr.mxu0 0.0
        %1121 = vmatpush1.xpose.msra.mxu0 0.0
        %1122 = vmatprep.subr.mxu0 0.0
        %1123 = vmatpush1.xpose.msra.mxu0 0.0
        %1124 = vmatprep.subr.mxu0 0.0
        %1125 = vmatpush1.xpose.msra.mxu0 0.0
        %1126 = vmatprep.subr.mxu0 0.0
        %1127 = vmatpush1.xpose.msra.mxu0 0.0
        %1128 = vmatprep.subr.mxu0 0.0
        %1129 = vmatpush1.xpose.msra.mxu0 0.0
        %1130 = vmatprep.subr.mxu0 0.0
        %1131 = vmatpush1.xpose.msra.mxu0 0.0
        %1132 = vmatprep.subr.mxu0 0.0
        %1133 = vmatpush1.xpose.msra.mxu0 0.0
        %1134 = vmatprep.subr.mxu0 0.0
        %1135 = vmatpush1.xpose.msra.mxu0 0.0
        %1136 = vmatprep.subr.mxu0 0.0
        %1137 = vmatpush1.xpose.msra.mxu0 0.0
        %1138 = vmatprep.subr.mxu0 0.0
        %1139 = vmatpush1.xpose.msra.mxu0 0.0
        %1140 = vmatprep.subr.mxu0 0.0
        %1141 = vmatpush1.xpose.msra.mxu0 0.0
        %1142 = vmatprep.subr.mxu0 0.0
        %1143 = vmatpush1.xpose.msra.mxu0 0.0
        %1144 = vmatprep.subr.mxu0 0.0
        %1145 = vmatpush1.xpose.msra.mxu0 0.0
        %1146 = vmatprep.subr.mxu0 0.0
        %1147 = vmatpush1.xpose.msra.mxu0 0.0
        %1148 = vmatprep.subr.mxu0 0.0
        %1149 = vmatpush1.xpose.msra.mxu0 0.0
        %1150 = vmatprep.subr.mxu0 0.0
        %1151 = vmatpush1.xpose.msra.mxu0 0.0
        %1152 = vmatprep.subr.mxu0 0.0
        %1153 = vmatpush1.xpose.msra.mxu0 0.0
        %1154 = vmatprep.subr.mxu0 0.0
        %1155 = vmatpush1.xpose.msra.mxu0 0.0
        %1156 = vmatprep.subr.mxu0 0.0
        %1157 = vmatpush1.xpose.msra.mxu0 0.0
        %1158 = vmatprep.subr.mxu0 0.0
        %1159 = vmatpush1.xpose.msra.mxu0 0.0
        %1160 = vmatprep.mubr.f32.mxu0 0.0
        %1161 = vmatmul.mubr.f32.gmra.mrb[0].mxu0 %v1082
        %v1162 = vpop.f32.mrb[0].mxu0
        %v1163 = vadd.f32 0.0, %v1162
        %v1164 = vpop.f32.mrb[0].mxu0
        %1165 = vmatprep.mubr.f32.mxu0 0.0
        %1166 = vmatmul.mubr.f32.gmra.mrb[0].mxu0 %v1085
        %v1167 = vpop.f32.mrb[0].mxu0
        %v1168 = vadd.f32 0.0, %v1167
        %v1169 = vpop.f32.mrb[0].mxu0
        %1170 = vdwg.mxu0
        %v1172 = vsel %vm1080, %v836, 0
        %v1175 = vsel %vm1080, %v841, 0
        %v1178 = vsel %vm1080, %v949, 0
        %v1181 = vsel %vm1080, %v954, 0
        %v1184 = vsel %vm1080, %v959, 0
        %1186 = vmatprep.subr.mxu0 0.0
        %1187 = vmatpush1.xpose.msra.mxu0 %v1178
        %1188 = vmatprep.subr.mxu0 0.0
        %1189 = vmatpush1.xpose.msra.mxu0 %v1181
        %1190 = vmatprep.subr.mxu0 0.0
        %1191 = vmatpush1.xpose.msra.mxu0 %v1184
        %1192 = vmatprep.subr.mxu0 0.0
        %1193 = vmatpush1.xpose.msra.mxu0 0.0
        %1194 = vmatprep.subr.mxu0 0.0
        %1195 = vmatpush1.xpose.msra.mxu0 0.0
        %1196 = vmatprep.subr.mxu0 0.0
        %1197 = vmatpush1.xpose.msra.mxu0 0.0
        %1198 = vmatprep.subr.mxu0 0.0
        %1199 = vmatpush1.xpose.msra.mxu0 0.0
        %1200 = vmatprep.subr.mxu0 0.0
        %1201 = vmatpush1.xpose.msra.mxu0 0.0
        %1202 = vmatprep.subr.mxu0 0.0
        %1203 = vmatpush1.xpose.msra.mxu0 0.0
        %1204 = vmatprep.subr.mxu0 0.0
        %1205 = vmatpush1.xpose.msra.mxu0 0.0
        %1206 = vmatprep.subr.mxu0 0.0
        %1207 = vmatpush1.xpose.msra.mxu0 0.0
        %1208 = vmatprep.subr.mxu0 0.0
        %1209 = vmatpush1.xpose.msra.mxu0 0.0
        %1210 = vmatprep.subr.mxu0 0.0
        %1211 = vmatpush1.xpose.msra.mxu0 0.0
        %1212 = vmatprep.subr.mxu0 0.0
        %1213 = vmatpush1.xpose.msra.mxu0 0.0
        %1214 = vmatprep.subr.mxu0 0.0
        %1215 = vmatpush1.xpose.msra.mxu0 0.0
        %1216 = vmatprep.subr.mxu0 0.0
        %1217 = vmatpush1.xpose.msra.mxu0 0.0
        %1218 = vmatprep.subr.mxu0 0.0
        %1219 = vmatpush1.xpose.msra.mxu0 0.0
        %1220 = vmatprep.subr.mxu0 0.0
        %1221 = vmatpush1.xpose.msra.mxu0 0.0
        %1222 = vmatprep.subr.mxu0 0.0
        %1223 = vmatpush1.xpose.msra.mxu0 0.0
        %1224 = vmatprep.subr.mxu0 0.0
        %1225 = vmatpush1.xpose.msra.mxu0 0.0
        %1226 = vmatprep.subr.mxu0 0.0
        %1227 = vmatpush1.xpose.msra.mxu0 0.0
        %1228 = vmatprep.subr.mxu0 0.0
        %1229 = vmatpush1.xpose.msra.mxu0 0.0
        %1230 = vmatprep.subr.mxu0 0.0
        %1231 = vmatpush1.xpose.msra.mxu0 0.0
        %1232 = vmatprep.subr.mxu0 0.0
        %1233 = vmatpush1.xpose.msra.mxu0 0.0
        %1234 = vmatprep.subr.mxu0 0.0
        %1235 = vmatpush1.xpose.msra.mxu0 0.0
        %1236 = vmatprep.subr.mxu0 0.0
        %1237 = vmatpush1.xpose.msra.mxu0 0.0
        %1238 = vmatprep.subr.mxu0 0.0
        %1239 = vmatpush1.xpose.msra.mxu0 0.0
        %1240 = vmatprep.subr.mxu0 0.0
        %1241 = vmatpush1.xpose.msra.mxu0 0.0
        %1242 = vmatprep.subr.mxu0 0.0
        %1243 = vmatpush1.xpose.msra.mxu0 0.0
        %1244 = vmatprep.subr.mxu0 0.0
        %1245 = vmatpush1.xpose.msra.mxu0 0.0
        %1246 = vmatprep.subr.mxu0 0.0
        %1247 = vmatpush1.xpose.msra.mxu0 0.0
        %1248 = vmatprep.subr.mxu0 0.0
        %1249 = vmatpush1.xpose.msra.mxu0 0.0
        %1250 = vmatprep.mubr.f32.mxu0 0.0
        %1251 = vmatmul.mubr.f32.gmra.mrb[0].mxu0 %v1172
        %v1252 = vpop.f32.mrb[0].mxu0
        %v1253 = vadd.f32 0.0, %v1252
        %v1254 = vpop.f32.mrb[0].mxu0
        %1255 = vmatprep.mubr.f32.mxu0 0.0
        %1256 = vmatmul.mubr.f32.gmra.mrb[0].mxu0 %v1175
        %v1257 = vpop.f32.mrb[0].mxu0
        %v1258 = vadd.f32 0.0, %v1257
        %v1259 = vpop.f32.mrb[0].mxu0
        %1260 = vdwg.mxu0
        %v1261 = vmul.f32 %v1163, 0.17677669
        %v1262 = vmul.f32 %v1168, 0.17677669
        %v1263 = vmul.f32 %v1253, 0.17677669
        %v1264 = vmul.f32 %v1258, 0.17677669
        %vm1265 = vcmask 195584
        %v1266 = vsel %vm1265, %v1261, -inf
        %1267 = vmax.xlane.f32.xlu0 %v1266
        %v1268 = vpop.xlane.xlu0 %1267
        %v1269 = vsel %vm1265, %v1262, -inf
        %1270 = vmax.xlane.f32.xlu0 %v1269
        %v1271 = vpop.xlane.xlu0 %1270
        %v1272 = vsel %vm1265, %v1263, -inf
        %1273 = vmax.xlane.f32.xlu0 %v1272
        %v1274 = vpop.xlane.xlu0 %1273
        %v1275 = vsel %vm1265, %v1264, -inf
        %1276 = vmax.xlane.f32.xlu0 %v1275
        %v1277 = vpop.xlane.xlu0 %1276
        %v1278 = vsub.f32 %v1261, %v1268
        %v1279 = vsub.f32 %v1262, %v1271
        %v1280 = vsub.f32 %v1263, %v1274
        %v1281 = vsub.f32 %v1264, %v1277
        %v1282 = vmul.f32 %v1278, 1.442695
        %v1283 = vpow.pop %v1282
        %v1284 = vmul.f32 %v1279, 1.442695
        %v1285 = vpow.pop %v1284
        %v1286 = vmul.f32 %v1280, 1.442695
        %v1287 = vpow.pop %v1286
        %v1288 = vmul.f32 %v1281, 1.442695
        %v1289 = vpow.pop %v1288
        %v1290 = vsel %vm1265, %v1283, 0.0
        %1291 = vadd.xlane.f32.xlu0 %v1290
        %v1292 = vpop.xlane.xlu0 %1291
        %v1293 = vsel %vm1265, %v1285, 0.0
        %1294 = vadd.xlane.f32.xlu0 %v1293
        %v1295 = vpop.xlane.xlu0 %1294
        %v1296 = vsel %vm1265, %v1287, 0.0
        %1297 = vadd.xlane.f32.xlu0 %v1296
        %v1298 = vpop.xlane.xlu0 %1297
        %v1299 = vsel %vm1265, %v1289, 0.0
        %1300 = vadd.xlane.f32.xlu0 %v1299
        %v1301 = vpop.xlane.xlu0 %1300
        %v1302 = vrcp.pop %v1292
        %v1303 = vrcp.pop %v1295
        %v1304 = vrcp.pop %v1298
        %v1305 = vrcp.pop %v1301
        %v1306 = vmul.f32 %v1283, %v1302
        %v1307 = vmul.f32 %v1285, %v1303
        %v1308 = vmul.f32 %v1287, %v1304
        %v1309 = vmul.f32 %v1289, %v1305
        %v1311 = vsel %vm1265, %v1306, 0
        %v1314 = vsel %vm1265, %v1307, 0
        %1316 = vmatprep.subr.mxu0 0.0
        %1317 = vmatpush1.msra.mxu0 %v1052
        %1318 = vmatprep.subr.mxu0 0.0
        %1319 = vmatpush1.msra.mxu0 %v1057
        %1320 = vmatprep.subr.mxu0 0.0
        %1321 = vmatpush1.msra.mxu0 %v1062
        %1322 = vmatprep.subr.mxu0 0.0
        %1323 = vmatpush1.msra.mxu0 0.0
        %1324 = vmatprep.subr.mxu0 0.0
        %1325 = vmatpush1.msra.mxu0 0.0
        %1326 = vmatprep.subr.mxu0 0.0
        %1327 = vmatpush1.msra.mxu0 0.0
        %1328 = vmatprep.subr.mxu0 0.0
        %1329 = vmatpush1.msra.mxu0 0.0
        %1330 = vmatprep.subr.mxu0 0.0
        %1331 = vmatpush1.msra.mxu0 0.0
        %1332 = vmatprep.subr.mxu0 0.0
        %1333 = vmatpush1.msra.mxu0 0.0
        %1334 = vmatprep.subr.mxu0 0.0
        %1335 = vmatpush1.msra.mxu0 0.0
        %1336 = vmatprep.subr.mxu0 0.0
        %1337 = vmatpush1.msra.mxu0 0.0
        %1338 = vmatprep.subr.mxu0 0.0
        %1339 = vmatpush1.msra.mxu0 0.0
        %1340 = vmatprep.subr.mxu0 0.0
        %1341 = vmatpush1.msra.mxu0 0.0
        %1342 = vmatprep.subr.mxu0 0.0
        %1343 = vmatpush1.msra.mxu0 0.0
        %1344 = vmatprep.subr.mxu0 0.0
        %1345 = vmatpush1.msra.mxu0 0.0
        %1346 = vmatprep.subr.mxu0 0.0
        %1347 = vmatpush1.msra.mxu0 0.0
        %1348 = vmatprep.subr.mxu0 0.0
        %1349 = vmatpush1.msra.mxu0 0.0
        %1350 = vmatprep.subr.mxu0 0.0
        %1351 = vmatpush1.msra.mxu0 0.0
        %1352 = vmatprep.subr.mxu0 0.0
        %1353 = vmatpush1.msra.mxu0 0.0
        %1354 = vmatprep.subr.mxu0 0.0
        %1355 = vmatpush1.msra.mxu0 0.0
        %1356 = vmatprep.subr.mxu0 0.0
        %1357 = vmatpush1.msra.mxu0 0.0
        %1358 = vmatprep.subr.mxu0 0.0
        %1359 = vmatpush1.msra.mxu0 0.0
        %1360 = vmatprep.subr.mxu0 0.0
        %1361 = vmatpush1.msra.mxu0 0.0
        %1362 = vmatprep.subr.mxu0 0.0
        %1363 = vmatpush1.msra.mxu0 0.0
        %1364 = vmatprep.subr.mxu0 0.0
        %1365 = vmatpush1.msra.mxu0 0.0
        %1366 = vmatprep.subr.mxu0 0.0
        %1367 = vmatpush1.msra.mxu0 0.0
        %1368 = vmatprep.subr.mxu0 0.0
        %1369 = vmatpush1.msra.mxu0 0.0
        %1370 = vmatprep.subr.mxu0 0.0
        %1371 = vmatpush1.msra.mxu0 0.0
        %1372 = vmatprep.subr.mxu0 0.0
        %1373 = vmatpush1.msra.mxu0 0.0
        %1374 = vmatprep.subr.mxu0 0.0
        %1375 = vmatpush1.msra.mxu0 0.0
        %1376 = vmatprep.subr.mxu0 0.0
        %1377 = vmatpush1.msra.mxu0 0.0
        %1378 = vmatprep.subr.mxu0 0.0
        %1379 = vmatpush1.msra.mxu0 0.0
        %1380 = vmatprep.mubr.f32.mxu0 0.0
        %1381 = vmatmul.mubr.f32.gmra.mrb[0].mxu0 %v1311
        %v1382 = vpop.f32.mrb[0].mxu0
        %v1383 = vadd.f32 0.0, %v1382
        %v1384 = vpop.f32.mrb[0].mxu0
        %1385 = vmatprep.mubr.f32.mxu0 0.0
        %1386 = vmatmul.mubr.f32.gmra.mrb[0].mxu0 %v1314
        %v1387 = vpop.f32.mrb[0].mxu0
        %v1388 = vadd.f32 0.0, %v1387
        %v1389 = vpop.f32.mrb[0].mxu0
        %1390 = vdwg.mxu0
        %v1392 = vsel %vm1265, %v1308, 0
        %v1395 = vsel %vm1265, %v1309, 0
        %1397 = vmatprep.subr.mxu0 0.0
        %1398 = vmatpush1.msra.mxu0 %v1067
        %1399 = vmatprep.subr.mxu0 0.0
        %1400 = vmatpush1.msra.mxu0 %v1072
        %1401 = vmatprep.subr.mxu0 0.0
        %1402 = vmatpush1.msra.mxu0 %v1077
        %1403 = vmatprep.subr.mxu0 0.0
        %1404 = vmatpush1.msra.mxu0 0.0
        %1405 = vmatprep.subr.mxu0 0.0
        %1406 = vmatpush1.msra.mxu0 0.0
        %1407 = vmatprep.subr.mxu0 0.0
        %1408 = vmatpush1.msra.mxu0 0.0
        %1409 = vmatprep.subr.mxu0 0.0
        %1410 = vmatpush1.msra.mxu0 0.0
        %1411 = vmatprep.subr.mxu0 0.0
        %1412 = vmatpush1.msra.mxu0 0.0
        %1413 = vmatprep.subr.mxu0 0.0
        %1414 = vmatpush1.msra.mxu0 0.0
        %1415 = vmatprep.subr.mxu0 0.0
        %1416 = vmatpush1.msra.mxu0 0.0
        %1417 = vmatprep.subr.mxu0 0.0
        %1418 = vmatpush1.msra.mxu0 0.0
        %1419 = vmatprep.subr.mxu0 0.0
        %1420 = vmatpush1.msra.mxu0 0.0
        %1421 = vmatprep.subr.mxu0 0.0
        %1422 = vmatpush1.msra.mxu0 0.0
        %1423 = vmatprep.subr.mxu0 0.0
        %1424 = vmatpush1.msra.mxu0 0.0
        %1425 = vmatprep.subr.mxu0 0.0
        %1426 = vmatpush1.msra.mxu0 0.0
        %1427 = vmatprep.subr.mxu0 0.0
        %1428 = vmatpush1.msra.mxu0 0.0
        %1429 = vmatprep.subr.mxu0 0.0
        %1430 = vmatpush1.msra.mxu0 0.0
        %1431 = vmatprep.subr.mxu0 0.0
        %1432 = vmatpush1.msra.mxu0 0.0
        %1433 = vmatprep.subr.mxu0 0.0
        %1434 = vmatpush1.msra.mxu0 0.0
        %1435 = vmatprep.subr.mxu0 0.0
        %1436 = vmatpush1.msra.mxu0 0.0
        %1437 = vmatprep.subr.mxu0 0.0
        %1438 = vmatpush1.msra.mxu0 0.0
        %1439 = vmatprep.subr.mxu0 0.0
        %1440 = vmatpush1.msra.mxu0 0.0
        %1441 = vmatprep.subr.mxu0 0.0
        %1442 = vmatpush1.msra.mxu0 0.0
        %1443 = vmatprep.subr.mxu0 0.0
        %1444 = vmatpush1.msra.mxu0 0.0
        %1445 = vmatprep.subr.mxu0 0.0
        %1446 = vmatpush1.msra.mxu0 0.0
        %1447 = vmatprep.subr.mxu0 0.0
        %1448 = vmatpush1.msra.mxu0 0.0
        %1449 = vmatprep.subr.mxu0 0.0
        %1450 = vmatpush1.msra.mxu0 0.0
        %1451 = vmatprep.subr.mxu0 0.0
        %1452 = vmatpush1.msra.mxu0 0.0
        %1453 = vmatprep.subr.mxu0 0.0
        %1454 = vmatpush1.msra.mxu0 0.0
        %1455 = vmatprep.subr.mxu0 0.0
        %1456 = vmatpush1.msra.mxu0 0.0
        %1457 = vmatprep.subr.mxu0 0.0
        %1458 = vmatpush1.msra.mxu0 0.0
        %1459 = vmatprep.subr.mxu0 0.0
        %1460 = vmatpush1.msra.mxu0 0.0
        %1461 = vmatprep.mubr.f32.mxu0 0.0
        %1462 = vmatmul.mubr.f32.gmra.mrb[0].mxu0 %v1392
        %v1463 = vpop.f32.mrb[0].mxu0
        %v1464 = vadd.f32 0.0, %v1463
        %v1465 = vpop.f32.mrb[0].mxu0
        %1466 = vmatprep.mubr.f32.mxu0 0.0
        %1467 = vmatmul.mubr.f32.gmra.mrb[0].mxu0 %v1395
        %v1468 = vpop.f32.mrb[0].mxu0
        %v1469 = vadd.f32 0.0, %v1468
        %v1470 = vpop.f32.mrb[0].mxu0
        %1471 = vdwg.mxu0
        %v1472 = vld [vmem:[#allocation11] sm:$0xff]
        %v1473 = vld [vmem:[#allocation11 + $0x8] sm:$0xff]
        %v1474 = vld [vmem:[#allocation11 + $0x10] sm:$0xff]
        %v1475 = vld [vmem:[#allocation11 + $0x18] sm:$0xff]
        %1476 = vrot.lane.b32.xlu0 %v826, 96
        %v1477 = vpop.permute.xlu0 %1476
        %1478 = vrot.lane.b32.xlu0 %v831, 96
        %v1479 = vpop.permute.xlu0 %1478
        %1480 = vrot.lane.b32.xlu0 %v934, 96
        %v1481 = vpop.permute.xlu0 %1480
        %1482 = vrot.lane.b32.xlu0 %v939, 96
        %v1483 = vpop.permute.xlu0 %1482
        %1484 = vrot.lane.b32.xlu0 %v944, 96
        %v1485 = vpop.permute.xlu0 %1484
        %v1486 = vsel %vm1080, %v1477, 0
        %v1488 = vsel %vm1080, %v1479, 0
        %v1490 = vsel %vm1080, %v1481, 0
        %v1492 = vsel %vm1080, %v1483, 0
        %v1494 = vsel %vm1080, %v1485, 0
        %1496 = vmatprep.subr.mxu0 0.0
        %1497 = vmatpush1.xpose.msra.mxu0 %v1490
        %1498 = vmatprep.subr.mxu0 0.0
        %1499 = vmatpush1.xpose.msra.mxu0 %v1492
        %1500 = vmatprep.subr.mxu0 0.0
        %1501 = vmatpush1.xpose.msra.mxu0 %v1494
        %1502 = vmatprep.subr.mxu0 0.0
        %1503 = vmatpush1.xpose.msra.mxu0 0.0
        %1504 = vmatprep.subr.mxu0 0.0
        %1505 = vmatpush1.xpose.msra.mxu0 0.0
        %1506 = vmatprep.subr.mxu0 0.0
        %1507 = vmatpush1.xpose.msra.mxu0 0.0
        %1508 = vmatprep.subr.mxu0 0.0
        %1509 = vmatpush1.xpose.msra.mxu0 0.0
        %1510 = vmatprep.subr.mxu0 0.0
        %1511 = vmatpush1.xpose.msra.mxu0 0.0
        %1512 = vmatprep.subr.mxu0 0.0
        %1513 = vmatpush1.xpose.msra.mxu0 0.0
        %1514 = vmatprep.subr.mxu0 0.0
        %1515 = vmatpush1.xpose.msra.mxu0 0.0
        %1516 = vmatprep.subr.mxu0 0.0
        %1517 = vmatpush1.xpose.msra.mxu0 0.0
        %1518 = vmatprep.subr.mxu0 0.0
        %1519 = vmatpush1.xpose.msra.mxu0 0.0
        %1520 = vmatprep.subr.mxu0 0.0
        %1521 = vmatpush1.xpose.msra.mxu0 0.0
        %1522 = vmatprep.subr.mxu0 0.0
        %1523 = vmatpush1.xpose.msra.mxu0 0.0
        %1524 = vmatprep.subr.mxu0 0.0
        %1525 = vmatpush1.xpose.msra.mxu0 0.0
        %1526 = vmatprep.subr.mxu0 0.0
        %1527 = vmatpush1.xpose.msra.mxu0 0.0
        %1528 = vmatprep.subr.mxu0 0.0
        %1529 = vmatpush1.xpose.msra.mxu0 0.0
        %1530 = vmatprep.subr.mxu0 0.0
        %1531 = vmatpush1.xpose.msra.mxu0 0.0
        %1532 = vmatprep.subr.mxu0 0.0
        %1533 = vmatpush1.xpose.msra.mxu0 0.0
        %1534 = vmatprep.subr.mxu0 0.0
        %1535 = vmatpush1.xpose.msra.mxu0 0.0
        %1536 = vmatprep.subr.mxu0 0.0
        %1537 = vmatpush1.xpose.msra.mxu0 0.0
        %1538 = vmatprep.subr.mxu0 0.0
        %1539 = vmatpush1.xpose.msra.mxu0 0.0
        %1540 = vmatprep.subr.mxu0 0.0
        %1541 = vmatpush1.xpose.msra.mxu0 0.0
        %1542 = vmatprep.subr.mxu0 0.0
        %1543 = vmatpush1.xpose.msra.mxu0 0.0
        %1544 = vmatprep.subr.mxu0 0.0
        %1545 = vmatpush1.xpose.msra.mxu0 0.0
        %1546 = vmatprep.subr.mxu0 0.0
        %1547 = vmatpush1.xpose.msra.mxu0 0.0
        %1548 = vmatprep.subr.mxu0 0.0
        %1549 = vmatpush1.xpose.msra.mxu0 0.0
        %1550 = vmatprep.subr.mxu0 0.0
        %1551 = vmatpush1.xpose.msra.mxu0 0.0
        %1552 = vmatprep.subr.mxu0 0.0
        %1553 = vmatpush1.xpose.msra.mxu0 0.0
        %1554 = vmatprep.subr.mxu0 0.0
        %1555 = vmatpush1.xpose.msra.mxu0 0.0
        %1556 = vmatprep.subr.mxu0 0.0
        %1557 = vmatpush1.xpose.msra.mxu0 0.0
        %1558 = vmatprep.subr.mxu0 0.0
        %1559 = vmatpush1.xpose.msra.mxu0 0.0
        %1560 = vmatprep.mubr.f32.mxu0 0.0
        %1561 = vmatmul.mubr.f32.gmra.mrb[0].mxu0 %v1486
        %v1562 = vpop.f32.mrb[0].mxu0
        %v1563 = vadd.f32 0.0, %v1562
        %v1564 = vpop.f32.mrb[0].mxu0
        %1565 = vmatprep.mubr.f32.mxu0 0.0
        %1566 = vmatmul.mubr.f32.gmra.mrb[0].mxu0 %v1488
        %v1567 = vpop.f32.mrb[0].mxu0
        %v1568 = vadd.f32 0.0, %v1567
        %v1569 = vpop.f32.mrb[0].mxu0
        %1570 = vdwg.mxu0
        %1571 = vrot.lane.b32.xlu0 %v836, 96
        %v1572 = vpop.permute.xlu0 %1571
        %1573 = vrot.lane.b32.xlu0 %v841, 96
        %v1574 = vpop.permute.xlu0 %1573
        %1575 = vrot.lane.b32.xlu0 %v949, 96
        %v1576 = vpop.permute.xlu0 %1575
        %1577 = vrot.lane.b32.xlu0 %v954, 96
        %v1578 = vpop.permute.xlu0 %1577
        %1579 = vrot.lane.b32.xlu0 %v959, 96
        %v1580 = vpop.permute.xlu0 %1579
        %v1581 = vsel %vm1080, %v1572, 0
        %v1583 = vsel %vm1080, %v1574, 0
        %v1585 = vsel %vm1080, %v1576, 0
        %v1587 = vsel %vm1080, %v1578, 0
        %v1589 = vsel %vm1080, %v1580, 0
        %1591 = vmatprep.subr.mxu0 0.0
        %1592 = vmatpush1.xpose.msra.mxu0 %v1585
        %1593 = vmatprep.subr.mxu0 0.0
        %1594 = vmatpush1.xpose.msra.mxu0 %v1587
        %1595 = vmatprep.subr.mxu0 0.0
        %1596 = vmatpush1.xpose.msra.mxu0 %v1589
        %1597 = vmatprep.subr.mxu0 0.0
        %1598 = vmatpush1.xpose.msra.mxu0 0.0
        %1599 = vmatprep.subr.mxu0 0.0
        %1600 = vmatpush1.xpose.msra.mxu0 0.0
        %1601 = vmatprep.subr.mxu0 0.0
        %1602 = vmatpush1.xpose.msra.mxu0 0.0
        %1603 = vmatprep.subr.mxu0 0.0
        %1604 = vmatpush1.xpose.msra.mxu0 0.0
        %1605 = vmatprep.subr.mxu0 0.0
        %1606 = vmatpush1.xpose.msra.mxu0 0.0
        %1607 = vmatprep.subr.mxu0 0.0
        %1608 = vmatpush1.xpose.msra.mxu0 0.0
        %1609 = vmatprep.subr.mxu0 0.0
        %1610 = vmatpush1.xpose.msra.mxu0 0.0
        %1611 = vmatprep.subr.mxu0 0.0
        %1612 = vmatpush1.xpose.msra.mxu0 0.0
        %1613 = vmatprep.subr.mxu0 0.0
        %1614 = vmatpush1.xpose.msra.mxu0 0.0
        %1615 = vmatprep.subr.mxu0 0.0
        %1616 = vmatpush1.xpose.msra.mxu0 0.0
        %1617 = vmatprep.subr.mxu0 0.0
        %1618 = vmatpush1.xpose.msra.mxu0 0.0
        %1619 = vmatprep.subr.mxu0 0.0
        %1620 = vmatpush1.xpose.msra.mxu0 0.0
        %1621 = vmatprep.subr.mxu0 0.0
        %1622 = vmatpush1.xpose.msra.mxu0 0.0
        %1623 = vmatprep.subr.mxu0 0.0
        %1624 = vmatpush1.xpose.msra.mxu0 0.0
        %1625 = vmatprep.subr.mxu0 0.0
        %1626 = vmatpush1.xpose.msra.mxu0 0.0
        %1627 = vmatprep.subr.mxu0 0.0
        %1628 = vmatpush1.xpose.msra.mxu0 0.0
        %1629 = vmatprep.subr.mxu0 0.0
        %1630 = vmatpush1.xpose.msra.mxu0 0.0
        %1631 = vmatprep.subr.mxu0 0.0
        %1632 = vmatpush1.xpose.msra.mxu0 0.0
        %1633 = vmatprep.subr.mxu0 0.0
        %1634 = vmatpush1.xpose.msra.mxu0 0.0
        %1635 = vmatprep.subr.mxu0 0.0
        %1636 = vmatpush1.xpose.msra.mxu0 0.0
        %1637 = vmatprep.subr.mxu0 0.0
        %1638 = vmatpush1.xpose.msra.mxu0 0.0
        %1639 = vmatprep.subr.mxu0 0.0
        %1640 = vmatpush1.xpose.msra.mxu0 0.0
        %1641 = vmatprep.subr.mxu0 0.0
        %1642 = vmatpush1.xpose.msra.mxu0 0.0
        %1643 = vmatprep.subr.mxu0 0.0
        %1644 = vmatpush1.xpose.msra.mxu0 0.0
        %1645 = vmatprep.subr.mxu0 0.0
        %1646 = vmatpush1.xpose.msra.mxu0 0.0
        %1647 = vmatprep.subr.mxu0 0.0
        %1648 = vmatpush1.xpose.msra.mxu0 0.0
        %1649 = vmatprep.subr.mxu0 0.0
        %1650 = vmatpush1.xpose.msra.mxu0 0.0
        %1651 = vmatprep.subr.mxu0 0.0
        %1652 = vmatpush1.xpose.msra.mxu0 0.0
        %1653 = vmatprep.subr.mxu0 0.0
        %1654 = vmatpush1.xpose.msra.mxu0 0.0
        %1655 = vmatprep.mubr.f32.mxu0 0.0
        %1656 = vmatmul.mubr.f32.gmra.mrb[0].mxu0 %v1581
        %v1657 = vpop.f32.mrb[0].mxu0
        %v1658 = vadd.f32 0.0, %v1657
        %v1659 = vpop.f32.mrb[0].mxu0
        %1660 = vmatprep.mubr.f32.mxu0 0.0
        %1661 = vmatmul.mubr.f32.gmra.mrb[0].mxu0 %v1583
        %v1662 = vpop.f32.mrb[0].mxu0
        %v1663 = vadd.f32 0.0, %v1662
        %v1664 = vpop.f32.mrb[0].mxu0
        %1665 = vdwg.mxu0
        %v1666 = vmul.f32 %v1563, 0.17677669
        %v1667 = vmul.f32 %v1568, 0.17677669
        %v1668 = vmul.f32 %v1658, 0.17677669
        %v1669 = vmul.f32 %v1663, 0.17677669
        %v1670 = vsel %vm1265, %v1666, -inf
        %1671 = vmax.xlane.f32.xlu0 %v1670
        %v1672 = vpop.xlane.xlu0 %1671
        %v1673 = vsel %vm1265, %v1667, -inf
        %1674 = vmax.xlane.f32.xlu0 %v1673
        %v1675 = vpop.xlane.xlu0 %1674
        %v1676 = vsel %vm1265, %v1668, -inf
        %1677 = vmax.xlane.f32.xlu0 %v1676
        %v1678 = vpop.xlane.xlu0 %1677
        %v1679 = vsel %vm1265, %v1669, -inf
        %1680 = vmax.xlane.f32.xlu0 %v1679
        %v1681 = vpop.xlane.xlu0 %1680
        %v1682 = vsub.f32 %v1666, %v1672
        %v1683 = vsub.f32 %v1667, %v1675
        %v1684 = vsub.f32 %v1668, %v1678
        %v1685 = vsub.f32 %v1669, %v1681
        %v1686 = vmul.f32 %v1682, 1.442695
        %v1687 = vpow.pop %v1686
        %v1688 = vmul.f32 %v1683, 1.442695
        %v1689 = vpow.pop %v1688
        %v1690 = vmul.f32 %v1684, 1.442695
        %v1691 = vpow.pop %v1690
        %v1692 = vmul.f32 %v1685, 1.442695
        %v1693 = vpow.pop %v1692
        %v1694 = vsel %vm1265, %v1687, 0.0
        %1695 = vadd.xlane.f32.xlu0 %v1694
        %v1696 = vpop.xlane.xlu0 %1695
        %v1697 = vsel %vm1265, %v1689, 0.0
        %1698 = vadd.xlane.f32.xlu0 %v1697
        %v1699 = vpop.xlane.xlu0 %1698
        %v1700 = vsel %vm1265, %v1691, 0.0
        %1701 = vadd.xlane.f32.xlu0 %v1700
        %v1702 = vpop.xlane.xlu0 %1701
        %v1703 = vsel %vm1265, %v1693, 0.0
        %1704 = vadd.xlane.f32.xlu0 %v1703
        %v1705 = vpop.xlane.xlu0 %1704
        %v1706 = vrcp.pop %v1696
        %v1707 = vrcp.pop %v1699
        %v1708 = vrcp.pop %v1702
        %v1709 = vrcp.pop %v1705
        %v1710 = vmul.f32 %v1687, %v1706
        %v1711 = vmul.f32 %v1689, %v1707
        %v1712 = vmul.f32 %v1691, %v1708
        %v1713 = vmul.f32 %v1693, %v1709
        %1717 = vrot.lane.b32.xlu0 %v1052, 96
        %v1718 = vpop.permute.xlu0 %1717
        %1719 = vrot.lane.b32.xlu0 %v1057, 96
        %v1720 = vpop.permute.xlu0 %1719
        %1721 = vrot.lane.b32.xlu0 %v1062, 96
        %v1722 = vpop.permute.xlu0 %1721
        %v1727 = vsel %vm1265, %v1710, 0
        %v1730 = vsel %vm1265, %v1711, 0
        %1732 = vmatprep.subr.mxu0 0.0
        %1733 = vmatpush1.msra.mxu0 %v1718
        %1734 = vmatprep.subr.mxu0 0.0
        %1735 = vmatpush1.msra.mxu0 %v1720
        %1736 = vmatprep.subr.mxu0 0.0
        %1737 = vmatpush1.msra.mxu0 %v1722
        %1738 = vmatprep.subr.mxu0 0.0
        %1739 = vmatpush1.msra.mxu0 0.0
        %1740 = vmatprep.subr.mxu0 0.0
        %1741 = vmatpush1.msra.mxu0 0.0
        %1742 = vmatprep.subr.mxu0 0.0
        %1743 = vmatpush1.msra.mxu0 0.0
        %1744 = vmatprep.subr.mxu0 0.0
        %1745 = vmatpush1.msra.mxu0 0.0
        %1746 = vmatprep.subr.mxu0 0.0
        %1747 = vmatpush1.msra.mxu0 0.0
        %1748 = vmatprep.subr.mxu0 0.0
        %1749 = vmatpush1.msra.mxu0 0.0
        %1750 = vmatprep.subr.mxu0 0.0
        %1751 = vmatpush1.msra.mxu0 0.0
        %1752 = vmatprep.subr.mxu0 0.0
        %1753 = vmatpush1.msra.mxu0 0.0
        %1754 = vmatprep.subr.mxu0 0.0
        %1755 = vmatpush1.msra.mxu0 0.0
        %1756 = vmatprep.subr.mxu0 0.0
        %1757 = vmatpush1.msra.mxu0 0.0
        %1758 = vmatprep.subr.mxu0 0.0
        %1759 = vmatpush1.msra.mxu0 0.0
        %1760 = vmatprep.subr.mxu0 0.0
        %1761 = vmatpush1.msra.mxu0 0.0
        %1762 = vmatprep.subr.mxu0 0.0
        %1763 = vmatpush1.msra.mxu0 0.0
        %1764 = vmatprep.subr.mxu0 0.0
        %1765 = vmatpush1.msra.mxu0 0.0
        %1766 = vmatprep.subr.mxu0 0.0
        %1767 = vmatpush1.msra.mxu0 0.0
        %1768 = vmatprep.subr.mxu0 0.0
        %1769 = vmatpush1.msra.mxu0 0.0
        %1770 = vmatprep.subr.mxu0 0.0
        %1771 = vmatpush1.msra.mxu0 0.0
        %1772 = vmatprep.subr.mxu0 0.0
        %1773 = vmatpush1.msra.mxu0 0.0
        %1774 = vmatprep.subr.mxu0 0.0
        %1775 = vmatpush1.msra.mxu0 0.0
        %1776 = vmatprep.subr.mxu0 0.0
        %1777 = vmatpush1.msra.mxu0 0.0
        %1778 = vmatprep.subr.mxu0 0.0
        %1779 = vmatpush1.msra.mxu0 0.0
        %1780 = vmatprep.subr.mxu0 0.0
        %1781 = vmatpush1.msra.mxu0 0.0
        %1782 = vmatprep.subr.mxu0 0.0
        %1783 = vmatpush1.msra.mxu0 0.0
        %1784 = vmatprep.subr.mxu0 0.0
        %1785 = vmatpush1.msra.mxu0 0.0
        %1786 = vmatprep.subr.mxu0 0.0
        %1787 = vmatpush1.msra.mxu0 0.0
        %1788 = vmatprep.subr.mxu0 0.0
        %1789 = vmatpush1.msra.mxu0 0.0
        %1790 = vmatprep.subr.mxu0 0.0
        %1791 = vmatpush1.msra.mxu0 0.0
        %1792 = vmatprep.subr.mxu0 0.0
        %1793 = vmatpush1.msra.mxu0 0.0
        %1794 = vmatprep.subr.mxu0 0.0
        %1795 = vmatpush1.msra.mxu0 0.0
        %1796 = vmatprep.mubr.f32.mxu0 0.0
        %1797 = vmatmul.mubr.f32.gmra.mrb[0].mxu0 %v1727
        %v1798 = vpop.f32.mrb[0].mxu0
        %v1799 = vadd.f32 0.0, %v1798
        %v1800 = vpop.f32.mrb[0].mxu0
        %1801 = vmatprep.mubr.f32.mxu0 0.0
        %1802 = vmatmul.mubr.f32.gmra.mrb[0].mxu0 %v1730
        %v1803 = vpop.f32.mrb[0].mxu0
        %v1804 = vadd.f32 0.0, %v1803
        %v1805 = vpop.f32.mrb[0].mxu0
        %1806 = vdwg.mxu0
        %1810 = vrot.lane.b32.xlu0 %v1067, 96
        %v1811 = vpop.permute.xlu0 %1810
        %1812 = vrot.lane.b32.xlu0 %v1072, 96
        %v1813 = vpop.permute.xlu0 %1812
        %1814 = vrot.lane.b32.xlu0 %v1077, 96
        %v1815 = vpop.permute.xlu0 %1814
        %v1820 = vsel %vm1265, %v1712, 0
        %v1823 = vsel %vm1265, %v1713, 0
        %1825 = vmatprep.subr.mxu0 0.0
        %1826 = vmatpush1.msra.mxu0 %v1811
        %1827 = vmatprep.subr.mxu0 0.0
        %1828 = vmatpush1.msra.mxu0 %v1813
        %1829 = vmatprep.subr.mxu0 0.0
        %1830 = vmatpush1.msra.mxu0 %v1815
        %1831 = vmatprep.subr.mxu0 0.0
        %1832 = vmatpush1.msra.mxu0 0.0
        %1833 = vmatprep.subr.mxu0 0.0
        %1834 = vmatpush1.msra.mxu0 0.0
        %1835 = vmatprep.subr.mxu0 0.0
        %1836 = vmatpush1.msra.mxu0 0.0
        %1837 = vmatprep.subr.mxu0 0.0
        %1838 = vmatpush1.msra.mxu0 0.0
        %1839 = vmatprep.subr.mxu0 0.0
        %1840 = vmatpush1.msra.mxu0 0.0
        %1841 = vmatprep.subr.mxu0 0.0
        %1842 = vmatpush1.msra.mxu0 0.0
        %1843 = vmatprep.subr.mxu0 0.0
        %1844 = vmatpush1.msra.mxu0 0.0
        %1845 = vmatprep.subr.mxu0 0.0
        %1846 = vmatpush1.msra.mxu0 0.0
        %1847 = vmatprep.subr.mxu0 0.0
        %1848 = vmatpush1.msra.mxu0 0.0
        %1849 = vmatprep.subr.mxu0 0.0
        %1850 = vmatpush1.msra.mxu0 0.0
        %1851 = vmatprep.subr.mxu0 0.0
        %1852 = vmatpush1.msra.mxu0 0.0
        %1853 = vmatprep.subr.mxu0 0.0
        %1854 = vmatpush1.msra.mxu0 0.0
        %1855 = vmatprep.subr.mxu0 0.0
        %1856 = vmatpush1.msra.mxu0 0.0
        %1857 = vmatprep.subr.mxu0 0.0
        %1858 = vmatpush1.msra.mxu0 0.0
        %1859 = vmatprep.subr.mxu0 0.0
        %1860 = vmatpush1.msra.mxu0 0.0
        %1861 = vmatprep.subr.mxu0 0.0
        %1862 = vmatpush1.msra.mxu0 0.0
        %1863 = vmatprep.subr.mxu0 0.0
        %1864 = vmatpush1.msra.mxu0 0.0
        %1865 = vmatprep.subr.mxu0 0.0
        %1866 = vmatpush1.msra.mxu0 0.0
        %1867 = vmatprep.subr.mxu0 0.0
        %1868 = vmatpush1.msra.mxu0 0.0
        %1869 = vmatprep.subr.mxu0 0.0
        %1870 = vmatpush1.msra.mxu0 0.0
        %1871 = vmatprep.subr.mxu0 0.0
        %1872 = vmatpush1.msra.mxu0 0.0
        %1873 = vmatprep.subr.mxu0 0.0
        %1874 = vmatpush1.msra.mxu0 0.0
        %1875 = vmatprep.subr.mxu0 0.0
        %1876 = vmatpush1.msra.mxu0 0.0
        %1877 = vmatprep.subr.mxu0 0.0
        %1878 = vmatpush1.msra.mxu0 0.0
        %1879 = vmatprep.subr.mxu0 0.0
        %1880 = vmatpush1.msra.mxu0 0.0
        %1881 = vmatprep.subr.mxu0 0.0
        %1882 = vmatpush1.msra.mxu0 0.0
        %1883 = vmatprep.subr.mxu0 0.0
        %1884 = vmatpush1.msra.mxu0 0.0
        %1885 = vmatprep.subr.mxu0 0.0
        %1886 = vmatpush1.msra.mxu0 0.0
        %1887 = vmatprep.subr.mxu0 0.0
        %1888 = vmatpush1.msra.mxu0 0.0
        %1889 = vmatprep.mubr.f32.mxu0 0.0
        %1890 = vmatmul.mubr.f32.gmra.mrb[0].mxu0 %v1820
        %v1891 = vpop.f32.mrb[0].mxu0
        %v1892 = vadd.f32 0.0, %v1891
        %v1893 = vpop.f32.mrb[0].mxu0
        %1894 = vmatprep.mubr.f32.mxu0 0.0
        %1895 = vmatmul.mubr.f32.gmra.mrb[0].mxu0 %v1823
        %v1896 = vpop.f32.mrb[0].mxu0
        %v1897 = vadd.f32 0.0, %v1896
        %v1898 = vpop.f32.mrb[0].mxu0
        %1899 = vdwg.mxu0
        %v1900 = vld [vmem:[#allocation11 + $0x20] sm:$0xff]
        %v1901 = vld [vmem:[#allocation11 + $0x28] sm:$0xff]
        %v1902 = vld [vmem:[#allocation11 + $0x30] sm:$0xff]
        %v1903 = vld [vmem:[#allocation11 + $0x38] sm:$0xff]
        %v1905 = vsel %vm1080, %v1799, 0
        %v1908 = vsel %vm1080, %v1804, 0
        %v1911 = vsel %vm1080, %v1892, 0
        %v1914 = vsel %vm1080, %v1897, 0
        %1916 = vmatprep.subr.mxu0 0.0
        %1917 = vmatpush1.msra.mxu0 %v1900
        %1918 = vmatprep.subr.mxu0 0.0
        %1919 = vmatpush1.msra.mxu0 %v1901
        %1920 = vmatprep.subr.mxu0 0.0
        %1921 = vmatpush1.msra.mxu0 %v1902
        %1922 = vmatprep.subr.mxu0 0.0
        %1923 = vmatpush1.msra.mxu0 %v1903
        %1924 = vmatprep.subr.mxu0 0.0
        %1925 = vmatpush1.msra.mxu0 0.0
        %1926 = vmatprep.subr.mxu0 0.0
        %1927 = vmatpush1.msra.mxu0 0.0
        %1928 = vmatprep.subr.mxu0 0.0
        %1929 = vmatpush1.msra.mxu0 0.0
        %1930 = vmatprep.subr.mxu0 0.0
        %1931 = vmatpush1.msra.mxu0 0.0
        %1932 = vmatprep.subr.mxu0 0.0
        %1933 = vmatpush1.msra.mxu0 0.0
        %1934 = vmatprep.subr.mxu0 0.0
        %1935 = vmatpush1.msra.mxu0 0.0
        %1936 = vmatprep.subr.mxu0 0.0
        %1937 = vmatpush1.msra.mxu0 0.0
        %1938 = vmatprep.subr.mxu0 0.0
        %1939 = vmatpush1.msra.mxu0 0.0
        %1940 = vmatprep.subr.mxu0 0.0
        %1941 = vmatpush1.msra.mxu0 0.0
        %1942 = vmatprep.subr.mxu0 0.0
        %1943 = vmatpush1.msra.mxu0 0.0
        %1944 = vmatprep.subr.mxu0 0.0
        %1945 = vmatpush1.msra.mxu0 0.0
        %1946 = vmatprep.subr.mxu0 0.0
        %1947 = vmatpush1.msra.mxu0 0.0
        %1948 = vmatprep.subr.mxu0 0.0
        %1949 = vmatpush1.msra.mxu0 0.0
        %1950 = vmatprep.subr.mxu0 0.0
        %1951 = vmatpush1.msra.mxu0 0.0
        %1952 = vmatprep.subr.mxu0 0.0
        %1953 = vmatpush1.msra.mxu0 0.0
        %1954 = vmatprep.subr.mxu0 0.0
        %1955 = vmatpush1.msra.mxu0 0.0
        %1956 = vmatprep.subr.mxu0 0.0
        %1957 = vmatpush1.msra.mxu0 0.0
        %1958 = vmatprep.subr.mxu0 0.0
        %1959 = vmatpush1.msra.mxu0 0.0
        %1960 = vmatprep.subr.mxu0 0.0
        %1961 = vmatpush1.msra.mxu0 0.0
        %1962 = vmatprep.subr.mxu0 0.0
        %1963 = vmatpush1.msra.mxu0 0.0
        %1964 = vmatprep.subr.mxu0 0.0
        %1965 = vmatpush1.msra.mxu0 0.0
        %1966 = vmatprep.subr.mxu0 0.0
        %1967 = vmatpush1.msra.mxu0 0.0
        %1968 = vmatprep.subr.mxu0 0.0
        %1969 = vmatpush1.msra.mxu0 0.0
        %1970 = vmatprep.subr.mxu0 0.0
        %1971 = vmatpush1.msra.mxu0 0.0
        %1972 = vmatprep.subr.mxu0 0.0
        %1973 = vmatpush1.msra.mxu0 0.0
        %1974 = vmatprep.subr.mxu0 0.0
        %1975 = vmatpush1.msra.mxu0 0.0
        %1976 = vmatprep.subr.mxu0 0.0
        %1977 = vmatpush1.msra.mxu0 0.0
        %1978 = vmatprep.subr.mxu0 0.0
        %1979 = vmatpush1.msra.mxu0 0.0
        %1980 = vmatprep.mubr.f32.mxu0 0.0
        %1981 = vmatmul.mubr.f32.gmra.mrb[0].mxu0 %v1905
        %v1982 = vpop.f32.mrb[0].mxu0
        %v1983 = vadd.f32 0.0, %v1982
        %v1984 = vpop.f32.mrb[0].mxu0
        %1985 = vmatprep.mubr.f32.mxu0 0.0
        %1986 = vmatmul.mubr.f32.gmra.mrb[0].mxu0 %v1908
        %v1987 = vpop.f32.mrb[0].mxu0
        %v1988 = vadd.f32 0.0, %v1987
        %v1989 = vpop.f32.mrb[0].mxu0
        %1990 = vmatprep.mubr.f32.mxu0 0.0
        %1991 = vmatmul.mubr.f32.gmra.mrb[0].mxu0 %v1911
        %v1992 = vpop.f32.mrb[0].mxu0
        %v1993 = vadd.f32 0.0, %v1992
        %v1994 = vpop.f32.mrb[0].mxu0
        %1995 = vmatprep.mubr.f32.mxu0 0.0
        %1996 = vmatmul.mubr.f32.gmra.mrb[0].mxu0 %v1914
        %v1997 = vpop.f32.mrb[0].mxu0
        %v1998 = vadd.f32 0.0, %v1997
        %v1999 = vpop.f32.mrb[0].mxu0
        %2000 = vdwg.mxu0
        %v2002 = vsel %vm1080, %v1383, 0
        %v2005 = vsel %vm1080, %v1388, 0
        %v2008 = vsel %vm1080, %v1464, 0
        %v2011 = vsel %vm1080, %v1469, 0
        %2013 = vmatprep.subr.mxu0 0.0
        %2014 = vmatpush1.msra.mxu0 %v1472
        %2015 = vmatprep.subr.mxu0 0.0
        %2016 = vmatpush1.msra.mxu0 %v1473
        %2017 = vmatprep.subr.mxu0 0.0
        %2018 = vmatpush1.msra.mxu0 %v1474
        %2019 = vmatprep.subr.mxu0 0.0
        %2020 = vmatpush1.msra.mxu0 %v1475
        %2021 = vmatprep.subr.mxu0 0.0
        %2022 = vmatpush1.msra.mxu0 0.0
        %2023 = vmatprep.subr.mxu0 0.0
        %2024 = vmatpush1.msra.mxu0 0.0
        %2025 = vmatprep.subr.mxu0 0.0
        %2026 = vmatpush1.msra.mxu0 0.0
        %2027 = vmatprep.subr.mxu0 0.0
        %2028 = vmatpush1.msra.mxu0 0.0
        %2029 = vmatprep.subr.mxu0 0.0
        %2030 = vmatpush1.msra.mxu0 0.0
        %2031 = vmatprep.subr.mxu0 0.0
        %2032 = vmatpush1.msra.mxu0 0.0
        %2033 = vmatprep.subr.mxu0 0.0
        %2034 = vmatpush1.msra.mxu0 0.0
        %2035 = vmatprep.subr.mxu0 0.0
        %2036 = vmatpush1.msra.mxu0 0.0
        %2037 = vmatprep.subr.mxu0 0.0
        %2038 = vmatpush1.msra.mxu0 0.0
        %2039 = vmatprep.subr.mxu0 0.0
        %2040 = vmatpush1.msra.mxu0 0.0
        %2041 = vmatprep.subr.mxu0 0.0
        %2042 = vmatpush1.msra.mxu0 0.0
        %2043 = vmatprep.subr.mxu0 0.0
        %2044 = vmatpush1.msra.mxu0 0.0
        %2045 = vmatprep.subr.mxu0 0.0
        %2046 = vmatpush1.msra.mxu0 0.0
        %2047 = vmatprep.subr.mxu0 0.0
        %2048 = vmatpush1.msra.mxu0 0.0
        %2049 = vmatprep.subr.mxu0 0.0
        %2050 = vmatpush1.msra.mxu0 0.0
        %2051 = vmatprep.subr.mxu0 0.0
        %2052 = vmatpush1.msra.mxu0 0.0
        %2053 = vmatprep.subr.mxu0 0.0
        %2054 = vmatpush1.msra.mxu0 0.0
        %2055 = vmatprep.subr.mxu0 0.0
        %2056 = vmatpush1.msra.mxu0 0.0
        %2057 = vmatprep.subr.mxu0 0.0
        %2058 = vmatpush1.msra.mxu0 0.0
        %2059 = vmatprep.subr.mxu0 0.0
        %2060 = vmatpush1.msra.mxu0 0.0
        %2061 = vmatprep.subr.mxu0 0.0
        %2062 = vmatpush1.msra.mxu0 0.0
        %2063 = vmatprep.subr.mxu0 0.0
        %2064 = vmatpush1.msra.mxu0 0.0
        %2065 = vmatprep.subr.mxu0 0.0
        %2066 = vmatpush1.msra.mxu0 0.0
        %2067 = vmatprep.subr.mxu0 0.0
        %2068 = vmatpush1.msra.mxu0 0.0
        %2069 = vmatprep.subr.mxu0 0.0
        %2070 = vmatpush1.msra.mxu0 0.0
        %2071 = vmatprep.subr.mxu0 0.0
        %2072 = vmatpush1.msra.mxu0 0.0
        %2073 = vmatprep.subr.mxu0 0.0
        %2074 = vmatpush1.msra.mxu0 0.0
        %2075 = vmatprep.subr.mxu0 0.0
        %2076 = vmatpush1.msra.mxu0 0.0
        %2077 = vmatprep.mubr.f32.mxu0 0.0
        %2078 = vmatmul.mubr.f32.gmra.mrb[0].mxu0 %v2002
        %v2079 = vpop.f32.mrb[0].mxu0
        %v2080 = vadd.f32 %v1983, %v2079
        %v2081 = vpop.f32.mrb[0].mxu0
        %2082 = vmatprep.mubr.f32.mxu0 0.0
        %2083 = vmatmul.mubr.f32.gmra.mrb[0].mxu0 %v2005
        %v2084 = vpop.f32.mrb[0].mxu0
        %v2085 = vadd.f32 %v1988, %v2084
        %v2086 = vpop.f32.mrb[0].mxu0
        %2087 = vmatprep.mubr.f32.mxu0 0.0
        %2088 = vmatmul.mubr.f32.gmra.mrb[0].mxu0 %v2008
        %v2089 = vpop.f32.mrb[0].mxu0
        %v2090 = vadd.f32 %v1993, %v2089
        %v2091 = vpop.f32.mrb[0].mxu0
        %2092 = vmatprep.mubr.f32.mxu0 0.0
        %2093 = vmatmul.mubr.f32.gmra.mrb[0].mxu0 %v2011
        %v2094 = vpop.f32.mrb[0].mxu0
        %v2095 = vadd.f32 %v1998, %v2094
        %v2096 = vpop.f32.mrb[0].mxu0
        %2097 = vdwg.mxu0
        %2098 = vrot.lane.b32.xlu0 %v826, 64
        %v2099 = vpop.permute.xlu0 %2098
        %2100 = vrot.lane.b32.xlu0 %v831, 64
        %v2101 = vpop.permute.xlu0 %2100
        %2102 = vrot.lane.b32.xlu0 %v934, 64
        %v2103 = vpop.permute.xlu0 %2102
        %2104 = vrot.lane.b32.xlu0 %v939, 64
        %v2105 = vpop.permute.xlu0 %2104
        %2106 = vrot.lane.b32.xlu0 %v944, 64
        %v2107 = vpop.permute.xlu0 %2106
        %v2108 = vsel %vm1080, %v2099, 0
        %v2110 = vsel %vm1080, %v2101, 0
        %v2112 = vsel %vm1080, %v2103, 0
        %v2114 = vsel %vm1080, %v2105, 0
        %v2116 = vsel %vm1080, %v2107, 0
        %2118 = vmatprep.subr.mxu0 0.0
        %2119 = vmatpush1.xpose.msra.mxu0 %v2112
        %2120 = vmatprep.subr.mxu0 0.0
        %2121 = vmatpush1.xpose.msra.mxu0 %v2114
        %2122 = vmatprep.subr.mxu0 0.0
        %2123 = vmatpush1.xpose.msra.mxu0 %v2116
        %2124 = vmatprep.subr.mxu0 0.0
        %2125 = vmatpush1.xpose.msra.mxu0 0.0
        %2126 = vmatprep.subr.mxu0 0.0
        %2127 = vmatpush1.xpose.msra.mxu0 0.0
        %2128 = vmatprep.subr.mxu0 0.0
        %2129 = vmatpush1.xpose.msra.mxu0 0.0
        %2130 = vmatprep.subr.mxu0 0.0
        %2131 = vmatpush1.xpose.msra.mxu0 0.0
        %2132 = vmatprep.subr.mxu0 0.0
        %2133 = vmatpush1.xpose.msra.mxu0 0.0
        %2134 = vmatprep.subr.mxu0 0.0
        %2135 = vmatpush1.xpose.msra.mxu0 0.0
        %2136 = vmatprep.subr.mxu0 0.0
        %2137 = vmatpush1.xpose.msra.mxu0 0.0
        %2138 = vmatprep.subr.mxu0 0.0
        %2139 = vmatpush1.xpose.msra.mxu0 0.0
        %2140 = vmatprep.subr.mxu0 0.0
        %2141 = vmatpush1.xpose.msra.mxu0 0.0
        %2142 = vmatprep.subr.mxu0 0.0
        %2143 = vmatpush1.xpose.msra.mxu0 0.0
        %2144 = vmatprep.subr.mxu0 0.0
        %2145 = vmatpush1.xpose.msra.mxu0 0.0
        %2146 = vmatprep.subr.mxu0 0.0
        %2147 = vmatpush1.xpose.msra.mxu0 0.0
        %2148 = vmatprep.subr.mxu0 0.0
        %2149 = vmatpush1.xpose.msra.mxu0 0.0
        %2150 = vmatprep.subr.mxu0 0.0
        %2151 = vmatpush1.xpose.msra.mxu0 0.0
        %2152 = vmatprep.subr.mxu0 0.0
        %2153 = vmatpush1.xpose.msra.mxu0 0.0
        %2154 = vmatprep.subr.mxu0 0.0
        %2155 = vmatpush1.xpose.msra.mxu0 0.0
        %2156 = vmatprep.subr.mxu0 0.0
        %2157 = vmatpush1.xpose.msra.mxu0 0.0
        %2158 = vmatprep.subr.mxu0 0.0
        %2159 = vmatpush1.xpose.msra.mxu0 0.0
        %2160 = vmatprep.subr.mxu0 0.0
        %2161 = vmatpush1.xpose.msra.mxu0 0.0
        %2162 = vmatprep.subr.mxu0 0.0
        %2163 = vmatpush1.xpose.msra.mxu0 0.0
        %2164 = vmatprep.subr.mxu0 0.0
        %2165 = vmatpush1.xpose.msra.mxu0 0.0
        %2166 = vmatprep.subr.mxu0 0.0
        %2167 = vmatpush1.xpose.msra.mxu0 0.0
        %2168 = vmatprep.subr.mxu0 0.0
        %2169 = vmatpush1.xpose.msra.mxu0 0.0
        %2170 = vmatprep.subr.mxu0 0.0
        %2171 = vmatpush1.xpose.msra.mxu0 0.0
        %2172 = vmatprep.subr.mxu0 0.0
        %2173 = vmatpush1.xpose.msra.mxu0 0.0
        %2174 = vmatprep.subr.mxu0 0.0
        %2175 = vmatpush1.xpose.msra.mxu0 0.0
        %2176 = vmatprep.subr.mxu0 0.0
        %2177 = vmatpush1.xpose.msra.mxu0 0.0
        %2178 = vmatprep.subr.mxu0 0.0
        %2179 = vmatpush1.xpose.msra.mxu0 0.0
        %2180 = vmatprep.subr.mxu0 0.0
        %2181 = vmatpush1.xpose.msra.mxu0 0.0
        %2182 = vmatprep.mubr.f32.mxu0 0.0
        %2183 = vmatmul.mubr.f32.gmra.mrb[0].mxu0 %v2108
        %v2184 = vpop.f32.mrb[0].mxu0
        %v2185 = vadd.f32 0.0, %v2184
        %v2186 = vpop.f32.mrb[0].mxu0
        %2187 = vmatprep.mubr.f32.mxu0 0.0
        %2188 = vmatmul.mubr.f32.gmra.mrb[0].mxu0 %v2110
        %v2189 = vpop.f32.mrb[0].mxu0
        %v2190 = vadd.f32 0.0, %v2189
        %v2191 = vpop.f32.mrb[0].mxu0
        %2192 = vdwg.mxu0
        %2193 = vrot.lane.b32.xlu0 %v836, 64
        %v2194 = vpop.permute.xlu0 %2193
        %2195 = vrot.lane.b32.xlu0 %v841, 64
        %v2196 = vpop.permute.xlu0 %2195
        %2197 = vrot.lane.b32.xlu0 %v949, 64
        %v2198 = vpop.permute.xlu0 %2197
        %2199 = vrot.lane.b32.xlu0 %v954, 64
        %v2200 = vpop.permute.xlu0 %2199
        %2201 = vrot.lane.b32.xlu0 %v959, 64
        %v2202 = vpop.permute.xlu0 %2201
        %v2203 = vsel %vm1080, %v2194, 0
        %v2205 = vsel %vm1080, %v2196, 0
        %v2207 = vsel %vm1080, %v2198, 0
        %v2209 = vsel %vm1080, %v2200, 0
        %v2211 = vsel %vm1080, %v2202, 0
        %2213 = vmatprep.subr.mxu0 0.0
        %2214 = vmatpush1.xpose.msra.mxu0 %v2207
        %2215 = vmatprep.subr.mxu0 0.0
        %2216 = vmatpush1.xpose.msra.mxu0 %v2209
        %2217 = vmatprep.subr.mxu0 0.0
        %2218 = vmatpush1.xpose.msra.mxu0 %v2211
        %2219 = vmatprep.subr.mxu0 0.0
        %2220 = vmatpush1.xpose.msra.mxu0 0.0
        %2221 = vmatprep.subr.mxu0 0.0
        %2222 = vmatpush1.xpose.msra.mxu0 0.0
        %2223 = vmatprep.subr.mxu0 0.0
        %2224 = vmatpush1.xpose.msra.mxu0 0.0
        %2225 = vmatprep.subr.mxu0 0.0
        %2226 = vmatpush1.xpose.msra.mxu0 0.0
        %2227 = vmatprep.subr.mxu0 0.0
        %2228 = vmatpush1.xpose.msra.mxu0 0.0
        %2229 = vmatprep.subr.mxu0 0.0
        %2230 = vmatpush1.xpose.msra.mxu0 0.0
        %2231 = vmatprep.subr.mxu0 0.0
        %2232 = vmatpush1.xpose.msra.mxu0 0.0
        %2233 = vmatprep.subr.mxu0 0.0
        %2234 = vmatpush1.xpose.msra.mxu0 0.0
        %2235 = vmatprep.subr.mxu0 0.0
        %2236 = vmatpush1.xpose.msra.mxu0 0.0
        %2237 = vmatprep.subr.mxu0 0.0
        %2238 = vmatpush1.xpose.msra.mxu0 0.0
        %2239 = vmatprep.subr.mxu0 0.0
        %2240 = vmatpush1.xpose.msra.mxu0 0.0
        %2241 = vmatprep.subr.mxu0 0.0
        %2242 = vmatpush1.xpose.msra.mxu0 0.0
        %2243 = vmatprep.subr.mxu0 0.0
        %2244 = vmatpush1.xpose.msra.mxu0 0.0
        %2245 = vmatprep.subr.mxu0 0.0
        %2246 = vmatpush1.xpose.msra.mxu0 0.0
        %2247 = vmatprep.subr.mxu0 0.0
        %2248 = vmatpush1.xpose.msra.mxu0 0.0
        %2249 = vmatprep.subr.mxu0 0.0
        %2250 = vmatpush1.xpose.msra.mxu0 0.0
        %2251 = vmatprep.subr.mxu0 0.0
        %2252 = vmatpush1.xpose.msra.mxu0 0.0
        %2253 = vmatprep.subr.mxu0 0.0
        %2254 = vmatpush1.xpose.msra.mxu0 0.0
        %2255 = vmatprep.subr.mxu0 0.0
        %2256 = vmatpush1.xpose.msra.mxu0 0.0
        %2257 = vmatprep.subr.mxu0 0.0
        %2258 = vmatpush1.xpose.msra.mxu0 0.0
        %2259 = vmatprep.subr.mxu0 0.0
        %2260 = vmatpush1.xpose.msra.mxu0 0.0
        %2261 = vmatprep.subr.mxu0 0.0
        %2262 = vmatpush1.xpose.msra.mxu0 0.0
        %2263 = vmatprep.subr.mxu0 0.0
        %2264 = vmatpush1.xpose.msra.mxu0 0.0
        %2265 = vmatprep.subr.mxu0 0.0
        %2266 = vmatpush1.xpose.msra.mxu0 0.0
        %2267 = vmatprep.subr.mxu0 0.0
        %2268 = vmatpush1.xpose.msra.mxu0 0.0
        %2269 = vmatprep.subr.mxu0 0.0
        %2270 = vmatpush1.xpose.msra.mxu0 0.0
        %2271 = vmatprep.subr.mxu0 0.0
        %2272 = vmatpush1.xpose.msra.mxu0 0.0
        %2273 = vmatprep.subr.mxu0 0.0
        %2274 = vmatpush1.xpose.msra.mxu0 0.0
        %2275 = vmatprep.subr.mxu0 0.0
        %2276 = vmatpush1.xpose.msra.mxu0 0.0
        %2277 = vmatprep.mubr.f32.mxu0 0.0
        %2278 = vmatmul.mubr.f32.gmra.mrb[0].mxu0 %v2203
        %v2279 = vpop.f32.mrb[0].mxu0
        %v2280 = vadd.f32 0.0, %v2279
        %v2281 = vpop.f32.mrb[0].mxu0
        %2282 = vmatprep.mubr.f32.mxu0 0.0
        %2283 = vmatmul.mubr.f32.gmra.mrb[0].mxu0 %v2205
        %v2284 = vpop.f32.mrb[0].mxu0
        %v2285 = vadd.f32 0.0, %v2284
        %v2286 = vpop.f32.mrb[0].mxu0
        %2287 = vdwg.mxu0
        %v2288 = vmul.f32 %v2185, 0.17677669
        %v2289 = vmul.f32 %v2190, 0.17677669
        %v2290 = vmul.f32 %v2280, 0.17677669
        %v2291 = vmul.f32 %v2285, 0.17677669
        %v2292 = vsel %vm1265, %v2288, -inf
        %2293 = vmax.xlane.f32.xlu0 %v2292
        %v2294 = vpop.xlane.xlu0 %2293
        %v2295 = vsel %vm1265, %v2289, -inf
        %2296 = vmax.xlane.f32.xlu0 %v2295
        %v2297 = vpop.xlane.xlu0 %2296
        %v2298 = vsel %vm1265, %v2290, -inf
        %2299 = vmax.xlane.f32.xlu0 %v2298
        %v2300 = vpop.xlane.xlu0 %2299
        %v2301 = vsel %vm1265, %v2291, -inf
        %2302 = vmax.xlane.f32.xlu0 %v2301
        %v2303 = vpop.xlane.xlu0 %2302
        %v2304 = vsub.f32 %v2288, %v2294
        %v2305 = vsub.f32 %v2289, %v2297
        %v2306 = vsub.f32 %v2290, %v2300
        %v2307 = vsub.f32 %v2291, %v2303
        %v2308 = vmul.f32 %v2304, 1.442695
        %v2309 = vpow.pop %v2308
        %v2310 = vmul.f32 %v2305, 1.442695
        %v2311 = vpow.pop %v2310
        %v2312 = vmul.f32 %v2306, 1.442695
        %v2313 = vpow.pop %v2312
        %v2314 = vmul.f32 %v2307, 1.442695
        %v2315 = vpow.pop %v2314
        %v2316 = vsel %vm1265, %v2309, 0.0
        %2317 = vadd.xlane.f32.xlu0 %v2316
        %v2318 = vpop.xlane.xlu0 %2317
        %v2319 = vsel %vm1265, %v2311, 0.0
        %2320 = vadd.xlane.f32.xlu0 %v2319
        %v2321 = vpop.xlane.xlu0 %2320
        %v2322 = vsel %vm1265, %v2313, 0.0
        %2323 = vadd.xlane.f32.xlu0 %v2322
        %v2324 = vpop.xlane.xlu0 %2323
        %v2325 = vsel %vm1265, %v2315, 0.0
        %2326 = vadd.xlane.f32.xlu0 %v2325
        %v2327 = vpop.xlane.xlu0 %2326
        %v2328 = vrcp.pop %v2318
        %v2329 = vrcp.pop %v2321
        %v2330 = vrcp.pop %v2324
        %v2331 = vrcp.pop %v2327
        %v2332 = vmul.f32 %v2309, %v2328
        %v2333 = vmul.f32 %v2311, %v2329
        %v2334 = vmul.f32 %v2313, %v2330
        %v2335 = vmul.f32 %v2315, %v2331
        %2336 = vrot.lane.b32.xlu0 %v1052, 64
        %v2337 = vpop.permute.xlu0 %2336
        %2338 = vrot.lane.b32.xlu0 %v1057, 64
        %v2339 = vpop.permute.xlu0 %2338
        %2340 = vrot.lane.b32.xlu0 %v1062, 64
        %v2341 = vpop.permute.xlu0 %2340
        %v2346 = vsel %vm1265, %v2332, 0
        %v2349 = vsel %vm1265, %v2333, 0
        %2351 = vmatprep.subr.mxu0 0.0
        %2352 = vmatpush1.msra.mxu0 %v2337
        %2353 = vmatprep.subr.mxu0 0.0
        %2354 = vmatpush1.msra.mxu0 %v2339
        %2355 = vmatprep.subr.mxu0 0.0
        %2356 = vmatpush1.msra.mxu0 %v2341
        %2357 = vmatprep.subr.mxu0 0.0
        %2358 = vmatpush1.msra.mxu0 0.0
        %2359 = vmatprep.subr.mxu0 0.0
        %2360 = vmatpush1.msra.mxu0 0.0
        %2361 = vmatprep.subr.mxu0 0.0
        %2362 = vmatpush1.msra.mxu0 0.0
        %2363 = vmatprep.subr.mxu0 0.0
        %2364 = vmatpush1.msra.mxu0 0.0
        %2365 = vmatprep.subr.mxu0 0.0
        %2366 = vmatpush1.msra.mxu0 0.0
        %2367 = vmatprep.subr.mxu0 0.0
        %2368 = vmatpush1.msra.mxu0 0.0
        %2369 = vmatprep.subr.mxu0 0.0
        %2370 = vmatpush1.msra.mxu0 0.0
        %2371 = vmatprep.subr.mxu0 0.0
        %2372 = vmatpush1.msra.mxu0 0.0
        %2373 = vmatprep.subr.mxu0 0.0
        %2374 = vmatpush1.msra.mxu0 0.0
        %2375 = vmatprep.subr.mxu0 0.0
        %2376 = vmatpush1.msra.mxu0 0.0
        %2377 = vmatprep.subr.mxu0 0.0
        %2378 = vmatpush1.msra.mxu0 0.0
        %2379 = vmatprep.subr.mxu0 0.0
        %2380 = vmatpush1.msra.mxu0 0.0
        %2381 = vmatprep.subr.mxu0 0.0
        %2382 = vmatpush1.msra.mxu0 0.0
        %2383 = vmatprep.subr.mxu0 0.0
        %2384 = vmatpush1.msra.mxu0 0.0
        %2385 = vmatprep.subr.mxu0 0.0
        %2386 = vmatpush1.msra.mxu0 0.0
        %2387 = vmatprep.subr.mxu0 0.0
        %2388 = vmatpush1.msra.mxu0 0.0
        %2389 = vmatprep.subr.mxu0 0.0
        %2390 = vmatpush1.msra.mxu0 0.0
        %2391 = vmatprep.subr.mxu0 0.0
        %2392 = vmatpush1.msra.mxu0 0.0
        %2393 = vmatprep.subr.mxu0 0.0
        %2394 = vmatpush1.msra.mxu0 0.0
        %2395 = vmatprep.subr.mxu0 0.0
        %2396 = vmatpush1.msra.mxu0 0.0
        %2397 = vmatprep.subr.mxu0 0.0
        %2398 = vmatpush1.msra.mxu0 0.0
        %2399 = vmatprep.subr.mxu0 0.0
        %2400 = vmatpush1.msra.mxu0 0.0
        %2401 = vmatprep.subr.mxu0 0.0
        %2402 = vmatpush1.msra.mxu0 0.0
        %2403 = vmatprep.subr.mxu0 0.0
        %2404 = vmatpush1.msra.mxu0 0.0
        %2405 = vmatprep.subr.mxu0 0.0
        %2406 = vmatpush1.msra.mxu0 0.0
        %2407 = vmatprep.subr.mxu0 0.0
        %2408 = vmatpush1.msra.mxu0 0.0
        %2409 = vmatprep.subr.mxu0 0.0
        %2410 = vmatpush1.msra.mxu0 0.0
        %2411 = vmatprep.subr.mxu0 0.0
        %2412 = vmatpush1.msra.mxu0 0.0
        %2413 = vmatprep.subr.mxu0 0.0
        %2414 = vmatpush1.msra.mxu0 0.0
        %2415 = vmatprep.mubr.f32.mxu0 0.0
        %2416 = vmatmul.mubr.f32.gmra.mrb[0].mxu0 %v2346
        %v2417 = vpop.f32.mrb[0].mxu0
        %v2418 = vadd.f32 0.0, %v2417
        %v2419 = vpop.f32.mrb[0].mxu0
        %2420 = vmatprep.mubr.f32.mxu0 0.0
        %2421 = vmatmul.mubr.f32.gmra.mrb[0].mxu0 %v2349
        %v2422 = vpop.f32.mrb[0].mxu0
        %v2423 = vadd.f32 0.0, %v2422
        %v2424 = vpop.f32.mrb[0].mxu0
        %2425 = vdwg.mxu0
        %2426 = vrot.lane.b32.xlu0 %v1067, 64
        %v2427 = vpop.permute.xlu0 %2426
        %2428 = vrot.lane.b32.xlu0 %v1072, 64
        %v2429 = vpop.permute.xlu0 %2428
        %2430 = vrot.lane.b32.xlu0 %v1077, 64
        %v2431 = vpop.permute.xlu0 %2430
        %v2436 = vsel %vm1265, %v2334, 0
        %v2439 = vsel %vm1265, %v2335, 0
        %2441 = vmatprep.subr.mxu0 0.0
        %2442 = vmatpush1.msra.mxu0 %v2427
        %2443 = vmatprep.subr.mxu0 0.0
        %2444 = vmatpush1.msra.mxu0 %v2429
        %2445 = vmatprep.subr.mxu0 0.0
        %2446 = vmatpush1.msra.mxu0 %v2431
        %2447 = vmatprep.subr.mxu0 0.0
        %2448 = vmatpush1.msra.mxu0 0.0
        %2449 = vmatprep.subr.mxu0 0.0
        %2450 = vmatpush1.msra.mxu0 0.0
        %2451 = vmatprep.subr.mxu0 0.0
        %2452 = vmatpush1.msra.mxu0 0.0
        %2453 = vmatprep.subr.mxu0 0.0
        %2454 = vmatpush1.msra.mxu0 0.0
        %2455 = vmatprep.subr.mxu0 0.0
        %2456 = vmatpush1.msra.mxu0 0.0
        %2457 = vmatprep.subr.mxu0 0.0
        %2458 = vmatpush1.msra.mxu0 0.0
        %2459 = vmatprep.subr.mxu0 0.0
        %2460 = vmatpush1.msra.mxu0 0.0
        %2461 = vmatprep.subr.mxu0 0.0
        %2462 = vmatpush1.msra.mxu0 0.0
        %2463 = vmatprep.subr.mxu0 0.0
        %2464 = vmatpush1.msra.mxu0 0.0
        %2465 = vmatprep.subr.mxu0 0.0
        %2466 = vmatpush1.msra.mxu0 0.0
        %2467 = vmatprep.subr.mxu0 0.0
        %2468 = vmatpush1.msra.mxu0 0.0
        %2469 = vmatprep.subr.mxu0 0.0
        %2470 = vmatpush1.msra.mxu0 0.0
        %2471 = vmatprep.subr.mxu0 0.0
        %2472 = vmatpush1.msra.mxu0 0.0
        %2473 = vmatprep.subr.mxu0 0.0
        %2474 = vmatpush1.msra.mxu0 0.0
        %2475 = vmatprep.subr.mxu0 0.0
        %2476 = vmatpush1.msra.mxu0 0.0
        %2477 = vmatprep.subr.mxu0 0.0
        %2478 = vmatpush1.msra.mxu0 0.0
        %2479 = vmatprep.subr.mxu0 0.0
        %2480 = vmatpush1.msra.mxu0 0.0
        %2481 = vmatprep.subr.mxu0 0.0
        %2482 = vmatpush1.msra.mxu0 0.0
        %2483 = vmatprep.subr.mxu0 0.0
        %2484 = vmatpush1.msra.mxu0 0.0
        %2485 = vmatprep.subr.mxu0 0.0
        %2486 = vmatpush1.msra.mxu0 0.0
        %2487 = vmatprep.subr.mxu0 0.0
        %2488 = vmatpush1.msra.mxu0 0.0
        %2489 = vmatprep.subr.mxu0 0.0
        %2490 = vmatpush1.msra.mxu0 0.0
        %2491 = vmatprep.subr.mxu0 0.0
        %2492 = vmatpush1.msra.mxu0 0.0
        %2493 = vmatprep.subr.mxu0 0.0
        %2494 = vmatpush1.msra.mxu0 0.0
        %2495 = vmatprep.subr.mxu0 0.0
        %2496 = vmatpush1.msra.mxu0 0.0
        %2497 = vmatprep.subr.mxu0 0.0
        %2498 = vmatpush1.msra.mxu0 0.0
        %2499 = vmatprep.subr.mxu0 0.0
        %2500 = vmatpush1.msra.mxu0 0.0
        %2501 = vmatprep.subr.mxu0 0.0
        %2502 = vmatpush1.msra.mxu0 0.0
        %2503 = vmatprep.subr.mxu0 0.0
        %2504 = vmatpush1.msra.mxu0 0.0
        %2505 = vmatprep.mubr.f32.mxu0 0.0
        %2506 = vmatmul.mubr.f32.gmra.mrb[0].mxu0 %v2436
        %v2507 = vpop.f32.mrb[0].mxu0
        %v2508 = vadd.f32 0.0, %v2507
        %v2509 = vpop.f32.mrb[0].mxu0
        %2510 = vmatprep.mubr.f32.mxu0 0.0
        %2511 = vmatmul.mubr.f32.gmra.mrb[0].mxu0 %v2439
        %v2512 = vpop.f32.mrb[0].mxu0
        %v2513 = vadd.f32 0.0, %v2512
        %v2514 = vpop.f32.mrb[0].mxu0
        %2515 = vdwg.mxu0
        %v2516 = vld [vmem:[#allocation11 + $0x40] sm:$0xff]
        %v2517 = vld [vmem:[#allocation11 + $0x48] sm:$0xff]
        %v2518 = vld [vmem:[#allocation11 + $0x50] sm:$0xff]
        %v2519 = vld [vmem:[#allocation11 + $0x58] sm:$0xff]
        %v2521 = vsel %vm1080, %v2418, 0
        %v2524 = vsel %vm1080, %v2423, 0
        %v2527 = vsel %vm1080, %v2508, 0
        %v2530 = vsel %vm1080, %v2513, 0
        %2532 = vmatprep.subr.mxu0 0.0
        %2533 = vmatpush1.msra.mxu0 %v2516
        %2534 = vmatprep.subr.mxu0 0.0
        %2535 = vmatpush1.msra.mxu0 %v2517
        %2536 = vmatprep.subr.mxu0 0.0
        %2537 = vmatpush1.msra.mxu0 %v2518
        %2538 = vmatprep.subr.mxu0 0.0
        %2539 = vmatpush1.msra.mxu0 %v2519
        %2540 = vmatprep.subr.mxu0 0.0
        %2541 = vmatpush1.msra.mxu0 0.0
        %2542 = vmatprep.subr.mxu0 0.0
        %2543 = vmatpush1.msra.mxu0 0.0
        %2544 = vmatprep.subr.mxu0 0.0
        %2545 = vmatpush1.msra.mxu0 0.0
        %2546 = vmatprep.subr.mxu0 0.0
        %2547 = vmatpush1.msra.mxu0 0.0
        %2548 = vmatprep.subr.mxu0 0.0
        %2549 = vmatpush1.msra.mxu0 0.0
        %2550 = vmatprep.subr.mxu0 0.0
        %2551 = vmatpush1.msra.mxu0 0.0
        %2552 = vmatprep.subr.mxu0 0.0
        %2553 = vmatpush1.msra.mxu0 0.0
        %2554 = vmatprep.subr.mxu0 0.0
        %2555 = vmatpush1.msra.mxu0 0.0
        %2556 = vmatprep.subr.mxu0 0.0
        %2557 = vmatpush1.msra.mxu0 0.0
        %2558 = vmatprep.subr.mxu0 0.0
        %2559 = vmatpush1.msra.mxu0 0.0
        %2560 = vmatprep.subr.mxu0 0.0
        %2561 = vmatpush1.msra.mxu0 0.0
        %2562 = vmatprep.subr.mxu0 0.0
        %2563 = vmatpush1.msra.mxu0 0.0
        %2564 = vmatprep.subr.mxu0 0.0
        %2565 = vmatpush1.msra.mxu0 0.0
        %2566 = vmatprep.subr.mxu0 0.0
        %2567 = vmatpush1.msra.mxu0 0.0
        %2568 = vmatprep.subr.mxu0 0.0
        %2569 = vmatpush1.msra.mxu0 0.0
        %2570 = vmatprep.subr.mxu0 0.0
        %2571 = vmatpush1.msra.mxu0 0.0
        %2572 = vmatprep.subr.mxu0 0.0
        %2573 = vmatpush1.msra.mxu0 0.0
        %2574 = vmatprep.subr.mxu0 0.0
        %2575 = vmatpush1.msra.mxu0 0.0
        %2576 = vmatprep.subr.mxu0 0.0
        %2577 = vmatpush1.msra.mxu0 0.0
        %2578 = vmatprep.subr.mxu0 0.0
        %2579 = vmatpush1.msra.mxu0 0.0
        %2580 = vmatprep.subr.mxu0 0.0
        %2581 = vmatpush1.msra.mxu0 0.0
        %2582 = vmatprep.subr.mxu0 0.0
        %2583 = vmatpush1.msra.mxu0 0.0
        %2584 = vmatprep.subr.mxu0 0.0
        %2585 = vmatpush1.msra.mxu0 0.0
        %2586 = vmatprep.subr.mxu0 0.0
        %2587 = vmatpush1.msra.mxu0 0.0
        %2588 = vmatprep.subr.mxu0 0.0
        %2589 = vmatpush1.msra.mxu0 0.0
        %2590 = vmatprep.subr.mxu0 0.0
        %2591 = vmatpush1.msra.mxu0 0.0
        %2592 = vmatprep.subr.mxu0 0.0
        %2593 = vmatpush1.msra.mxu0 0.0
        %2594 = vmatprep.subr.mxu0 0.0
        %2595 = vmatpush1.msra.mxu0 0.0
        %2596 = vmatprep.mubr.f32.mxu0 0.0
        %2597 = vmatmul.mubr.f32.gmra.mrb[0].mxu0 %v2521
        %v2598 = vpop.f32.mrb[0].mxu0
        %v2599 = vadd.f32 0.0, %v2598
        %v2600 = vpop.f32.mrb[0].mxu0
        %2601 = vmatprep.mubr.f32.mxu0 0.0
        %2602 = vmatmul.mubr.f32.gmra.mrb[0].mxu0 %v2524
        %v2603 = vpop.f32.mrb[0].mxu0
        %v2604 = vadd.f32 0.0, %v2603
        %v2605 = vpop.f32.mrb[0].mxu0
        %2606 = vmatprep.mubr.f32.mxu0 0.0
        %2607 = vmatmul.mubr.f32.gmra.mrb[0].mxu0 %v2527
        %v2608 = vpop.f32.mrb[0].mxu0
        %v2609 = vadd.f32 0.0, %v2608
        %v2610 = vpop.f32.mrb[0].mxu0
        %2611 = vmatprep.mubr.f32.mxu0 0.0
        %2612 = vmatmul.mubr.f32.gmra.mrb[0].mxu0 %v2530
        %v2613 = vpop.f32.mrb[0].mxu0
        %v2614 = vadd.f32 0.0, %v2613
        %v2615 = vpop.f32.mrb[0].mxu0
        %2616 = vdwg.mxu0
        %v2617 = vadd.f32 %v2080, %v2599
        %v2618 = vadd.f32 %v2085, %v2604
        %v2619 = vadd.f32 %v2090, %v2609
        %v2620 = vadd.f32 %v2095, %v2614
        %2621 = vrot.lane.b32.xlu0 %v826, 32
        %v2622 = vpop.permute.xlu0 %2621
        %2623 = vrot.lane.b32.xlu0 %v831, 32
        %v2624 = vpop.permute.xlu0 %2623
        %2625 = vrot.lane.b32.xlu0 %v934, 32
        %v2626 = vpop.permute.xlu0 %2625
        %2627 = vrot.lane.b32.xlu0 %v939, 32
        %v2628 = vpop.permute.xlu0 %2627
        %2629 = vrot.lane.b32.xlu0 %v944, 32
        %v2630 = vpop.permute.xlu0 %2629
        %v2631 = vsel %vm1080, %v2622, 0
        %v2633 = vsel %vm1080, %v2624, 0
        %v2635 = vsel %vm1080, %v2626, 0
        %v2637 = vsel %vm1080, %v2628, 0
        %v2639 = vsel %vm1080, %v2630, 0
        %2641 = vmatprep.subr.mxu0 0.0
        %2642 = vmatpush1.xpose.msra.mxu0 %v2635
        %2643 = vmatprep.subr.mxu0 0.0
        %2644 = vmatpush1.xpose.msra.mxu0 %v2637
        %2645 = vmatprep.subr.mxu0 0.0
        %2646 = vmatpush1.xpose.msra.mxu0 %v2639
        %2647 = vmatprep.subr.mxu0 0.0
        %2648 = vmatpush1.xpose.msra.mxu0 0.0
        %2649 = vmatprep.subr.mxu0 0.0
        %2650 = vmatpush1.xpose.msra.mxu0 0.0
        %2651 = vmatprep.subr.mxu0 0.0
        %2652 = vmatpush1.xpose.msra.mxu0 0.0
        %2653 = vmatprep.subr.mxu0 0.0
        %2654 = vmatpush1.xpose.msra.mxu0 0.0
        %2655 = vmatprep.subr.mxu0 0.0
        %2656 = vmatpush1.xpose.msra.mxu0 0.0
        %2657 = vmatprep.subr.mxu0 0.0
        %2658 = vmatpush1.xpose.msra.mxu0 0.0
        %2659 = vmatprep.subr.mxu0 0.0
        %2660 = vmatpush1.xpose.msra.mxu0 0.0
        %2661 = vmatprep.subr.mxu0 0.0
        %2662 = vmatpush1.xpose.msra.mxu0 0.0
        %2663 = vmatprep.subr.mxu0 0.0
        %2664 = vmatpush1.xpose.msra.mxu0 0.0
        %2665 = vmatprep.subr.mxu0 0.0
        %2666 = vmatpush1.xpose.msra.mxu0 0.0
        %2667 = vmatprep.subr.mxu0 0.0
        %2668 = vmatpush1.xpose.msra.mxu0 0.0
        %2669 = vmatprep.subr.mxu0 0.0
        %2670 = vmatpush1.xpose.msra.mxu0 0.0
        %2671 = vmatprep.subr.mxu0 0.0
        %2672 = vmatpush1.xpose.msra.mxu0 0.0
        %2673 = vmatprep.subr.mxu0 0.0
        %2674 = vmatpush1.xpose.msra.mxu0 0.0
        %2675 = vmatprep.subr.mxu0 0.0
        %2676 = vmatpush1.xpose.msra.mxu0 0.0
        %2677 = vmatprep.subr.mxu0 0.0
        %2678 = vmatpush1.xpose.msra.mxu0 0.0
        %2679 = vmatprep.subr.mxu0 0.0
        %2680 = vmatpush1.xpose.msra.mxu0 0.0
        %2681 = vmatprep.subr.mxu0 0.0
        %2682 = vmatpush1.xpose.msra.mxu0 0.0
        %2683 = vmatprep.subr.mxu0 0.0
        %2684 = vmatpush1.xpose.msra.mxu0 0.0
        %2685 = vmatprep.subr.mxu0 0.0
        %2686 = vmatpush1.xpose.msra.mxu0 0.0
        %2687 = vmatprep.subr.mxu0 0.0
        %2688 = vmatpush1.xpose.msra.mxu0 0.0
        %2689 = vmatprep.subr.mxu0 0.0
        %2690 = vmatpush1.xpose.msra.mxu0 0.0
        %2691 = vmatprep.subr.mxu0 0.0
        %2692 = vmatpush1.xpose.msra.mxu0 0.0
        %2693 = vmatprep.subr.mxu0 0.0
        %2694 = vmatpush1.xpose.msra.mxu0 0.0
        %2695 = vmatprep.subr.mxu0 0.0
        %2696 = vmatpush1.xpose.msra.mxu0 0.0
        %2697 = vmatprep.subr.mxu0 0.0
        %2698 = vmatpush1.xpose.msra.mxu0 0.0
        %2699 = vmatprep.subr.mxu0 0.0
        %2700 = vmatpush1.xpose.msra.mxu0 0.0
        %2701 = vmatprep.subr.mxu0 0.0
        %2702 = vmatpush1.xpose.msra.mxu0 0.0
        %2703 = vmatprep.subr.mxu0 0.0
        %2704 = vmatpush1.xpose.msra.mxu0 0.0
        %2705 = vmatprep.mubr.f32.mxu0 0.0
        %2706 = vmatmul.mubr.f32.gmra.mrb[0].mxu0 %v2631
        %v2707 = vpop.f32.mrb[0].mxu0
        %v2708 = vadd.f32 0.0, %v2707
        %v2709 = vpop.f32.mrb[0].mxu0
        %2710 = vmatprep.mubr.f32.mxu0 0.0
        %2711 = vmatmul.mubr.f32.gmra.mrb[0].mxu0 %v2633
        %v2712 = vpop.f32.mrb[0].mxu0
        %v2713 = vadd.f32 0.0, %v2712
        %v2714 = vpop.f32.mrb[0].mxu0
        %2715 = vdwg.mxu0
        %2716 = vrot.lane.b32.xlu0 %v836, 32
        %v2717 = vpop.permute.xlu0 %2716
        %2718 = vrot.lane.b32.xlu0 %v841, 32
        %v2719 = vpop.permute.xlu0 %2718
        %2720 = vrot.lane.b32.xlu0 %v949, 32
        %v2721 = vpop.permute.xlu0 %2720
        %2722 = vrot.lane.b32.xlu0 %v954, 32
        %v2723 = vpop.permute.xlu0 %2722
        %2724 = vrot.lane.b32.xlu0 %v959, 32
        %v2725 = vpop.permute.xlu0 %2724
        %v2726 = vsel %vm1080, %v2717, 0
        %v2728 = vsel %vm1080, %v2719, 0
        %v2730 = vsel %vm1080, %v2721, 0
        %v2732 = vsel %vm1080, %v2723, 0
        %v2734 = vsel %vm1080, %v2725, 0
        %2736 = vmatprep.subr.mxu0 0.0
        %2737 = vmatpush1.xpose.msra.mxu0 %v2730
        %2738 = vmatprep.subr.mxu0 0.0
        %2739 = vmatpush1.xpose.msra.mxu0 %v2732
        %2740 = vmatprep.subr.mxu0 0.0
        %2741 = vmatpush1.xpose.msra.mxu0 %v2734
        %2742 = vmatprep.subr.mxu0 0.0
        %2743 = vmatpush1.xpose.msra.mxu0 0.0
        %2744 = vmatprep.subr.mxu0 0.0
        %2745 = vmatpush1.xpose.msra.mxu0 0.0
        %2746 = vmatprep.subr.mxu0 0.0
        %2747 = vmatpush1.xpose.msra.mxu0 0.0
        %2748 = vmatprep.subr.mxu0 0.0
        %2749 = vmatpush1.xpose.msra.mxu0 0.0
        %2750 = vmatprep.subr.mxu0 0.0
        %2751 = vmatpush1.xpose.msra.mxu0 0.0
        %2752 = vmatprep.subr.mxu0 0.0
        %2753 = vmatpush1.xpose.msra.mxu0 0.0
        %2754 = vmatprep.subr.mxu0 0.0
        %2755 = vmatpush1.xpose.msra.mxu0 0.0
        %2756 = vmatprep.subr.mxu0 0.0
        %2757 = vmatpush1.xpose.msra.mxu0 0.0
        %2758 = vmatprep.subr.mxu0 0.0
        %2759 = vmatpush1.xpose.msra.mxu0 0.0
        %2760 = vmatprep.subr.mxu0 0.0
        %2761 = vmatpush1.xpose.msra.mxu0 0.0
        %2762 = vmatprep.subr.mxu0 0.0
        %2763 = vmatpush1.xpose.msra.mxu0 0.0
        %2764 = vmatprep.subr.mxu0 0.0
        %2765 = vmatpush1.xpose.msra.mxu0 0.0
        %2766 = vmatprep.subr.mxu0 0.0
        %2767 = vmatpush1.xpose.msra.mxu0 0.0
        %2768 = vmatprep.subr.mxu0 0.0
        %2769 = vmatpush1.xpose.msra.mxu0 0.0
        %2770 = vmatprep.subr.mxu0 0.0
        %2771 = vmatpush1.xpose.msra.mxu0 0.0
        %2772 = vmatprep.subr.mxu0 0.0
        %2773 = vmatpush1.xpose.msra.mxu0 0.0
        %2774 = vmatprep.subr.mxu0 0.0
        %2775 = vmatpush1.xpose.msra.mxu0 0.0
        %2776 = vmatprep.subr.mxu0 0.0
        %2777 = vmatpush1.xpose.msra.mxu0 0.0
        %2778 = vmatprep.subr.mxu0 0.0
        %2779 = vmatpush1.xpose.msra.mxu0 0.0
        %2780 = vmatprep.subr.mxu0 0.0
        %2781 = vmatpush1.xpose.msra.mxu0 0.0
        %2782 = vmatprep.subr.mxu0 0.0
        %2783 = vmatpush1.xpose.msra.mxu0 0.0
        %2784 = vmatprep.subr.mxu0 0.0
        %2785 = vmatpush1.xpose.msra.mxu0 0.0
        %2786 = vmatprep.subr.mxu0 0.0
        %2787 = vmatpush1.xpose.msra.mxu0 0.0
        %2788 = vmatprep.subr.mxu0 0.0
        %2789 = vmatpush1.xpose.msra.mxu0 0.0
        %2790 = vmatprep.subr.mxu0 0.0
        %2791 = vmatpush1.xpose.msra.mxu0 0.0
        %2792 = vmatprep.subr.mxu0 0.0
        %2793 = vmatpush1.xpose.msra.mxu0 0.0
        %2794 = vmatprep.subr.mxu0 0.0
        %2795 = vmatpush1.xpose.msra.mxu0 0.0
        %2796 = vmatprep.subr.mxu0 0.0
        %2797 = vmatpush1.xpose.msra.mxu0 0.0
        %2798 = vmatprep.subr.mxu0 0.0
        %2799 = vmatpush1.xpose.msra.mxu0 0.0
        %2800 = vmatprep.mubr.f32.mxu0 0.0
        %2801 = vmatmul.mubr.f32.gmra.mrb[0].mxu0 %v2726
        %v2802 = vpop.f32.mrb[0].mxu0
        %v2803 = vadd.f32 0.0, %v2802
        %v2804 = vpop.f32.mrb[0].mxu0
        %2805 = vmatprep.mubr.f32.mxu0 0.0
        %2806 = vmatmul.mubr.f32.gmra.mrb[0].mxu0 %v2728
        %v2807 = vpop.f32.mrb[0].mxu0
        %v2808 = vadd.f32 0.0, %v2807
        %v2809 = vpop.f32.mrb[0].mxu0
        %2810 = vdwg.mxu0
        %v2811 = vmul.f32 %v2708, 0.17677669
        %v2812 = vmul.f32 %v2713, 0.17677669
        %v2813 = vmul.f32 %v2803, 0.17677669
        %v2814 = vmul.f32 %v2808, 0.17677669
        %v2815 = vsel %vm1265, %v2811, -inf
        %2816 = vmax.xlane.f32.xlu0 %v2815
        %v2817 = vpop.xlane.xlu0 %2816
        %v2818 = vsel %vm1265, %v2812, -inf
        %2819 = vmax.xlane.f32.xlu0 %v2818
        %v2820 = vpop.xlane.xlu0 %2819
        %v2821 = vsel %vm1265, %v2813, -inf
        %2822 = vmax.xlane.f32.xlu0 %v2821
        %v2823 = vpop.xlane.xlu0 %2822
        %v2824 = vsel %vm1265, %v2814, -inf
        %2825 = vmax.xlane.f32.xlu0 %v2824
        %v2826 = vpop.xlane.xlu0 %2825
        %v2827 = vsub.f32 %v2811, %v2817
        %v2828 = vsub.f32 %v2812, %v2820
        %v2829 = vsub.f32 %v2813, %v2823
        %v2830 = vsub.f32 %v2814, %v2826
        %v2831 = vmul.f32 %v2827, 1.442695
        %v2832 = vpow.pop %v2831
        %v2833 = vmul.f32 %v2828, 1.442695
        %v2834 = vpow.pop %v2833
        %v2835 = vmul.f32 %v2829, 1.442695
        %v2836 = vpow.pop %v2835
        %v2837 = vmul.f32 %v2830, 1.442695
        %v2838 = vpow.pop %v2837
        %v2839 = vsel %vm1265, %v2832, 0.0
        %2840 = vadd.xlane.f32.xlu0 %v2839
        %v2841 = vpop.xlane.xlu0 %2840
        %v2842 = vsel %vm1265, %v2834, 0.0
        %2843 = vadd.xlane.f32.xlu0 %v2842
        %v2844 = vpop.xlane.xlu0 %2843
        %v2845 = vsel %vm1265, %v2836, 0.0
        %2846 = vadd.xlane.f32.xlu0 %v2845
        %v2847 = vpop.xlane.xlu0 %2846
        %v2848 = vsel %vm1265, %v2838, 0.0
        %2849 = vadd.xlane.f32.xlu0 %v2848
        %v2850 = vpop.xlane.xlu0 %2849
        %v2851 = vrcp.pop %v2841
        %v2852 = vrcp.pop %v2844
        %v2853 = vrcp.pop %v2847
        %v2854 = vrcp.pop %v2850
        %v2855 = vmul.f32 %v2832, %v2851
        %v2856 = vmul.f32 %v2834, %v2852
        %v2857 = vmul.f32 %v2836, %v2853
        %v2858 = vmul.f32 %v2838, %v2854
        %2859 = vrot.lane.b32.xlu0 %v1052, 32
        %v2860 = vpop.permute.xlu0 %2859
        %2861 = vrot.lane.b32.xlu0 %v1057, 32
        %v2862 = vpop.permute.xlu0 %2861
        %2863 = vrot.lane.b32.xlu0 %v1062, 32
        %v2864 = vpop.permute.xlu0 %2863
        %v2869 = vsel %vm1265, %v2855, 0
        %v2872 = vsel %vm1265, %v2856, 0
        %2874 = vmatprep.subr.mxu0 0.0
        %2875 = vmatpush1.msra.mxu0 %v2860
        %2876 = vmatprep.subr.mxu0 0.0
        %2877 = vmatpush1.msra.mxu0 %v2862
        %2878 = vmatprep.subr.mxu0 0.0
        %2879 = vmatpush1.msra.mxu0 %v2864
        %2880 = vmatprep.subr.mxu0 0.0
        %2881 = vmatpush1.msra.mxu0 0.0
        %2882 = vmatprep.subr.mxu0 0.0
        %2883 = vmatpush1.msra.mxu0 0.0
        %2884 = vmatprep.subr.mxu0 0.0
        %2885 = vmatpush1.msra.mxu0 0.0
        %2886 = vmatprep.subr.mxu0 0.0
        %2887 = vmatpush1.msra.mxu0 0.0
        %2888 = vmatprep.subr.mxu0 0.0
        %2889 = vmatpush1.msra.mxu0 0.0
        %2890 = vmatprep.subr.mxu0 0.0
        %2891 = vmatpush1.msra.mxu0 0.0
        %2892 = vmatprep.subr.mxu0 0.0
        %2893 = vmatpush1.msra.mxu0 0.0
        %2894 = vmatprep.subr.mxu0 0.0
        %2895 = vmatpush1.msra.mxu0 0.0
        %2896 = vmatprep.subr.mxu0 0.0
        %2897 = vmatpush1.msra.mxu0 0.0
        %2898 = vmatprep.subr.mxu0 0.0
        %2899 = vmatpush1.msra.mxu0 0.0
        %2900 = vmatprep.subr.mxu0 0.0
        %2901 = vmatpush1.msra.mxu0 0.0
        %2902 = vmatprep.subr.mxu0 0.0
        %2903 = vmatpush1.msra.mxu0 0.0
        %2904 = vmatprep.subr.mxu0 0.0
        %2905 = vmatpush1.msra.mxu0 0.0
        %2906 = vmatprep.subr.mxu0 0.0
        %2907 = vmatpush1.msra.mxu0 0.0
        %2908 = vmatprep.subr.mxu0 0.0
        %2909 = vmatpush1.msra.mxu0 0.0
        %2910 = vmatprep.subr.mxu0 0.0
        %2911 = vmatpush1.msra.mxu0 0.0
        %2912 = vmatprep.subr.mxu0 0.0
        %2913 = vmatpush1.msra.mxu0 0.0
        %2914 = vmatprep.subr.mxu0 0.0
        %2915 = vmatpush1.msra.mxu0 0.0
        %2916 = vmatprep.subr.mxu0 0.0
        %2917 = vmatpush1.msra.mxu0 0.0
        %2918 = vmatprep.subr.mxu0 0.0
        %2919 = vmatpush1.msra.mxu0 0.0
        %2920 = vmatprep.subr.mxu0 0.0
        %2921 = vmatpush1.msra.mxu0 0.0
        %2922 = vmatprep.subr.mxu0 0.0
        %2923 = vmatpush1.msra.mxu0 0.0
        %2924 = vmatprep.subr.mxu0 0.0
        %2925 = vmatpush1.msra.mxu0 0.0
        %2926 = vmatprep.subr.mxu0 0.0
        %2927 = vmatpush1.msra.mxu0 0.0
        %2928 = vmatprep.subr.mxu0 0.0
        %2929 = vmatpush1.msra.mxu0 0.0
        %2930 = vmatprep.subr.mxu0 0.0
        %2931 = vmatpush1.msra.mxu0 0.0
        %2932 = vmatprep.subr.mxu0 0.0
        %2933 = vmatpush1.msra.mxu0 0.0
        %2934 = vmatprep.subr.mxu0 0.0
        %2935 = vmatpush1.msra.mxu0 0.0
        %2936 = vmatprep.subr.mxu0 0.0
        %2937 = vmatpush1.msra.mxu0 0.0
        %2938 = vmatprep.mubr.f32.mxu0 0.0
        %2939 = vmatmul.mubr.f32.gmra.mrb[0].mxu0 %v2869
        %v2940 = vpop.f32.mrb[0].mxu0
        %v2941 = vadd.f32 0.0, %v2940
        %v2942 = vpop.f32.mrb[0].mxu0
        %2943 = vmatprep.mubr.f32.mxu0 0.0
        %2944 = vmatmul.mubr.f32.gmra.mrb[0].mxu0 %v2872
        %v2945 = vpop.f32.mrb[0].mxu0
        %v2946 = vadd.f32 0.0, %v2945
        %v2947 = vpop.f32.mrb[0].mxu0
        %2948 = vdwg.mxu0
        %2949 = vrot.lane.b32.xlu0 %v1067, 32
        %v2950 = vpop.permute.xlu0 %2949
        %2951 = vrot.lane.b32.xlu0 %v1072, 32
        %v2952 = vpop.permute.xlu0 %2951
        %2953 = vrot.lane.b32.xlu0 %v1077, 32
        %v2954 = vpop.permute.xlu0 %2953
        %v2959 = vsel %vm1265, %v2857, 0
        %v2962 = vsel %vm1265, %v2858, 0
        %2964 = vmatprep.subr.mxu0 0.0
        %2965 = vmatpush1.msra.mxu0 %v2950
        %2966 = vmatprep.subr.mxu0 0.0
        %2967 = vmatpush1.msra.mxu0 %v2952
        %2968 = vmatprep.subr.mxu0 0.0
        %2969 = vmatpush1.msra.mxu0 %v2954
        %2970 = vmatprep.subr.mxu0 0.0
        %2971 = vmatpush1.msra.mxu0 0.0
        %2972 = vmatprep.subr.mxu0 0.0
        %2973 = vmatpush1.msra.mxu0 0.0
        %2974 = vmatprep.subr.mxu0 0.0
        %2975 = vmatpush1.msra.mxu0 0.0
        %2976 = vmatprep.subr.mxu0 0.0
        %2977 = vmatpush1.msra.mxu0 0.0
        %2978 = vmatprep.subr.mxu0 0.0
        %2979 = vmatpush1.msra.mxu0 0.0
        %2980 = vmatprep.subr.mxu0 0.0
        %2981 = vmatpush1.msra.mxu0 0.0
        %2982 = vmatprep.subr.mxu0 0.0
        %2983 = vmatpush1.msra.mxu0 0.0
        %2984 = vmatprep.subr.mxu0 0.0
        %2985 = vmatpush1.msra.mxu0 0.0
        %2986 = vmatprep.subr.mxu0 0.0
        %2987 = vmatpush1.msra.mxu0 0.0
        %2988 = vmatprep.subr.mxu0 0.0
        %2989 = vmatpush1.msra.mxu0 0.0
        %2990 = vmatprep.subr.mxu0 0.0
        %2991 = vmatpush1.msra.mxu0 0.0
        %2992 = vmatprep.subr.mxu0 0.0
        %2993 = vmatpush1.msra.mxu0 0.0
        %2994 = vmatprep.subr.mxu0 0.0
        %2995 = vmatpush1.msra.mxu0 0.0
        %2996 = vmatprep.subr.mxu0 0.0
        %2997 = vmatpush1.msra.mxu0 0.0
        %2998 = vmatprep.subr.mxu0 0.0
        %2999 = vmatpush1.msra.mxu0 0.0
        %3000 = vmatprep.subr.mxu0 0.0
        %3001 = vmatpush1.msra.mxu0 0.0
        %3002 = vmatprep.subr.mxu0 0.0
        %3003 = vmatpush1.msra.mxu0 0.0
        %3004 = vmatprep.subr.mxu0 0.0
        %3005 = vmatpush1.msra.mxu0 0.0
        %3006 = vmatprep.subr.mxu0 0.0
        %3007 = vmatpush1.msra.mxu0 0.0
        %3008 = vmatprep.subr.mxu0 0.0
        %3009 = vmatpush1.msra.mxu0 0.0
        %3010 = vmatprep.subr.mxu0 0.0
        %3011 = vmatpush1.msra.mxu0 0.0
        %3012 = vmatprep.subr.mxu0 0.0
        %3013 = vmatpush1.msra.mxu0 0.0
        %3014 = vmatprep.subr.mxu0 0.0
        %3015 = vmatpush1.msra.mxu0 0.0
        %3016 = vmatprep.subr.mxu0 0.0
        %3017 = vmatpush1.msra.mxu0 0.0
        %3018 = vmatprep.subr.mxu0 0.0
        %3019 = vmatpush1.msra.mxu0 0.0
        %3020 = vmatprep.subr.mxu0 0.0
        %3021 = vmatpush1.msra.mxu0 0.0
        %3022 = vmatprep.subr.mxu0 0.0
        %3023 = vmatpush1.msra.mxu0 0.0
        %3024 = vmatprep.subr.mxu0 0.0
        %3025 = vmatpush1.msra.mxu0 0.0
        %3026 = vmatprep.subr.mxu0 0.0
        %3027 = vmatpush1.msra.mxu0 0.0
        %3028 = vmatprep.mubr.f32.mxu0 0.0
        %3029 = vmatmul.mubr.f32.gmra.mrb[0].mxu0 %v2959
        %v3030 = vpop.f32.mrb[0].mxu0
        %v3031 = vadd.f32 0.0, %v3030
        %v3032 = vpop.f32.mrb[0].mxu0
        %3033 = vmatprep.mubr.f32.mxu0 0.0
        %3034 = vmatmul.mubr.f32.gmra.mrb[0].mxu0 %v2962
        %v3035 = vpop.f32.mrb[0].mxu0
        %v3036 = vadd.f32 0.0, %v3035
        %v3037 = vpop.f32.mrb[0].mxu0
        %3038 = vdwg.mxu0
        %v3039 = vld [vmem:[#allocation11 + $0x60] sm:$0xff]
        %v3040 = vld [vmem:[#allocation11 + $0x68] sm:$0xff]
        %v3041 = vld [vmem:[#allocation11 + $0x70] sm:$0xff]
        %v3042 = vld [vmem:[#allocation11 + $0x78] sm:$0xff]
        %v3044 = vsel %vm1080, %v2941, 0
        %v3047 = vsel %vm1080, %v2946, 0
        %v3050 = vsel %vm1080, %v3031, 0
        %v3053 = vsel %vm1080, %v3036, 0
        %3055 = vmatprep.subr.mxu0 0.0
        %3056 = vmatpush1.msra.mxu0 %v3039
        %3057 = vmatprep.subr.mxu0 0.0
        %3058 = vmatpush1.msra.mxu0 %v3040
        %3059 = vmatprep.subr.mxu0 0.0
        %3060 = vmatpush1.msra.mxu0 %v3041
        %3061 = vmatprep.subr.mxu0 0.0
        %3062 = vmatpush1.msra.mxu0 %v3042
        %3063 = vmatprep.subr.mxu0 0.0
        %3064 = vmatpush1.msra.mxu0 0.0
        %3065 = vmatprep.subr.mxu0 0.0
        %3066 = vmatpush1.msra.mxu0 0.0
        %3067 = vmatprep.subr.mxu0 0.0
        %3068 = vmatpush1.msra.mxu0 0.0
        %3069 = vmatprep.subr.mxu0 0.0
        %3070 = vmatpush1.msra.mxu0 0.0
        %3071 = vmatprep.subr.mxu0 0.0
        %3072 = vmatpush1.msra.mxu0 0.0
        %3073 = vmatprep.subr.mxu0 0.0
        %3074 = vmatpush1.msra.mxu0 0.0
        %3075 = vmatprep.subr.mxu0 0.0
        %3076 = vmatpush1.msra.mxu0 0.0
        %3077 = vmatprep.subr.mxu0 0.0
        %3078 = vmatpush1.msra.mxu0 0.0
        %3079 = vmatprep.subr.mxu0 0.0
        %3080 = vmatpush1.msra.mxu0 0.0
        %3081 = vmatprep.subr.mxu0 0.0
        %3082 = vmatpush1.msra.mxu0 0.0
        %3083 = vmatprep.subr.mxu0 0.0
        %3084 = vmatpush1.msra.mxu0 0.0
        %3085 = vmatprep.subr.mxu0 0.0
        %3086 = vmatpush1.msra.mxu0 0.0
        %3087 = vmatprep.subr.mxu0 0.0
        %3088 = vmatpush1.msra.mxu0 0.0
        %3089 = vmatprep.subr.mxu0 0.0
        %3090 = vmatpush1.msra.mxu0 0.0
        %3091 = vmatprep.subr.mxu0 0.0
        %3092 = vmatpush1.msra.mxu0 0.0
        %3093 = vmatprep.subr.mxu0 0.0
        %3094 = vmatpush1.msra.mxu0 0.0
        %3095 = vmatprep.subr.mxu0 0.0
        %3096 = vmatpush1.msra.mxu0 0.0
        %3097 = vmatprep.subr.mxu0 0.0
        %3098 = vmatpush1.msra.mxu0 0.0
        %3099 = vmatprep.subr.mxu0 0.0
        %3100 = vmatpush1.msra.mxu0 0.0
        %3101 = vmatprep.subr.mxu0 0.0
        %3102 = vmatpush1.msra.mxu0 0.0
        %3103 = vmatprep.subr.mxu0 0.0
        %3104 = vmatpush1.msra.mxu0 0.0
        %3105 = vmatprep.subr.mxu0 0.0
        %3106 = vmatpush1.msra.mxu0 0.0
        %3107 = vmatprep.subr.mxu0 0.0
        %3108 = vmatpush1.msra.mxu0 0.0
        %3109 = vmatprep.subr.mxu0 0.0
        %3110 = vmatpush1.msra.mxu0 0.0
        %3111 = vmatprep.subr.mxu0 0.0
        %3112 = vmatpush1.msra.mxu0 0.0
        %3113 = vmatprep.subr.mxu0 0.0
        %3114 = vmatpush1.msra.mxu0 0.0
        %3115 = vmatprep.subr.mxu0 0.0
        %3116 = vmatpush1.msra.mxu0 0.0
        %3117 = vmatprep.subr.mxu0 0.0
        %3118 = vmatpush1.msra.mxu0 0.0
        %3119 = vmatprep.mubr.f32.mxu0 0.0
        %3120 = vmatmul.mubr.f32.gmra.mrb[0].mxu0 %v3044
        %v3121 = vpop.f32.mrb[0].mxu0
        %v3122 = vadd.f32 0.0, %v3121
        %v3123 = vpop.f32.mrb[0].mxu0
        %3124 = vmatprep.mubr.f32.mxu0 0.0
        %3125 = vmatmul.mubr.f32.gmra.mrb[0].mxu0 %v3047
        %v3126 = vpop.f32.mrb[0].mxu0
        %v3127 = vadd.f32 0.0, %v3126
        %v3128 = vpop.f32.mrb[0].mxu0
        %3129 = vmatprep.mubr.f32.mxu0 0.0
        %3130 = vmatmul.mubr.f32.gmra.mrb[0].mxu0 %v3050
        %v3131 = vpop.f32.mrb[0].mxu0
        %v3132 = vadd.f32 0.0, %v3131
        %v3133 = vpop.f32.mrb[0].mxu0
        %3134 = vmatprep.mubr.f32.mxu0 0.0
        %3135 = vmatmul.mubr.f32.gmra.mrb[0].mxu0 %v3053
        %v3136 = vpop.f32.mrb[0].mxu0
        %v3137 = vadd.f32 0.0, %v3136
        %v3138 = vpop.f32.mrb[0].mxu0
        %3139 = vdwg.mxu0
        %v3140 = vadd.f32 %v2617, %v3122
        %v3141 = vadd.f32 %v2618, %v3127
        %v3142 = vadd.f32 %v2619, %v3132
        %v3143 = vadd.f32 %v2620, %v3137
        %v3144 = vld [vmem:[%s9] sm:$0x1]
        %v3146 = vlaneseq
        %v3147 = vshrl.u32 %v3146, 7
        %v3148 = vsub.s32 0, %v3147
        %v3149 = vrot.slane %v3144, %v3148
        %v3151 = vadd.f32 %v3140, %v3149
        %v3152 = vadd.f32 %v3141, %v3149
        %v3153 = vadd.f32 %v3142, %v3149
        %v3154 = vadd.f32 %v3143, %v3149
        %v3155 = vadd.f32 %v726, %v3151
        %v3156 = vadd.f32 %v727, %v3152
        %v3157 = vadd.f32 %v728, %v3153
        %v3158 = vadd.f32 %v729, %v3154
        %3159 = vadd.xlane.f32.xlu0 %v3155
        %v3160 = vpop.xlane.xlu0 %3159
        %3161 = vadd.xlane.f32.xlu0 %v3156
        %v3162 = vpop.xlane.xlu0 %3161
        %3163 = vadd.xlane.f32.xlu0 %v3157
        %v3164 = vpop.xlane.xlu0 %3163
        %3165 = vadd.xlane.f32.xlu0 %v3158
        %v3166 = vpop.xlane.xlu0 %3165
        %v3167 = vrcp.pop 128.0
        %v3168 = vmul.f32 %v3160, %v3167
        %v3169 = vmul.f32 %v3162, %v3167
        %v3170 = vmul.f32 %v3164, %v3167
        %v3171 = vmul.f32 %v3166, %v3167
        %v3172 = vsub.f32 %v3155, %v3168
        %v3173 = vsub.f32 %v3156, %v3169
        %v3174 = vsub.f32 %v3157, %v3170
        %v3175 = vsub.f32 %v3158, %v3171
        %v3176 = vmul.f32 %v3172, %v3172
        %v3177 = vmul.f32 %v3173, %v3173
        %v3178 = vmul.f32 %v3174, %v3174
        %v3179 = vmul.f32 %v3175, %v3175
        %3180 = vadd.xlane.f32.xlu0 %v3176
        %v3181 = vpop.xlane.xlu0 %3180
        %3182 = vadd.xlane.f32.xlu0 %v3177
        %v3183 = vpop.xlane.xlu0 %3182
        %3184 = vadd.xlane.f32.xlu0 %v3178
        %v3185 = vpop.xlane.xlu0 %3184
        %3186 = vadd.xlane.f32.xlu0 %v3179
        %v3187 = vpop.xlane.xlu0 %3186
        %v3188 = vmul.f32 %v3181, %v3167
        %v3189 = vmul.f32 %v3183, %v3167
        %v3190 = vmul.f32 %v3185, %v3167
        %v3191 = vmul.f32 %v3187, %v3167
        %v3192 = vadd.f32 %v3188, 1e-05
        %v3193 = vadd.f32 %v3189, 1e-05
        %v3194 = vadd.f32 %v3190, 1e-05
        %v3195 = vadd.f32 %v3191, 1e-05
        %v3196 = vrsqrt.pop %v3192
        %v3197 = vrsqrt.pop %v3193
        %v3198 = vrsqrt.pop %v3194
        %v3199 = vrsqrt.pop %v3195
        %v3200 = vmul.f32 %v3172, %v3196
        %v3201 = vmul.f32 %v3173, %v3197
        %v3202 = vmul.f32 %v3174, %v3198
        %v3203 = vmul.f32 %v3175, %v3199
        %v3204 = vld [vmem:[%s14] sm:$0x1]
        %v3206 = vlaneseq
        %v3207 = vshrl.u32 %v3206, 7
        %v3208 = vsub.s32 0, %v3207
        %v3209 = vrot.slane %v3204, %v3208
        %v3211 = vmul.f32 %v3200, %v3209
        %v3212 = vmul.f32 %v3201, %v3209
        %v3213 = vmul.f32 %v3202, %v3209
        %v3214 = vmul.f32 %v3203, %v3209
        %v3215 = vld [vmem:[%s15] sm:$0x1]
        %v3217 = vlaneseq
        %v3218 = vshrl.u32 %v3217, 7
        %v3219 = vsub.s32 0, %v3218
        %v3220 = vrot.slane %v3215, %v3219
        %v3222 = vadd.f32 %v3211, %v3220
        %v3223 = vadd.f32 %v3212, %v3220
        %v3224 = vadd.f32 %v3213, %v3220
        %v3225 = vadd.f32 %v3214, %v3220
        %v3226 = vld [vmem:[#allocation13] sm:$0xff]
        %v3227 = vld [vmem:[#allocation13 + $0x8] sm:$0xff]
        %v3228 = vld [vmem:[#allocation13 + $0x10] sm:$0xff]
        %v3229 = vld [vmem:[#allocation13 + $0x18] sm:$0xff]
        %v3230 = vld [vmem:[#allocation13 + $0x20] sm:$0xff]
        %v3231 = vld [vmem:[#allocation13 + $0x28] sm:$0xff]
        %v3232 = vld [vmem:[#allocation13 + $0x30] sm:$0xff]
        %v3233 = vld [vmem:[#allocation13 + $0x38] sm:$0xff]
        %v3234 = vld [vmem:[#allocation13 + $0x40] sm:$0xff]
        %v3235 = vld [vmem:[#allocation13 + $0x48] sm:$0xff]
        %v3236 = vld [vmem:[#allocation13 + $0x50] sm:$0xff]
        %v3237 = vld [vmem:[#allocation13 + $0x58] sm:$0xff]
        %v3238 = vld [vmem:[#allocation13 + $0x60] sm:$0xff]
        %v3239 = vld [vmem:[#allocation13 + $0x68] sm:$0xff]
        %v3240 = vld [vmem:[#allocation13 + $0x70] sm:$0xff]
        %v3241 = vld [vmem:[#allocation13 + $0x78] sm:$0xff]
        %v3242 = vld [vmem:[#allocation13 + $0x80] sm:$0xff]
        %v3243 = vld [vmem:[#allocation13 + $0x88] sm:$0xff]
        %v3244 = vld [vmem:[#allocation13 + $0x90] sm:$0xff]
        %v3245 = vld [vmem:[#allocation13 + $0x98] sm:$0xff]
        %v3246 = vld [vmem:[#allocation13 + $0xa0] sm:$0xff]
        %v3247 = vld [vmem:[#allocation13 + $0xa8] sm:$0xff]
        %v3248 = vld [vmem:[#allocation13 + $0xb0] sm:$0xff]
        %v3249 = vld [vmem:[#allocation13 + $0xb8] sm:$0xff]
        %v3250 = vld [vmem:[#allocation13 + $0xc0] sm:$0xff]
        %v3251 = vld [vmem:[#allocation13 + $0xc8] sm:$0xff]
        %v3252 = vld [vmem:[#allocation13 + $0xd0] sm:$0xff]
        %v3253 = vld [vmem:[#allocation13 + $0xd8] sm:$0xff]
        %v3254 = vld [vmem:[#allocation13 + $0xe0] sm:$0xff]
        %v3255 = vld [vmem:[#allocation13 + $0xe8] sm:$0xff]
        %v3256 = vld [vmem:[#allocation13 + $0xf0] sm:$0xff]
        %v3257 = vld [vmem:[#allocation13 + $0xf8] sm:$0xff]
        %v3258 = vld [vmem:[%s11] sm:$0x3]
        %v3260 = vlaneseq
        %v3261 = vshrl.u32 %v3260, 7
        %v3262 = vsub.s32 0, %v3261
        %v3263 = vrot.slane %v3258, %v3262
        %v3264 = vlaneseq
        %v3265 = vshrl.u32 %v3264, 7
        %v3266 = vsub.s32 1, %v3265
        %v3267 = vrot.slane %v3258, %v3266
        %3270 = vmatprep.subr.mxu0 %v3227
        %3271 = vmatpush1.msra.mxu0 %v3226
        %3272 = vmatprep.subr.mxu0 %v3229
        %3273 = vmatpush1.msra.mxu0 %v3228
        %3274 = vmatprep.subr.mxu0 %v3231
        %3275 = vmatpush1.msra.mxu0 %v3230
        %3276 = vmatprep.subr.mxu0 %v3233
        %3277 = vmatpush1.msra.mxu0 %v3232
        %3278 = vmatprep.subr.mxu0 %v3235
        %3279 = vmatpush1.msra.mxu0 %v3234
        %3280 = vmatprep.subr.mxu0 %v3237
        %3281 = vmatpush1.msra.mxu0 %v3236
        %3282 = vmatprep.subr.mxu0 %v3239
        %3283 = vmatpush1.msra.mxu0 %v3238
        %3284 = vmatprep.subr.mxu0 %v3241
        %3285 = vmatpush1.msra.mxu0 %v3240
        %3286 = vmatprep.subr.mxu0 %v3243
        %3287 = vmatpush1.msra.mxu0 %v3242
        %3288 = vmatprep.subr.mxu0 %v3245
        %3289 = vmatpush1.msra.mxu0 %v3244
        %3290 = vmatprep.subr.mxu0 %v3247
        %3291 = vmatpush1.msra.mxu0 %v3246
        %3292 = vmatprep.subr.mxu0 %v3249
        %3293 = vmatpush1.msra.mxu0 %v3248
        %3294 = vmatprep.subr.mxu0 %v3251
        %3295 = vmatpush1.msra.mxu0 %v3250
        %3296 = vmatprep.subr.mxu0 %v3253
        %3297 = vmatpush1.msra.mxu0 %v3252
        %3298 = vmatprep.subr.mxu0 %v3255
        %3299 = vmatpush1.msra.mxu0 %v3254
        %3300 = vmatprep.subr.mxu0 %v3257
        %3301 = vmatpush1.msra.mxu0 %v3256
        %3302 = vmatprep.subr.mxu0 0.0
        %3303 = vmatpush1.msra.mxu0 0.0
        %3304 = vmatprep.subr.mxu0 0.0
        %3305 = vmatpush1.msra.mxu0 0.0
        %3306 = vmatprep.subr.mxu0 0.0
        %3307 = vmatpush1.msra.mxu0 0.0
        %3308 = vmatprep.subr.mxu0 0.0
        %3309 = vmatpush1.msra.mxu0 0.0
        %3310 = vmatprep.subr.mxu0 0.0
        %3311 = vmatpush1.msra.mxu0 0.0
        %3312 = vmatprep.subr.mxu0 0.0
        %3313 = vmatpush1.msra.mxu0 0.0
        %3314 = vmatprep.subr.mxu0 0.0
        %3315 = vmatpush1.msra.mxu0 0.0
        %3316 = vmatprep.subr.mxu0 0.0
        %3317 = vmatpush1.msra.mxu0 0.0
        %3318 = vmatprep.subr.mxu0 0.0
        %3319 = vmatpush1.msra.mxu0 0.0
        %3320 = vmatprep.subr.mxu0 0.0
        %3321 = vmatpush1.msra.mxu0 0.0
        %3322 = vmatprep.subr.mxu0 0.0
        %3323 = vmatpush1.msra.mxu0 0.0
        %3324 = vmatprep.subr.mxu0 0.0
        %3325 = vmatpush1.msra.mxu0 0.0
        %3326 = vmatprep.subr.mxu0 0.0
        %3327 = vmatpush1.msra.mxu0 0.0
        %3328 = vmatprep.subr.mxu0 0.0
        %3329 = vmatpush1.msra.mxu0 0.0
        %3330 = vmatprep.subr.mxu0 0.0
        %3331 = vmatpush1.msra.mxu0 0.0
        %3332 = vmatprep.subr.mxu0 0.0
        %3333 = vmatpush1.msra.mxu0 0.0
        %3334 = vmatprep.mubr.f32.mxu0 0.0
        %3335 = vmatmul.mubr.f32.gmra.mrb[0].mxu0 %v3222
        %v3336 = vpop.f32.mrb[0].mxu0
        %v3337 = vadd.f32 %v3263, %v3336
        %v3338 = vpop.f32.mrb[0].mxu0
        %v3339 = vadd.f32 %v3267, %v3338
        %3340 = vmatprep.mubr.f32.mxu0 0.0
        %3341 = vmatmul.mubr.f32.gmra.mrb[0].mxu0 %v3223
        %v3342 = vpop.f32.mrb[0].mxu0
        %v3343 = vadd.f32 %v3263, %v3342
        %v3344 = vpop.f32.mrb[0].mxu0
        %v3345 = vadd.f32 %v3267, %v3344
        %3346 = vmatprep.mubr.f32.mxu0 0.0
        %3347 = vmatmul.mubr.f32.gmra.mrb[0].mxu0 %v3224
        %v3348 = vpop.f32.mrb[0].mxu0
        %v3349 = vadd.f32 %v3263, %v3348
        %v3350 = vpop.f32.mrb[0].mxu0
        %v3351 = vadd.f32 %v3267, %v3350
        %3352 = vmatprep.mubr.f32.mxu0 0.0
        %3353 = vmatmul.mubr.f32.gmra.mrb[0].mxu0 %v3225
        %v3354 = vpop.f32.mrb[0].mxu0
        %v3355 = vadd.f32 %v3263, %v3354
        %v3356 = vpop.f32.mrb[0].mxu0
        %v3357 = vadd.f32 %v3267, %v3356
        %3358 = vdwg.mxu0
        %v3359 = vmax.f32 %v3337, 0.0
        %v3360 = vmax.f32 %v3339, 0.0
        %v3361 = vmax.f32 %v3343, 0.0
        %v3362 = vmax.f32 %v3345, 0.0
        %v3363 = vmax.f32 %v3349, 0.0
        %v3364 = vmax.f32 %v3351, 0.0
        %v3365 = vmax.f32 %v3355, 0.0
        %v3366 = vmax.f32 %v3357, 0.0
        %v3367 = vld [vmem:[#allocation14] sm:$0xff]
        %v3368 = vld [vmem:[#allocation14 + $0x8] sm:$0xff]
        %v3369 = vld [vmem:[#allocation14 + $0x10] sm:$0xff]
        %v3370 = vld [vmem:[#allocation14 + $0x18] sm:$0xff]
        %v3371 = vld [vmem:[#allocation14 + $0x20] sm:$0xff]
        %v3372 = vld [vmem:[#allocation14 + $0x28] sm:$0xff]
        %v3373 = vld [vmem:[#allocation14 + $0x30] sm:$0xff]
        %v3374 = vld [vmem:[#allocation14 + $0x38] sm:$0xff]
        %v3375 = vld [vmem:[#allocation14 + $0x40] sm:$0xff]
        %v3376 = vld [vmem:[#allocation14 + $0x48] sm:$0xff]
        %v3377 = vld [vmem:[#allocation14 + $0x50] sm:$0xff]
        %v3378 = vld [vmem:[#allocation14 + $0x58] sm:$0xff]
        %v3379 = vld [vmem:[#allocation14 + $0x60] sm:$0xff]
        %v3380 = vld [vmem:[#allocation14 + $0x68] sm:$0xff]
        %v3381 = vld [vmem:[#allocation14 + $0x70] sm:$0xff]
        %v3382 = vld [vmem:[#allocation14 + $0x78] sm:$0xff]
        %v3383 = vld [vmem:[#allocation14 + $0x80] sm:$0xff]
        %v3384 = vld [vmem:[#allocation14 + $0x88] sm:$0xff]
        %v3385 = vld [vmem:[#allocation14 + $0x90] sm:$0xff]
        %v3386 = vld [vmem:[#allocation14 + $0x98] sm:$0xff]
        %v3387 = vld [vmem:[#allocation14 + $0xa0] sm:$0xff]
        %v3388 = vld [vmem:[#allocation14 + $0xa8] sm:$0xff]
        %v3389 = vld [vmem:[#allocation14 + $0xb0] sm:$0xff]
        %v3390 = vld [vmem:[#allocation14 + $0xb8] sm:$0xff]
        %v3391 = vld [vmem:[#allocation14 + $0xc0] sm:$0xff]
        %v3392 = vld [vmem:[#allocation14 + $0xc8] sm:$0xff]
        %v3393 = vld [vmem:[#allocation14 + $0xd0] sm:$0xff]
        %v3394 = vld [vmem:[#allocation14 + $0xd8] sm:$0xff]
        %v3395 = vld [vmem:[#allocation14 + $0xe0] sm:$0xff]
        %v3396 = vld [vmem:[#allocation14 + $0xe8] sm:$0xff]
        %v3397 = vld [vmem:[#allocation14 + $0xf0] sm:$0xff]
        %v3398 = vld [vmem:[#allocation14 + $0xf8] sm:$0xff]
        %v3399 = vld [vmem:[%s13] sm:$0x1]
        %v3401 = vlaneseq
        %v3402 = vshrl.u32 %v3401, 7
        %v3403 = vsub.s32 0, %v3402
        %v3404 = vrot.slane %v3399, %v3403
        %3406 = vmatprep.subr.mxu0 0.0
        %3407 = vmatpush1.msra.mxu0 %v3367
        %3408 = vmatprep.subr.mxu0 0.0
        %3409 = vmatpush1.msra.mxu0 %v3368
        %3410 = vmatprep.subr.mxu0 0.0
        %3411 = vmatpush1.msra.mxu0 %v3369
        %3412 = vmatprep.subr.mxu0 0.0
        %3413 = vmatpush1.msra.mxu0 %v3370
        %3414 = vmatprep.subr.mxu0 0.0
        %3415 = vmatpush1.msra.mxu0 %v3371
        %3416 = vmatprep.subr.mxu0 0.0
        %3417 = vmatpush1.msra.mxu0 %v3372
        %3418 = vmatprep.subr.mxu0 0.0
        %3419 = vmatpush1.msra.mxu0 %v3373
        %3420 = vmatprep.subr.mxu0 0.0
        %3421 = vmatpush1.msra.mxu0 %v3374
        %3422 = vmatprep.subr.mxu0 0.0
        %3423 = vmatpush1.msra.mxu0 %v3375
        %3424 = vmatprep.subr.mxu0 0.0
        %3425 = vmatpush1.msra.mxu0 %v3376
        %3426 = vmatprep.subr.mxu0 0.0
        %3427 = vmatpush1.msra.mxu0 %v3377
        %3428 = vmatprep.subr.mxu0 0.0
        %3429 = vmatpush1.msra.mxu0 %v3378
        %3430 = vmatprep.subr.mxu0 0.0
        %3431 = vmatpush1.msra.mxu0 %v3379
        %3432 = vmatprep.subr.mxu0 0.0
        %3433 = vmatpush1.msra.mxu0 %v3380
        %3434 = vmatprep.subr.mxu0 0.0
        %3435 = vmatpush1.msra.mxu0 %v3381
        %3436 = vmatprep.subr.mxu0 0.0
        %3437 = vmatpush1.msra.mxu0 %v3382
        %3438 = vmatprep.subr.mxu0 0.0
        %3439 = vmatpush1.msra.mxu0 %v3383
        %3440 = vmatprep.subr.mxu0 0.0
        %3441 = vmatpush1.msra.mxu0 %v3384
        %3442 = vmatprep.subr.mxu0 0.0
        %3443 = vmatpush1.msra.mxu0 %v3385
        %3444 = vmatprep.subr.mxu0 0.0
        %3445 = vmatpush1.msra.mxu0 %v3386
        %3446 = vmatprep.subr.mxu0 0.0
        %3447 = vmatpush1.msra.mxu0 %v3387
        %3448 = vmatprep.subr.mxu0 0.0
        %3449 = vmatpush1.msra.mxu0 %v3388
        %3450 = vmatprep.subr.mxu0 0.0
        %3451 = vmatpush1.msra.mxu0 %v3389
        %3452 = vmatprep.subr.mxu0 0.0
        %3453 = vmatpush1.msra.mxu0 %v3390
        %3454 = vmatprep.subr.mxu0 0.0
        %3455 = vmatpush1.msra.mxu0 %v3391
        %3456 = vmatprep.subr.mxu0 0.0
        %3457 = vmatpush1.msra.mxu0 %v3392
        %3458 = vmatprep.subr.mxu0 0.0
        %3459 = vmatpush1.msra.mxu0 %v3393
        %3460 = vmatprep.subr.mxu0 0.0
        %3461 = vmatpush1.msra.mxu0 %v3394
        %3462 = vmatprep.subr.mxu0 0.0
        %3463 = vmatpush1.msra.mxu0 %v3395
        %3464 = vmatprep.subr.mxu0 0.0
        %3465 = vmatpush1.msra.mxu0 %v3396
        %3466 = vmatprep.subr.mxu0 0.0
        %3467 = vmatpush1.msra.mxu0 %v3397
        %3468 = vmatprep.subr.mxu0 0.0
        %3469 = vmatpush1.msra.mxu0 %v3398
        %3470 = vmatprep.mubr.f32.mxu0 %v3360
        %3471 = vmatmul.mubr.f32.gmra.mrb[0].mxu0 %v3359
        %v3472 = vpop.f32.mrb[0].mxu0
        %v3473 = vadd.f32 %v3404, %v3472
        %v3474 = vpop.f32.mrb[0].mxu0
        %3475 = vmatprep.mubr.f32.mxu0 %v3362
        %3476 = vmatmul.mubr.f32.gmra.mrb[0].mxu0 %v3361
        %v3477 = vpop.f32.mrb[0].mxu0
        %v3478 = vadd.f32 %v3404, %v3477
        %v3479 = vpop.f32.mrb[0].mxu0
        %3480 = vmatprep.mubr.f32.mxu0 %v3364
        %3481 = vmatmul.mubr.f32.gmra.mrb[0].mxu0 %v3363
        %v3482 = vpop.f32.mrb[0].mxu0
        %v3483 = vadd.f32 %v3404, %v3482
        %v3484 = vpop.f32.mrb[0].mxu0
        %3485 = vmatprep.mubr.f32.mxu0 %v3366
        %3486 = vmatmul.mubr.f32.gmra.mrb[0].mxu0 %v3365
        %v3487 = vpop.f32.mrb[0].mxu0
        %v3488 = vadd.f32 %v3404, %v3487
        %v3489 = vpop.f32.mrb[0].mxu0
        %3490 = vdwg.mxu0
        %v3491 = vadd.f32 %v3222, %v3473
        %v3492 = vadd.f32 %v3223, %v3478
        %v3493 = vadd.f32 %v3224, %v3483
        %v3494 = vadd.f32 %v3225, %v3488
        %3495 = vadd.xlane.f32.xlu0 %v3491
        %v3496 = vpop.xlane.xlu0 %3495
        %3497 = vadd.xlane.f32.xlu0 %v3492
        %v3498 = vpop.xlane.xlu0 %3497
        %3499 = vadd.xlane.f32.xlu0 %v3493
        %v3500 = vpop.xlane.xlu0 %3499
        %3501 = vadd.xlane.f32.xlu0 %v3494
        %v3502 = vpop.xlane.xlu0 %3501
        %v3503 = vmul.f32 %v3496, %v3167
        %v3504 = vmul.f32 %v3498, %v3167
        %v3505 = vmul.f32 %v3500, %v3167
        %v3506 = vmul.f32 %v3502, %v3167
        %v3507 = vsub.f32 %v3491, %v3503
        %v3508 = vsub.f32 %v3492, %v3504
        %v3509 = vsub.f32 %v3493, %v3505
        %v3510 = vsub.f32 %v3494, %v3506
        %v3511 = vmul.f32 %v3507, %v3507
        %v3512 = vmul.f32 %v3508, %v3508
        %v3513 = vmul.f32 %v3509, %v3509
        %v3514 = vmul.f32 %v3510, %v3510
        %3515 = vadd.xlane.f32.xlu0 %v3511
        %v3516 = vpop.xlane.xlu0 %3515
        %3517 = vadd.xlane.f32.xlu0 %v3512
        %v3518 = vpop.xlane.xlu0 %3517
        %3519 = vadd.xlane.f32.xlu0 %v3513
        %v3520 = vpop.xlane.xlu0 %3519
        %3521 = vadd.xlane.f32.xlu0 %v3514
        %v3522 = vpop.xlane.xlu0 %3521
        %v3523 = vmul.f32 %v3516, %v3167
        %v3524 = vmul.f32 %v3518, %v3167
        %v3525 = vmul.f32 %v3520, %v3167
        %v3526 = vmul.f32 %v3522, %v3167
        %v3527 = vadd.f32 %v3523, 1e-05
        %v3528 = vadd.f32 %v3524, 1e-05
        %v3529 = vadd.f32 %v3525, 1e-05
        %v3530 = vadd.f32 %v3526, 1e-05
        %v3531 = vrsqrt.pop %v3527
        %v3532 = vrsqrt.pop %v3528
        %v3533 = vrsqrt.pop %v3529
        %v3534 = vrsqrt.pop %v3530
        %v3535 = vmul.f32 %v3507, %v3531
        %v3536 = vmul.f32 %v3508, %v3532
        %v3537 = vmul.f32 %v3509, %v3533
        %v3538 = vmul.f32 %v3510, %v3534
        %v3539 = vld [vmem:[%s16] sm:$0x1]
        %v3541 = vlaneseq
        %v3542 = vshrl.u32 %v3541, 7
        %v3543 = vsub.s32 0, %v3542
        %v3544 = vrot.slane %v3539, %v3543
        %v3546 = vmul.f32 %v3535, %v3544
        %v3547 = vmul.f32 %v3536, %v3544
        %v3548 = vmul.f32 %v3537, %v3544
        %v3549 = vmul.f32 %v3538, %v3544
        %v3550 = vld [vmem:[%s17] sm:$0x1]
        %v3552 = vlaneseq
        %v3553 = vshrl.u32 %v3552, 7
        %v3554 = vsub.s32 0, %v3553
        %v3555 = vrot.slane %v3550, %v3554
        %v3557 = vadd.f32 %v3546, %v3555
        %v3558 = vadd.f32 %v3547, %v3555
        %v3559 = vadd.f32 %v3548, %v3555
        %v3560 = vadd.f32 %v3549, %v3555
        %3561 = vst [vmem:[%s722] sm:$0xff] %v3557
        %3562 = vst [vmem:[%s722 + $0x8] sm:$0xff] %v3558
        %3563 = vst [vmem:[%s722 + $0x10] sm:$0xff] %v3559
        %3564 = vst [vmem:[%s722 + $0x18] sm:$0xff] %v3560
        %s3565 = sand.u32 %s437, 1
        %s3566 = scalar_lea.sflag [#allocation4], %s3565
        %s3567 = sand.u32 %s437, 1
        %s3568 = smul.addr %s3567, 32
        %s3569 = scalar_lea.vmem [#allocation16], %s3568
        // Predicated region
        $region125: #{tpu_custom_call.1} parent=91 // pred_check
          %p3570 = pneg %p447
        $region126: #{tpu_custom_call.1} parent=91 // pred_check_branch
          %3572 = sbr.rel (%p3570) target = $region128
        $region127: #{tpu_custom_call.1} parent=91 // pred_region
          %s3573 = smul.u32 2, %s41
          %s3575 = ssub.s32 512, 512
          %3576 = vsyncadd %s3566, %s3575
          %s3577 = smul.addr %s3573, 2
          %s3578 = smul.addr %s3577, 128
          %s3579 = scalar_lea.hbm %s18, %s3578
          %s3580 = sshll.u32 %s3569, 4
          %s3581 = int_to_ptr.vmem [resolvable:$true] %s3580
          %3586 = dma.vmem_to_hbm [thread:$0]  %s3581, 512, %s3579, %s3566, 128, 128, 8
        $region128: #{tpu_custom_call.1} parent=91 // pred_fallthru
          _
      $region92: #{tpu_custom_call.1} parent=5 // pred_fallthru
        _
      %p3587 = scmp.le.s32.totalorder 2, %s36
      // Predicated region
      $region129: #{tpu_custom_call.1} parent=5 // pred_check
        %p3588 = pneg %p3587
      $region130: #{tpu_custom_call.1} parent=5 // pred_check_branch
        %3590 = sbr.rel (%p3588) target = $region132
      $region131: #{tpu_custom_call.1} parent=5 // pred_region
        %s3591 = ssub.s32 %s36, 2
        // Predicated region
        $region133: #{tpu_custom_call.1} parent=131 // pred_check
          %p3592 = pneg %p453
        $region134: #{tpu_custom_call.1} parent=131 // pred_check_branch
          %3594 = sbr.rel (%p3592) target = $region136
        $region135: #{tpu_custom_call.1} parent=131 // pred_region
          %s3595 = sand.u32 %s438, 1
          %s3596 = scalar_lea.sflag [#allocation4], %s3595
          %s3597 = sand.u32 %s438, 1
          %s3598 = smul.addr %s3597, 32
          %s3599 = scalar_lea.vmem [#allocation16], %s3598
          %3600 = dma.done %s3596, 512
        $region136: #{tpu_custom_call.1} parent=131 // pred_fallthru
          _
      $region132: #{tpu_custom_call.1} parent=5 // pred_fallthru
        _
    $region6: #{tpu_custom_call.1} parent=1 // loop_footer
      %s40 = sadd.s32 1, %s36
    $region7: #{tpu_custom_call.1} parent=1 // loop_footer_branch
      %35 = sbr.rel target = $region3
    $region8: #{tpu_custom_call.1} parent=1 // loop_exit
      _
    %3601 = vsyncpa [#allocation3], 1
    %s3602 = scalar_lea.sflag [#allocation3], 1
    %3603 = vsyncpa %s3602, 1
    %3604 = vsyncpa [#allocation6], 1
    %s3605 = scalar_lea.sflag [#allocation6], 1
    %3606 = vsyncpa %s3605, 1
    %3607 = vsyncpa [#allocation9], 1
    %3608 = vsyncpa [#allocation12], 1
    %3609 = vsyncpa [#allocation15], 1
    %3610 = vsyncpa [#allocation4], 1
    %s3611 = scalar_lea.sflag [#allocation4], 1
    %3612 = vsyncpa %s3611, 1

</llo_original>
